<compile_context>
chip_gen: v7x
topology: tpu7x:2x2x1
jax: 0.10.0
libtpu: 0.0.40
codegen_flags: <defaults>
</compile_context>

<pallas_src>
import functools

import jax
import jax.numpy as jnp
from jax.experimental import pallas as pl
from jax.experimental.pallas import tpu as pltpu


# --------------------------------------------------------------------------
# Kernel: full ResidualBlock (all repeats) for one image per grid step.
# --------------------------------------------------------------------------
def _residual_block_kernel(x_ref, w1_ref, w2_ref, b1_ref, b2_ref, o_ref,
                           pad_ref, *, num_repeats, use_residual):
    H, W, C = x_ref.shape[1], x_ref.shape[2], x_ref.shape[3]
    Ch = w1_ref.shape[2]                       # channels // 2

    # ---- zero ONLY the halo border, once per image (not per repeat): the
    #      interior is fully overwritten every repeat, the border never is.
    zrow = jnp.zeros((1, W + 2, Ch), jnp.bfloat16)
    zcol = jnp.zeros((H + 2, 1, Ch), jnp.bfloat16)
    pad_ref[0:1, :, :] = zrow
    pad_ref[H + 1:H + 2, :, :] = zrow
    pad_ref[:, 0:1, :] = zcol
    pad_ref[:, W + 1:W + 2, :] = zcol

    x2d0 = x_ref[0].reshape(H * W, C)          # bf16 activations, (M, C)

    def repeat_body(r, x2d):
        # ---- CNNBlock 1: 1x1 conv (BN scale folded into w1) + bias + leaky
        h1 = jnp.dot(x2d, w1_ref[r], preferred_element_type=jnp.float32)
        h1 = h1 + b1_ref[r]
        h1 = jnp.where(h1 > 0, h1, 0.1 * h1)               # LeakyReLU(0.1)
        # write into the bf16 halo scratch already cast (MXU operand dtype)
        pad_ref[1:H + 1, 1:W + 1, :] = h1.astype(jnp.bfloat16).reshape(H, W, Ch)

        # ---- CNNBlock 2: 3x3/p=1 conv as 3 per-kh fused MXU matmuls.
        # The kh shift is a leading-dim slice (cheap); the three kw taps are
        # concatenated along channels so each matmul contracts K = 3*Ch.
        w2r = w2_ref[r]                                     # (3, 3*Ch, C) bf16
        acc = None
        for kh in range(3):
            row = pad_ref[kh:kh + H, :, :]                  # (H, W+2, Ch) bf16
            tap = jnp.concatenate(
                [row[:, 0:W, :], row[:, 1:W + 1, :], row[:, 2:W + 2, :]],
                axis=-1).reshape(H * W, 3 * Ch)             # bf16, no recast
            part = jnp.dot(tap, w2r[kh], preferred_element_type=jnp.float32)
            acc = part if acc is None else acc + part

        y = acc + b2_ref[r]
        y = jnp.where(y > 0, y, 0.1 * y)                    # LeakyReLU(0.1)
        if use_residual:
            y = y + x2d.astype(jnp.float32)                 # residual after act
        return y.astype(jnp.bfloat16)

    if num_repeats <= 4:
        # small R: static unroll is fine and fully visible to the scheduler
        x2d = x2d0
        for r in range(num_repeats):
            x2d = repeat_body(r, x2d)
    else:
        # large R: bound live ranges / code size with a real loop
        x2d = jax.lax.fori_loop(0, num_repeats, repeat_body, x2d0)

    o_ref[...] = x2d.reshape(1, H, W, C)


# --------------------------------------------------------------------------
# BN folding: scale into weights, bias kept separate (f32).
# --------------------------------------------------------------------------
def _fold_params(p, eps=1e-5):
    s1 = p["gamma1"] / jnp.sqrt(p["var1"] + eps)
    b1 = p["beta1"] - p["mean1"] * s1
    s2 = p["gamma2"] / jnp.sqrt(p["var2"] + eps)
    b2 = p["beta2"] - p["mean2"] * s2
    w1 = (p["w1"] * s1[None, :]).astype(jnp.bfloat16)          # (C, C/2)
    w2 = (p["w2"] * s2[None, None, :]).astype(jnp.bfloat16)    # (9, C/2, C)
    return w1, w2, b1[None, :].astype(jnp.float32), b2[None, :].astype(jnp.float32)


# --------------------------------------------------------------------------
# VMEM budget: working set (incl. f32 temporaries) vs. chip capacity.
# --------------------------------------------------------------------------
def _derive_vmem_limit(H, W, C, Ch, w1, w2, b1, b2):
    act_block = H * W * C * 2                         # bf16 image block
    weights = (w1.size + w2.size) * 2 + (b1.size + b2.size) * 4
    pad_scratch = (H + 2) * (W + 2) * Ch * 2          # bf16 halo buffer
    temporaries = (H * W * Ch * 4                     # h1 (f32)
                   + H * W * C * 4                    # conv2 accumulator (f32)
                   + H * W * 3 * Ch * 2)              # per-kh fused tap (bf16)
    working = 2 * 2 * act_block + 2 * weights + pad_scratch + temporaries
    try:
        cap = getattr(pltpu.get_tpu_info(), "vmem_capacity_bytes", 128 << 20)
    except Exception:
        cap = 128 << 20
    ceiling = int(0.85 * cap)                         # compiler headroom
    return max(min(int(1.25 * working), ceiling), min(16 << 20, ceiling))


# --------------------------------------------------------------------------
# Wrapper: NCHW f32 in / NCHW f32 out (or NHWC bf16 with return_nhwc_bf16).
# --------------------------------------------------------------------------
def residual_block_forward(x_nchw, params, use_residual=True,
                           return_nhwc_bf16=False):
    N, C, H, W = x_nchw.shape
    assert C % 2 == 0, "channels must be even"
    Ch = C // 2
    R = len(params)

    x = jnp.transpose(x_nchw, (0, 2, 3, 1)).astype(jnp.bfloat16)   # NHWC bf16

    folded = [_fold_params(p) for p in params]
    w1 = jnp.stack([f[0] for f in folded])                         # (R, C, Ch) bf16
    # (R, 9, Ch, C) -> (R, 3, 3*Ch, C): kh-major, [kw0|kw1|kw2] along K
    w2 = jnp.stack([f[1] for f in folded]).reshape(R, 3, 3 * Ch, C)
    b1 = jnp.stack([f[2] for f in folded])                         # (R, 1, Ch) f32
    b2 = jnp.stack([f[3] for f in folded])                         # (R, 1, C)  f32

    kernel = functools.partial(_residual_block_kernel,
                               num_repeats=R, use_residual=use_residual)

    flops = 2 * N * H * W * Ch * C * 10 * R            # 1x1 + 9 taps per repeat
    bytes_accessed = (2 * N * H * W * C * 2            # x in + out (bf16)
                      + (w1.size + w2.size) * 2        # weights (bf16)
                      + (b1.size + b2.size) * 4)       # biases (f32)

    vmem_limit = _derive_vmem_limit(H, W, C, Ch, w1, w2, b1, b2)

    out = pl.pallas_call(
        kernel,
        out_shape=jax.ShapeDtypeStruct((N, H, W, C), jnp.bfloat16),
        grid=(N,),
        in_specs=[
            pl.BlockSpec((1, H, W, C), lambda n: (n, 0, 0, 0)),
            # TODO(synk): weights have a constant index_map; single-buffer /
            # stream them (or add a repeat grid axis) for C >= 512 so deep
            # stage blocks fit v7x's 64 MiB VMEM.
            pl.BlockSpec((R, C, Ch), lambda n: (0, 0, 0)),
            pl.BlockSpec((R, 3, 3 * Ch, C), lambda n: (0, 0, 0, 0)),
            pl.BlockSpec((R, 1, Ch), lambda n: (0, 0, 0)),
            pl.BlockSpec((R, 1, C), lambda n: (0, 0, 0)),
        ],
        out_specs=pl.BlockSpec((1, H, W, C), lambda n: (n, 0, 0, 0)),
        scratch_shapes=[pltpu.VMEM((H + 2, W + 2, Ch), jnp.bfloat16)],
        compiler_params=pltpu.CompilerParams(
            dimension_semantics=("parallel",),
            vmem_limit_bytes=vmem_limit),
        cost_estimate=pl.CostEstimate(flops=flops, transcendentals=0,
                                      bytes_accessed=bytes_accessed),
    )(x, w1, w2, b1, b2)

    if return_nhwc_bf16:
        return out                                      # no extra HBM round trip
    return jnp.transpose(out, (0, 3, 1, 2)).astype(jnp.float32)     # NCHW f32


# --------------------------------------------------------------------------
# Deterministic synthetic params matching the PyTorch module's shapes.
# --------------------------------------------------------------------------
def init_residual_block_params(key, channels, num_repeats):
    c_half = channels // 2
    params = []
    for _ in range(num_repeats):
        keys = jax.random.split(key, 11)
        key = keys[0]
        # conv1: 1x1, channels -> channels//2, no bias (bn_act=True)
        w1_t = 0.2 * jax.random.normal(keys[1], (c_half, channels, 1, 1),
                                       jnp.float32)                 # torch layout
        # conv2: 3x3, channels//2 -> channels, no bias
        w2_t = 0.2 * jax.random.normal(keys[2], (channels, c_half, 3, 3),
                                       jnp.float32)                 # torch layout
        p = dict(
            w1=jnp.transpose(w1_t.reshape(c_half, channels), (1, 0)),        # (C, C/2)
            w2=jnp.transpose(w2_t, (2, 3, 1, 0)).reshape(9, c_half, channels),  # (9, C/2, C)
            gamma1=jax.random.uniform(keys[3], (c_half,), jnp.float32, 0.5, 1.5),
            beta1=0.1 * jax.random.normal(keys[4], (c_half,), jnp.float32),
            mean1=0.1 * jax.random.normal(keys[5], (c_half,), jnp.float32),
            var1=jax.random.uniform(keys[6], (c_half,), jnp.float32, 0.5, 1.5),
            gamma2=jax.random.uniform(keys[7], (channels,), jnp.float32, 0.5, 1.5),
            beta2=0.1 * jax.random.normal(keys[8], (channels,), jnp.float32),
            mean2=0.1 * jax.random.normal(keys[9], (channels,), jnp.float32),
            var2=jax.random.uniform(keys[10], (channels,), jnp.float32, 0.5, 1.5),
        )
        params.append(p)
    return params


# --------------------------------------------------------------------------
# Plain-JAX reference (same math / same bf16 quantization points, no Pallas).
# --------------------------------------------------------------------------
def _im2col_3x3(x_nhwc):
    N, H, W, C = x_nhwc.shape
    xp = jnp.pad(x_nhwc, ((0, 0), (1, 1), (1, 1), (0, 0)))
    cols = [xp[:, dh:dh + H, dw:dw + W, :] for dh in range(3) for dw in range(3)]
    patches = jnp.stack(cols, axis=3)                 # (N, H, W, 9, C)
    return patches.reshape(N * H * W, 9 * C)


def _reference_forward(x_nchw, params, use_residual=True):
    N, C, H, W = x_nchw.shape
    Ch = C // 2
    M = N * H * W
    leaky = lambda v: jnp.where(v > 0, v, 0.1 * v)
    x = jnp.transpose(x_nchw, (0, 2, 3, 1)).astype(jnp.bfloat16)
    for p in params:
        w1, w2, b1, b2 = _fold_params(p)
        x2d = x.reshape(M, C)
        h1 = jnp.dot(x2d, w1, preferred_element_type=jnp.float32) + b1
        h1 = leaky(h1).astype(jnp.bfloat16).reshape(N, H, W, Ch)
        patches = _im2col_3x3(h1)                                   # (M, 9*Ch)
        h2 = jnp.dot(patches, w2.reshape(9 * Ch, C),
                     preferred_element_type=jnp.float32) + b2
        h2 = leaky(h2)
        if use_residual:
            h2 = h2 + x2d.astype(jnp.float32)
        x = h2.astype(jnp.bfloat16).reshape(N, H, W, C)
    return jnp.transpose(x, (0, 3, 1, 2)).astype(jnp.float32)


if __name__ == "__main__":
    key = jax.random.PRNGKey(0)
    k_x, k_p = jax.random.split(key)

    batch, channels, spatial = 2, 4, 16
    num_repeats = 2
    x = jax.random.normal(k_x, (batch, channels, spatial, spatial), jnp.float32)
    params = init_residual_block_params(k_p, channels, num_repeats)

    fwd = jax.jit(functools.partial(residual_block_forward, use_residual=True))
    out = fwd(x, params)
    out = jax.block_until_ready(out)

    ref = _reference_forward(x, params, use_residual=True)
    assert out.shape == x.shape
    assert jnp.allclose(out, ref, rtol=2e-2, atol=2e-2), "mismatch vs reference"

    print("KERNEL_OK")
</pallas_src>

<mosaic_0001>
module attributes {stable_mosaic.version = 11 : i64} {
  func.func @_residual_block_kernel(%arg0: i32, %arg1: memref<1x16x16x4xbf16, #tpu.memory_space<vmem>>, %arg2: memref<2x4x2xbf16, #tpu.memory_space<vmem>>, %arg3: memref<2x3x6x4xbf16, #tpu.memory_space<vmem>>, %arg4: memref<2x1x2xf32, #tpu.memory_space<vmem>>, %arg5: memref<2x1x4xf32, #tpu.memory_space<vmem>>, %arg6: memref<1x16x16x4xbf16, #tpu.memory_space<vmem>>, %arg7: memref<18x18x2xbf16, #tpu.memory_space<vmem>>) attributes {dimension_semantics = [#tpu.dimension_semantics<parallel>], iteration_bounds = array<i64: 2>, scalar_prefetch = 0 : i64, scratch_operands = 1 : i64, tpu.core_type = #tpu.core_type<tc>, window_params = [{transform_indices = @transform_0, window_bounds = array<i64: 1, 16, 16, 4>}, {pipeline_mode = #tpu.pipeline_mode<synchronous>, transform_indices = @transform_1, window_bounds = array<i64: 2, 4, 2>}, {pipeline_mode = #tpu.pipeline_mode<synchronous>, transform_indices = @transform_2, window_bounds = array<i64: 2, 3, 6, 4>}, {pipeline_mode = #tpu.pipeline_mode<synchronous>, transform_indices = @transform_3, window_bounds = array<i64: 2, 1, 2>}, {pipeline_mode = #tpu.pipeline_mode<synchronous>, transform_indices = @transform_4, window_bounds = array<i64: 2, 1, 4>}, {transform_indices = @transform_5, window_bounds = array<i64: 1, 16, 16, 4>}]} {
    %cst = arith.constant 0.000000e+00 : bf16
    %0 = vector.broadcast %cst : bf16 to vector<1x18x2xbf16>
    %cst_0 = arith.constant 0.000000e+00 : bf16
    %1 = vector.broadcast %cst_0 : bf16 to vector<18x1x2xbf16>
    %c0 = arith.constant 0 : index
    %c0_1 = arith.constant 0 : index
    %c0_2 = arith.constant 0 : index
    %2 = vector.load %arg7[%c0, %c0_1, %c0_2] : memref<18x18x2xbf16, #tpu.memory_space<vmem>>, vector<1x18x2xbf16>
    tpu.vector_store %arg7[%c0, %c0_1, %c0_2], %0 {strides = array<i32>} : memref<18x18x2xbf16, #tpu.memory_space<vmem>>, vector<1x18x2xbf16>,
    %c17 = arith.constant 17 : index
    %c0_3 = arith.constant 0 : index
    %c0_4 = arith.constant 0 : index
    %3 = vector.load %arg7[%c17, %c0_3, %c0_4] : memref<18x18x2xbf16, #tpu.memory_space<vmem>>, vector<1x18x2xbf16>
    tpu.vector_store %arg7[%c17, %c0_3, %c0_4], %0 {strides = array<i32>} : memref<18x18x2xbf16, #tpu.memory_space<vmem>>, vector<1x18x2xbf16>,
    %c0_5 = arith.constant 0 : index
    %c0_6 = arith.constant 0 : index
    %c0_7 = arith.constant 0 : index
    %4 = vector.load %arg7[%c0_5, %c0_6, %c0_7] : memref<18x18x2xbf16, #tpu.memory_space<vmem>>, vector<18x1x2xbf16>
    tpu.vector_store %arg7[%c0_5, %c0_6, %c0_7], %1 {strides = array<i32>} : memref<18x18x2xbf16, #tpu.memory_space<vmem>>, vector<18x1x2xbf16>,
    %c0_8 = arith.constant 0 : index
    %c17_9 = arith.constant 17 : index
    %c0_10 = arith.constant 0 : index
    %5 = vector.load %arg7[%c0_8, %c17_9, %c0_10] : memref<18x18x2xbf16, #tpu.memory_space<vmem>>, vector<18x1x2xbf16>
    tpu.vector_store %arg7[%c0_8, %c17_9, %c0_10], %1 {strides = array<i32>} : memref<18x18x2xbf16, #tpu.memory_space<vmem>>, vector<18x1x2xbf16>,
    %c0_11 = arith.constant 0 : index
    %c0_12 = arith.constant 0 : index
    %c0_13 = arith.constant 0 : index
    %c0_14 = arith.constant 0 : index
    %6 = vector.load %arg1[%c0_11, %c0_12, %c0_13, %c0_14] : memref<1x16x16x4xbf16, #tpu.memory_space<vmem>>, vector<1x16x16x4xbf16>
    %7 = vector.shape_cast %6 : vector<1x16x16x4xbf16> to vector<16x16x4xbf16>
    %8 = vector.shape_cast %7 : vector<16x16x4xbf16> to vector<256x4xbf16>
    %c0_15 = arith.constant 0 : index
    %c0_16 = arith.constant 0 : index
    %c0_17 = arith.constant 0 : index
    %9 = vector.load %arg2[%c0_15, %c0_16, %c0_17] : memref<2x4x2xbf16, #tpu.memory_space<vmem>>, vector<1x4x2xbf16>
    %10 = vector.shape_cast %9 : vector<1x4x2xbf16> to vector<4x2xbf16>
    %cst_18 = arith.constant dense<0.000000e+00> : vector<256x2xf32>
    %11 = tpu.matmul %8, %10, %cst_18 {dimension_numbers = #tpu.dot_dimension_numbers<[1], [0], [0], [1], [0, 0, 1, 1], [], []>} : vector<256x4xbf16>, vector<4x2xbf16>, vector<256x2xf32> -> vector<256x2xf32>
    %c0_19 = arith.constant 0 : index
    %c0_20 = arith.constant 0 : index
    %c0_21 = arith.constant 0 : index
    %12 = vector.load %arg4[%c0_19, %c0_20, %c0_21] : memref<2x1x2xf32, #tpu.memory_space<vmem>>, vector<1x1x2xf32>
    %13 = vector.shape_cast %12 : vector<1x1x2xf32> to vector<1x2xf32>
    %14 = vector.broadcast %13 : vector<1x2xf32> to vector<256x2xf32>
    %15 = arith.addf %11, %14 : vector<256x2xf32>
    %cst_22 = arith.constant 0.000000e+00 : f32
    %16 = vector.broadcast %cst_22 : f32 to vector<256x2xf32>
    %17 = arith.cmpf ogt, %15, %16 : vector<256x2xf32>
    %cst_23 = arith.constant 1.000000e-01 : f32
    %18 = vector.broadcast %cst_23 : f32 to vector<256x2xf32>
    %19 = arith.mulf %18, %15 : vector<256x2xf32>
    %20 = arith.select %17, %15, %19 : vector<256x2xi1>, vector<256x2xf32>
    %21 = arith.truncf %20 : vector<256x2xf32> to vector<256x2xbf16>
    %22 = vector.shape_cast %21 : vector<256x2xbf16> to vector<16x16x2xbf16>
    %c1 = arith.constant 1 : index
    %c1_24 = arith.constant 1 : index
    %c0_25 = arith.constant 0 : index
    %23 = vector.load %arg7[%c1, %c1_24, %c0_25] : memref<18x18x2xbf16, #tpu.memory_space<vmem>>, vector<16x16x2xbf16>
    tpu.vector_store %arg7[%c1, %c1_24, %c0_25], %22 {strides = array<i32>} : memref<18x18x2xbf16, #tpu.memory_space<vmem>>, vector<16x16x2xbf16>,
    %c0_26 = arith.constant 0 : index
    %c0_27 = arith.constant 0 : index
    %c0_28 = arith.constant 0 : index
    %c0_29 = arith.constant 0 : index
    %24 = vector.load %arg3[%c0_26, %c0_27, %c0_28, %c0_29] : memref<2x3x6x4xbf16, #tpu.memory_space<vmem>>, vector<1x3x6x4xbf16>
    %25 = vector.shape_cast %24 : vector<1x3x6x4xbf16> to vector<3x6x4xbf16>
    %c0_30 = arith.constant 0 : index
    %c0_31 = arith.constant 0 : index
    %c0_32 = arith.constant 0 : index
    %26 = vector.load %arg7[%c0_30, %c0_31, %c0_32] : memref<18x18x2xbf16, #tpu.memory_space<vmem>>, vector<16x18x2xbf16>
    %27 = vector.extract_strided_slice %26 {offsets = [0, 0, 0], sizes = [16, 16, 2], strides = [1, 1, 1]} : vector<16x18x2xbf16> to vector<16x16x2xbf16>
    %28 = vector.extract_strided_slice %26 {offsets = [0, 1, 0], sizes = [16, 16, 2], strides = [1, 1, 1]} : vector<16x18x2xbf16> to vector<16x16x2xbf16>
    %29 = vector.extract_strided_slice %26 {offsets = [0, 2, 0], sizes = [16, 16, 2], strides = [1, 1, 1]} : vector<16x18x2xbf16> to vector<16x16x2xbf16>
    %30 = tpu.concatenate %27, %28, %29 in 2 : vector<16x16x2xbf16>, vector<16x16x2xbf16>, vector<16x16x2xbf16> -> vector<16x16x6xbf16>
    %31 = vector.shape_cast %30 : vector<16x16x6xbf16> to vector<256x6xbf16>
    %32 = vector.extract_strided_slice %25 {offsets = [0, 0, 0], sizes = [1, 6, 4], strides = [1, 1, 1]} : vector<3x6x4xbf16> to vector<1x6x4xbf16>
    %33 = vector.shape_cast %32 : vector<1x6x4xbf16> to vector<6x4xbf16>
    %cst_33 = arith.constant dense<0.000000e+00> : vector<256x4xf32>
    %34 = tpu.matmul %31, %33, %cst_33 {dimension_numbers = #tpu.dot_dimension_numbers<[1], [0], [0], [1], [0, 0, 1, 1], [], []>} : vector<256x6xbf16>, vector<6x4xbf16>, vector<256x4xf32> -> vector<256x4xf32>
    %c1_34 = arith.constant 1 : index
    %c0_35 = arith.constant 0 : index
    %c0_36 = arith.constant 0 : index
    %35 = vector.load %arg7[%c1_34, %c0_35, %c0_36] : memref<18x18x2xbf16, #tpu.memory_space<vmem>>, vector<16x18x2xbf16>
    %36 = vector.extract_strided_slice %35 {offsets = [0, 0, 0], sizes = [16, 16, 2], strides = [1, 1, 1]} : vector<16x18x2xbf16> to vector<16x16x2xbf16>
    %37 = vector.extract_strided_slice %35 {offsets = [0, 1, 0], sizes = [16, 16, 2], strides = [1, 1, 1]} : vector<16x18x2xbf16> to vector<16x16x2xbf16>
    %38 = vector.extract_strided_slice %35 {offsets = [0, 2, 0], sizes = [16, 16, 2], strides = [1, 1, 1]} : vector<16x18x2xbf16> to vector<16x16x2xbf16>
    %39 = tpu.concatenate %36, %37, %38 in 2 : vector<16x16x2xbf16>, vector<16x16x2xbf16>, vector<16x16x2xbf16> -> vector<16x16x6xbf16>
    %40 = vector.shape_cast %39 : vector<16x16x6xbf16> to vector<256x6xbf16>
    %41 = vector.extract_strided_slice %25 {offsets = [1, 0, 0], sizes = [1, 6, 4], strides = [1, 1, 1]} : vector<3x6x4xbf16> to vector<1x6x4xbf16>
    %42 = vector.shape_cast %41 : vector<1x6x4xbf16> to vector<6x4xbf16>
    %cst_37 = arith.constant dense<0.000000e+00> : vector<256x4xf32>
    %43 = tpu.matmul %40, %42, %cst_37 {dimension_numbers = #tpu.dot_dimension_numbers<[1], [0], [0], [1], [0, 0, 1, 1], [], []>} : vector<256x6xbf16>, vector<6x4xbf16>, vector<256x4xf32> -> vector<256x4xf32>
    %44 = arith.addf %34, %43 : vector<256x4xf32>
    %c2 = arith.constant 2 : index
    %c0_38 = arith.constant 0 : index
    %c0_39 = arith.constant 0 : index
    %45 = vector.load %arg7[%c2, %c0_38, %c0_39] : memref<18x18x2xbf16, #tpu.memory_space<vmem>>, vector<16x18x2xbf16>
    %46 = vector.extract_strided_slice %45 {offsets = [0, 0, 0], sizes = [16, 16, 2], strides = [1, 1, 1]} : vector<16x18x2xbf16> to vector<16x16x2xbf16>
    %47 = vector.extract_strided_slice %45 {offsets = [0, 1, 0], sizes = [16, 16, 2], strides = [1, 1, 1]} : vector<16x18x2xbf16> to vector<16x16x2xbf16>
    %48 = vector.extract_strided_slice %45 {offsets = [0, 2, 0], sizes = [16, 16, 2], strides = [1, 1, 1]} : vector<16x18x2xbf16> to vector<16x16x2xbf16>
    %49 = tpu.concatenate %46, %47, %48 in 2 : vector<16x16x2xbf16>, vector<16x16x2xbf16>, vector<16x16x2xbf16> -> vector<16x16x6xbf16>
    %50 = vector.shape_cast %49 : vector<16x16x6xbf16> to vector<256x6xbf16>
    %51 = vector.extract_strided_slice %25 {offsets = [2, 0, 0], sizes = [1, 6, 4], strides = [1, 1, 1]} : vector<3x6x4xbf16> to vector<1x6x4xbf16>
    %52 = vector.shape_cast %51 : vector<1x6x4xbf16> to vector<6x4xbf16>
    %cst_40 = arith.constant dense<0.000000e+00> : vector<256x4xf32>
    %53 = tpu.matmul %50, %52, %cst_40 {dimension_numbers = #tpu.dot_dimension_numbers<[1], [0], [0], [1], [0, 0, 1, 1], [], []>} : vector<256x6xbf16>, vector<6x4xbf16>, vector<256x4xf32> -> vector<256x4xf32>
    %54 = arith.addf %44, %53 : vector<256x4xf32>
    %c0_41 = arith.constant 0 : index
    %c0_42 = arith.constant 0 : index
    %c0_43 = arith.constant 0 : index
    %55 = vector.load %arg5[%c0_41, %c0_42, %c0_43] : memref<2x1x4xf32, #tpu.memory_space<vmem>>, vector<1x1x4xf32>
    %56 = vector.shape_cast %55 : vector<1x1x4xf32> to vector<1x4xf32>
    %57 = vector.broadcast %56 : vector<1x4xf32> to vector<256x4xf32>
    %58 = arith.addf %54, %57 : vector<256x4xf32>
    %cst_44 = arith.constant 0.000000e+00 : f32
    %59 = vector.broadcast %cst_44 : f32 to vector<256x4xf32>
    %60 = arith.cmpf ogt, %58, %59 : vector<256x4xf32>
    %cst_45 = arith.constant 1.000000e-01 : f32
    %61 = vector.broadcast %cst_45 : f32 to vector<256x4xf32>
    %62 = arith.mulf %61, %58 : vector<256x4xf32>
    %63 = arith.select %60, %58, %62 : vector<256x4xi1>, vector<256x4xf32>
    %64 = arith.extf %8 : vector<256x4xbf16> to vector<256x4xf32>
    %65 = arith.addf %63, %64 : vector<256x4xf32>
    %66 = arith.truncf %65 : vector<256x4xf32> to vector<256x4xbf16>
    %c1_46 = arith.constant 1 : index
    %c0_47 = arith.constant 0 : index
    %c0_48 = arith.constant 0 : index
    %67 = vector.load %arg2[%c1_46, %c0_47, %c0_48] : memref<2x4x2xbf16, #tpu.memory_space<vmem>>, vector<1x4x2xbf16>
    %68 = vector.shape_cast %67 : vector<1x4x2xbf16> to vector<4x2xbf16>
    %cst_49 = arith.constant dense<0.000000e+00> : vector<256x2xf32>
    %69 = tpu.matmul %66, %68, %cst_49 {dimension_numbers = #tpu.dot_dimension_numbers<[1], [0], [0], [1], [0, 0, 1, 1], [], []>} : vector<256x4xbf16>, vector<4x2xbf16>, vector<256x2xf32> -> vector<256x2xf32>
    %c1_50 = arith.constant 1 : index
    %c0_51 = arith.constant 0 : index
    %c0_52 = arith.constant 0 : index
    %70 = vector.load %arg4[%c1_50, %c0_51, %c0_52] : memref<2x1x2xf32, #tpu.memory_space<vmem>>, vector<1x1x2xf32>
    %71 = vector.shape_cast %70 : vector<1x1x2xf32> to vector<1x2xf32>
    %72 = vector.broadcast %71 : vector<1x2xf32> to vector<256x2xf32>
    %73 = arith.addf %69, %72 : vector<256x2xf32>
    %cst_53 = arith.constant 0.000000e+00 : f32
    %74 = vector.broadcast %cst_53 : f32 to vector<256x2xf32>
    %75 = arith.cmpf ogt, %73, %74 : vector<256x2xf32>
    %cst_54 = arith.constant 1.000000e-01 : f32
    %76 = vector.broadcast %cst_54 : f32 to vector<256x2xf32>
    %77 = arith.mulf %76, %73 : vector<256x2xf32>
    %78 = arith.select %75, %73, %77 : vector<256x2xi1>, vector<256x2xf32>
    %79 = arith.truncf %78 : vector<256x2xf32> to vector<256x2xbf16>
    %80 = vector.shape_cast %79 : vector<256x2xbf16> to vector<16x16x2xbf16>
    %c1_55 = arith.constant 1 : index
    %c1_56 = arith.constant 1 : index
    %c0_57 = arith.constant 0 : index
    %81 = vector.load %arg7[%c1_55, %c1_56, %c0_57] : memref<18x18x2xbf16, #tpu.memory_space<vmem>>, vector<16x16x2xbf16>
    tpu.vector_store %arg7[%c1_55, %c1_56, %c0_57], %80 {strides = array<i32>} : memref<18x18x2xbf16, #tpu.memory_space<vmem>>, vector<16x16x2xbf16>,
    %c1_58 = arith.constant 1 : index
    %c0_59 = arith.constant 0 : index
    %c0_60 = arith.constant 0 : index
    %c0_61 = arith.constant 0 : index
    %82 = vector.load %arg3[%c1_58, %c0_59, %c0_60, %c0_61] : memref<2x3x6x4xbf16, #tpu.memory_space<vmem>>, vector<1x3x6x4xbf16>
    %83 = vector.shape_cast %82 : vector<1x3x6x4xbf16> to vector<3x6x4xbf16>
    %c0_62 = arith.constant 0 : index
    %c0_63 = arith.constant 0 : index
    %c0_64 = arith.constant 0 : index
    %84 = vector.load %arg7[%c0_62, %c0_63, %c0_64] : memref<18x18x2xbf16, #tpu.memory_space<vmem>>, vector<16x18x2xbf16>
    %85 = vector.extract_strided_slice %84 {offsets = [0, 0, 0], sizes = [16, 16, 2], strides = [1, 1, 1]} : vector<16x18x2xbf16> to vector<16x16x2xbf16>
    %86 = vector.extract_strided_slice %84 {offsets = [0, 1, 0], sizes = [16, 16, 2], strides = [1, 1, 1]} : vector<16x18x2xbf16> to vector<16x16x2xbf16>
    %87 = vector.extract_strided_slice %84 {offsets = [0, 2, 0], sizes = [16, 16, 2], strides = [1, 1, 1]} : vector<16x18x2xbf16> to vector<16x16x2xbf16>
    %88 = tpu.concatenate %85, %86, %87 in 2 : vector<16x16x2xbf16>, vector<16x16x2xbf16>, vector<16x16x2xbf16> -> vector<16x16x6xbf16>
    %89 = vector.shape_cast %88 : vector<16x16x6xbf16> to vector<256x6xbf16>
    %90 = vector.extract_strided_slice %83 {offsets = [0, 0, 0], sizes = [1, 6, 4], strides = [1, 1, 1]} : vector<3x6x4xbf16> to vector<1x6x4xbf16>
    %91 = vector.shape_cast %90 : vector<1x6x4xbf16> to vector<6x4xbf16>
    %cst_65 = arith.constant dense<0.000000e+00> : vector<256x4xf32>
    %92 = tpu.matmul %89, %91, %cst_65 {dimension_numbers = #tpu.dot_dimension_numbers<[1], [0], [0], [1], [0, 0, 1, 1], [], []>} : vector<256x6xbf16>, vector<6x4xbf16>, vector<256x4xf32> -> vector<256x4xf32>
    %c1_66 = arith.constant 1 : index
    %c0_67 = arith.constant 0 : index
    %c0_68 = arith.constant 0 : index
    %93 = vector.load %arg7[%c1_66, %c0_67, %c0_68] : memref<18x18x2xbf16, #tpu.memory_space<vmem>>, vector<16x18x2xbf16>
    %94 = vector.extract_strided_slice %93 {offsets = [0, 0, 0], sizes = [16, 16, 2], strides = [1, 1, 1]} : vector<16x18x2xbf16> to vector<16x16x2xbf16>
    %95 = vector.extract_strided_slice %93 {offsets = [0, 1, 0], sizes = [16, 16, 2], strides = [1, 1, 1]} : vector<16x18x2xbf16> to vector<16x16x2xbf16>
    %96 = vector.extract_strided_slice %93 {offsets = [0, 2, 0], sizes = [16, 16, 2], strides = [1, 1, 1]} : vector<16x18x2xbf16> to vector<16x16x2xbf16>
    %97 = tpu.concatenate %94, %95, %96 in 2 : vector<16x16x2xbf16>, vector<16x16x2xbf16>, vector<16x16x2xbf16> -> vector<16x16x6xbf16>
    %98 = vector.shape_cast %97 : vector<16x16x6xbf16> to vector<256x6xbf16>
    %99 = vector.extract_strided_slice %83 {offsets = [1, 0, 0], sizes = [1, 6, 4], strides = [1, 1, 1]} : vector<3x6x4xbf16> to vector<1x6x4xbf16>
    %100 = vector.shape_cast %99 : vector<1x6x4xbf16> to vector<6x4xbf16>
    %cst_69 = arith.constant dense<0.000000e+00> : vector<256x4xf32>
    %101 = tpu.matmul %98, %100, %cst_69 {dimension_numbers = #tpu.dot_dimension_numbers<[1], [0], [0], [1], [0, 0, 1, 1], [], []>} : vector<256x6xbf16>, vector<6x4xbf16>, vector<256x4xf32> -> vector<256x4xf32>
    %102 = arith.addf %92, %101 : vector<256x4xf32>
    %c2_70 = arith.constant 2 : index
    %c0_71 = arith.constant 0 : index
    %c0_72 = arith.constant 0 : index
    %103 = vector.load %arg7[%c2_70, %c0_71, %c0_72] : memref<18x18x2xbf16, #tpu.memory_space<vmem>>, vector<16x18x2xbf16>
    %104 = vector.extract_strided_slice %103 {offsets = [0, 0, 0], sizes = [16, 16, 2], strides = [1, 1, 1]} : vector<16x18x2xbf16> to vector<16x16x2xbf16>
    %105 = vector.extract_strided_slice %103 {offsets = [0, 1, 0], sizes = [16, 16, 2], strides = [1, 1, 1]} : vector<16x18x2xbf16> to vector<16x16x2xbf16>
    %106 = vector.extract_strided_slice %103 {offsets = [0, 2, 0], sizes = [16, 16, 2], strides = [1, 1, 1]} : vector<16x18x2xbf16> to vector<16x16x2xbf16>
    %107 = tpu.concatenate %104, %105, %106 in 2 : vector<16x16x2xbf16>, vector<16x16x2xbf16>, vector<16x16x2xbf16> -> vector<16x16x6xbf16>
    %108 = vector.shape_cast %107 : vector<16x16x6xbf16> to vector<256x6xbf16>
    %109 = vector.extract_strided_slice %83 {offsets = [2, 0, 0], sizes = [1, 6, 4], strides = [1, 1, 1]} : vector<3x6x4xbf16> to vector<1x6x4xbf16>
    %110 = vector.shape_cast %109 : vector<1x6x4xbf16> to vector<6x4xbf16>
    %cst_73 = arith.constant dense<0.000000e+00> : vector<256x4xf32>
    %111 = tpu.matmul %108, %110, %cst_73 {dimension_numbers = #tpu.dot_dimension_numbers<[1], [0], [0], [1], [0, 0, 1, 1], [], []>} : vector<256x6xbf16>, vector<6x4xbf16>, vector<256x4xf32> -> vector<256x4xf32>
    %112 = arith.addf %102, %111 : vector<256x4xf32>
    %c1_74 = arith.constant 1 : index
    %c0_75 = arith.constant 0 : index
    %c0_76 = arith.constant 0 : index
    %113 = vector.load %arg5[%c1_74, %c0_75, %c0_76] : memref<2x1x4xf32, #tpu.memory_space<vmem>>, vector<1x1x4xf32>
    %114 = vector.shape_cast %113 : vector<1x1x4xf32> to vector<1x4xf32>
    %115 = vector.broadcast %114 : vector<1x4xf32> to vector<256x4xf32>
    %116 = arith.addf %112, %115 : vector<256x4xf32>
    %cst_77 = arith.constant 0.000000e+00 : f32
    %117 = vector.broadcast %cst_77 : f32 to vector<256x4xf32>
    %118 = arith.cmpf ogt, %116, %117 : vector<256x4xf32>
    %cst_78 = arith.constant 1.000000e-01 : f32
    %119 = vector.broadcast %cst_78 : f32 to vector<256x4xf32>
    %120 = arith.mulf %119, %116 : vector<256x4xf32>
    %121 = arith.select %118, %116, %120 : vector<256x4xi1>, vector<256x4xf32>
    %122 = arith.extf %66 : vector<256x4xbf16> to vector<256x4xf32>
    %123 = arith.addf %121, %122 : vector<256x4xf32>
    %124 = arith.truncf %123 : vector<256x4xf32> to vector<256x4xbf16>
    %125 = vector.shape_cast %124 : vector<256x4xbf16> to vector<1x16x16x4xbf16>
    %c0_79 = arith.constant 0 : index
    %c0_80 = arith.constant 0 : index
    %c0_81 = arith.constant 0 : index
    %c0_82 = arith.constant 0 : index
    %126 = vector.load %arg6[%c0_79, %c0_80, %c0_81, %c0_82] : memref<1x16x16x4xbf16, #tpu.memory_space<vmem>>, vector<1x16x16x4xbf16>
    tpu.vector_store %arg6[%c0_79, %c0_80, %c0_81, %c0_82], %125 {strides = array<i32>} : memref<1x16x16x4xbf16, #tpu.memory_space<vmem>>, vector<1x16x16x4xbf16>,
    return
  }
  func.func @transform_0(%arg0: i32) -> (i32, i32, i32, i32) {
    %c0_i32 = arith.constant 0 : i32
    %c0_i32_0 = arith.constant 0 : i32
    %c0_i32_1 = arith.constant 0 : i32
    %c0_i32_2 = arith.constant 0 : i32
    return %arg0, %c0_i32, %c0_i32_0, %c0_i32_1 : i32, i32, i32, i32
  }
  func.func @transform_1(%arg0: i32) -> (i32, i32, i32) {
    %c0_i32 = arith.constant 0 : i32
    %c0_i32_0 = arith.constant 0 : i32
    %c0_i32_1 = arith.constant 0 : i32
    %c0_i32_2 = arith.constant 0 : i32
    return %c0_i32, %c0_i32_0, %c0_i32_1 : i32, i32, i32
  }
  func.func @transform_2(%arg0: i32) -> (i32, i32, i32, i32) {
    %c0_i32 = arith.constant 0 : i32
    %c0_i32_0 = arith.constant 0 : i32
    %c0_i32_1 = arith.constant 0 : i32
    %c0_i32_2 = arith.constant 0 : i32
    %c0_i32_3 = arith.constant 0 : i32
    return %c0_i32, %c0_i32_0, %c0_i32_1, %c0_i32_2 : i32, i32, i32, i32
  }
  func.func @transform_3(%arg0: i32) -> (i32, i32, i32) {
    %c0_i32 = arith.constant 0 : i32
    %c0_i32_0 = arith.constant 0 : i32
    %c0_i32_1 = arith.constant 0 : i32
    %c0_i32_2 = arith.constant 0 : i32
    return %c0_i32, %c0_i32_0, %c0_i32_1 : i32, i32, i32
  }
  func.func @transform_4(%arg0: i32) -> (i32, i32, i32) {
    %c0_i32 = arith.constant 0 : i32
    %c0_i32_0 = arith.constant 0 : i32
    %c0_i32_1 = arith.constant 0 : i32
    %c0_i32_2 = arith.constant 0 : i32
    return %c0_i32, %c0_i32_0, %c0_i32_1 : i32, i32, i32
  }
  func.func @transform_5(%arg0: i32) -> (i32, i32, i32, i32) {
    %c0_i32 = arith.constant 0 : i32
    %c0_i32_0 = arith.constant 0 : i32
    %c0_i32_1 = arith.constant 0 : i32
    %c0_i32_2 = arith.constant 0 : i32
    return %arg0, %c0_i32, %c0_i32_0, %c0_i32_1 : i32, i32, i32, i32
  }
}

</mosaic_0001>

<llo_original>
// kernel: residual_block_forward.1
$region0: #{residual_block_forward.1}
  #allocation0 [shape = 'u32[]', space=smem, size = 0x4, offset = 0x4, fixed_abs, tag = 'smem constant byte address 0x4 - core index']
  #allocation1 [shape = 'u32[144,128]{1,0:T(1,128)}', space=vmem, size = 0x12000, scoped, tag = 'internal scratch']
  #allocation2 [shape = 'bf16[18,18,2]{2,1,0:T(8,128)(2,1)}', space=vmem, size = 0x1b000, scoped, tag = 'scratch operand']
  %s0 = inlined_call_operand.vmem [shape: bf16[2,16,16,4], index: 0, kind: input, shape index: {}]
  %s1 = inlined_call_operand.vmem [shape: bf16[2,4,2], index: 1, kind: input, shape index: {}]
  %s2 = inlined_call_operand.vmem [shape: bf16[2,3,6,4], index: 2, kind: input, shape index: {}]
  %s3 = inlined_call_operand.vmem [shape: f32[2,1,2], index: 3, kind: input, shape index: {}]
  %s4 = inlined_call_operand.vmem [shape: f32[2,1,4], index: 4, kind: input, shape index: {}]
  %s5 = inlined_call_operand.vmem [shape: bf16[2,16,16,4], index: 5, kind: output, shape index: {}]
  %s6 = sld [smem:[#allocation0]]
  $region53: #{residual_block_forward.1} parent=0
    _
  %s8 = ssub.s32 1, %s6
  %s9 = scalar_select 0, %s8, %s6
  loop: start=0, step=1, limit=4
  $region2: #{residual_block_forward.1} parent=0 // loop_pre_header
    _
  $region3: #{residual_block_forward.1} parent=0 // loop_header
    %s11 = sphi 0, %s15
    %p12 = scmp.ge.s32.totalorder %s11, 4
    %s21 = sphi 0, %s23
    %s24 = sphi 0, %s21
    %s25 = sphi 0, %s24
    %s41 = sphi 0, %s25
    %s45 = sphi 0, %s45
    %s47 = sphi 0, %s45
    %s48 = sphi 0, %s47
    %s62 = sphi 0, %s48
    %s66 = sphi 0, %s66
    %s68 = sphi 0, %s66
    %s69 = sphi 0, %s68
    %s83 = sphi 0, %s69
    %s87 = sphi 0, %s87
    %s89 = sphi 0, %s87
    %s90 = sphi 0, %s89
    %s104 = sphi 0, %s90
    %s108 = sphi 0, %s108
    %s110 = sphi 0, %s108
    %s111 = sphi 0, %s110
    %s125 = sphi 0, %s111
    %s131 = sphi 0, %s133
    %s134 = sphi 0, %s131
    %s135 = sphi 0, %s134
    %s151 = sphi 0, %s135
  $region4: #{residual_block_forward.1} parent=0 // loop_header_branch
    %14 = sbr.rel (%p12) target = $region8
  $region5: #{residual_block_forward.1} parent=0 // loop_body
    %s16 = ssub.s32 %s11, 1
    %s17 = ssub.s32 %s11, 2
    %s18 = sadd.s32 %s11, 1
    %s19 = ssub.s32 %s11, %s18
    %p20 = scmp.eq.s32.totalorder %s19, 0
    %s22 = sadd.s32 %s21, 1
    %s23 = scalar_select %p20, %s21, %s22
    %p26 = pneg %p20
    %p27 = scmp.eq.s32.totalorder %s11, 1
    %p28 = por %p26, %p27
    %p29 = scmp.ne.s32.totalorder %s21, %s24
    %p30 = scmp.eq.s32.totalorder %s11, 0
    %p31 = por %p29, %p30
    %p32 = scmp.ne.s32.totalorder %s21, %s24
    %p33 = scmp.eq.s32.totalorder %s16, 1
    %p34 = por %p32, %p33
    %p35 = scmp.ne.s32.totalorder %s24, %s25
    %p36 = scmp.eq.s32.totalorder %s16, 0
    %p37 = por %p35, %p36
    %p38 = scmp.ne.s32.totalorder %s24, %s25
    %p39 = scmp.eq.s32.totalorder %s17, 1
    %p40 = por %p38, %p39
    %p42 = scmp.ne.s32.totalorder %s25, %s41
    %p43 = scmp.eq.s32.totalorder %s17, 0
    %p44 = por %p42, %p43
    %s46 = sadd.s32 %s45, 1
    %p49 = scmp.eq.s32.totalorder %s11, 1
    %p50 = scmp.ne.s32.totalorder %s45, %s47
    %p51 = scmp.eq.s32.totalorder %s11, 0
    %p52 = por %p50, %p51
    %p53 = scmp.ne.s32.totalorder %s45, %s47
    %p54 = scmp.eq.s32.totalorder %s16, 1
    %p55 = por %p53, %p54
    %p56 = scmp.ne.s32.totalorder %s47, %s48
    %p57 = scmp.eq.s32.totalorder %s16, 0
    %p58 = por %p56, %p57
    %p59 = scmp.ne.s32.totalorder %s47, %s48
    %p60 = scmp.eq.s32.totalorder %s17, 1
    %p61 = por %p59, %p60
    %p63 = scmp.ne.s32.totalorder %s48, %s62
    %p64 = scmp.eq.s32.totalorder %s17, 0
    %p65 = por %p63, %p64
    %s67 = sadd.s32 %s66, 1
    %p70 = scmp.eq.s32.totalorder %s11, 1
    %p71 = scmp.ne.s32.totalorder %s66, %s68
    %p72 = scmp.eq.s32.totalorder %s11, 0
    %p73 = por %p71, %p72
    %p74 = scmp.ne.s32.totalorder %s66, %s68
    %p75 = scmp.eq.s32.totalorder %s16, 1
    %p76 = por %p74, %p75
    %p77 = scmp.ne.s32.totalorder %s68, %s69
    %p78 = scmp.eq.s32.totalorder %s16, 0
    %p79 = por %p77, %p78
    %p80 = scmp.ne.s32.totalorder %s68, %s69
    %p81 = scmp.eq.s32.totalorder %s17, 1
    %p82 = por %p80, %p81
    %p84 = scmp.ne.s32.totalorder %s69, %s83
    %p85 = scmp.eq.s32.totalorder %s17, 0
    %p86 = por %p84, %p85
    %s88 = sadd.s32 %s87, 1
    %p91 = scmp.eq.s32.totalorder %s11, 1
    %p92 = scmp.ne.s32.totalorder %s87, %s89
    %p93 = scmp.eq.s32.totalorder %s11, 0
    %p94 = por %p92, %p93
    %p95 = scmp.ne.s32.totalorder %s87, %s89
    %p96 = scmp.eq.s32.totalorder %s16, 1
    %p97 = por %p95, %p96
    %p98 = scmp.ne.s32.totalorder %s89, %s90
    %p99 = scmp.eq.s32.totalorder %s16, 0
    %p100 = por %p98, %p99
    %p101 = scmp.ne.s32.totalorder %s89, %s90
    %p102 = scmp.eq.s32.totalorder %s17, 1
    %p103 = por %p101, %p102
    %p105 = scmp.ne.s32.totalorder %s90, %s104
    %p106 = scmp.eq.s32.totalorder %s17, 0
    %p107 = por %p105, %p106
    %s109 = sadd.s32 %s108, 1
    %p112 = scmp.eq.s32.totalorder %s11, 1
    %p113 = scmp.ne.s32.totalorder %s108, %s110
    %p114 = scmp.eq.s32.totalorder %s11, 0
    %p115 = por %p113, %p114
    %p116 = scmp.ne.s32.totalorder %s108, %s110
    %p117 = scmp.eq.s32.totalorder %s16, 1
    %p118 = por %p116, %p117
    %p119 = scmp.ne.s32.totalorder %s110, %s111
    %p120 = scmp.eq.s32.totalorder %s16, 0
    %p121 = por %p119, %p120
    %p122 = scmp.ne.s32.totalorder %s110, %s111
    %p123 = scmp.eq.s32.totalorder %s17, 1
    %p124 = por %p122, %p123
    %p126 = scmp.ne.s32.totalorder %s111, %s125
    %p127 = scmp.eq.s32.totalorder %s17, 0
    %p128 = por %p126, %p127
    %s129 = ssub.s32 %s11, %s18
    %p130 = scmp.eq.s32.totalorder %s129, 0
    %s132 = sadd.s32 %s131, 1
    %s133 = scalar_select %p130, %s131, %s132
    %p136 = pneg %p130
    %p137 = scmp.eq.s32.totalorder %s11, 1
    %p138 = por %p136, %p137
    %p139 = scmp.ne.s32.totalorder %s131, %s134
    %p140 = scmp.eq.s32.totalorder %s11, 0
    %p141 = por %p139, %p140
    %p142 = scmp.ne.s32.totalorder %s131, %s134
    %p143 = scmp.eq.s32.totalorder %s16, 1
    %p144 = por %p142, %p143
    %p145 = scmp.ne.s32.totalorder %s134, %s135
    %p146 = scmp.eq.s32.totalorder %s16, 0
    %p147 = por %p145, %p146
    %p148 = scmp.ne.s32.totalorder %s134, %s135
    %p149 = scmp.eq.s32.totalorder %s17, 1
    %p150 = por %p148, %p149
    %p152 = scmp.ne.s32.totalorder %s135, %s151
    %p153 = scmp.eq.s32.totalorder %s17, 0
    %p154 = por %p152, %p153
    %p155 = scmp.le.s32.totalorder 1, %s11
    %p156 = scmp.lt.s32.totalorder %s11, 3
    %p157 = pnand %p155, %p156
    %p158 = pneg %p157
    // Predicated region
    $region9: #{residual_block_forward.1} parent=5 // pred_check
      _
    $region10: #{residual_block_forward.1} parent=5 // pred_check_branch
      %160 = sbr.rel (%p157) target = $region12
    $region11: #{residual_block_forward.1} parent=5 // pred_region
      %s161 = ssub.s32 %s11, 1
      // Predicated region
      $region13: #{residual_block_forward.1} parent=11 // pred_check
        %p162 = pneg %p58
      $region14: #{residual_block_forward.1} parent=11 // pred_check_branch
        %164 = sbr.rel (%p162) target = $region16
      $region15: #{residual_block_forward.1} parent=11 // pred_region
        _
      $region16: #{residual_block_forward.1} parent=11 // pred_fallthru
        _
      // Predicated region
      $region17: #{residual_block_forward.1} parent=11 // pred_check
        %p165 = pneg %p79
      $region18: #{residual_block_forward.1} parent=11 // pred_check_branch
        %167 = sbr.rel (%p165) target = $region20
      $region19: #{residual_block_forward.1} parent=11 // pred_region
        _
      $region20: #{residual_block_forward.1} parent=11 // pred_fallthru
        _
      // Predicated region
      $region21: #{residual_block_forward.1} parent=11 // pred_check
        %p168 = pneg %p100
      $region22: #{residual_block_forward.1} parent=11 // pred_check_branch
        %170 = sbr.rel (%p168) target = $region24
      $region23: #{residual_block_forward.1} parent=11 // pred_region
        _
      $region24: #{residual_block_forward.1} parent=11 // pred_fallthru
        _
      // Predicated region
      $region25: #{residual_block_forward.1} parent=11 // pred_check
        %p171 = pneg %p121
      $region26: #{residual_block_forward.1} parent=11 // pred_check_branch
        %173 = sbr.rel (%p171) target = $region28
      $region27: #{residual_block_forward.1} parent=11 // pred_region
        _
      $region28: #{residual_block_forward.1} parent=11 // pred_fallthru
        _
    $region12: #{residual_block_forward.1} parent=5 // pred_fallthru
      _
    %p174 = scmp.lt.s32.totalorder %s11, 2
    // Predicated region
    $region29: #{residual_block_forward.1} parent=5 // pred_check
      %p175 = pneg %p174
    $region30: #{residual_block_forward.1} parent=5 // pred_check_branch
      %177 = sbr.rel (%p175) target = $region32
    $region31: #{residual_block_forward.1} parent=5 // pred_region
      // Predicated region
      $region33: #{residual_block_forward.1} parent=31 // pred_check
        %p178 = pneg %p31
      $region34: #{residual_block_forward.1} parent=31 // pred_check_branch
        %180 = sbr.rel (%p178) target = $region36
      $region35: #{residual_block_forward.1} parent=31 // pred_region
        %p181 = scmp.lt.s32.totalorder %s11, 1
        %s182 = scalar_select %p181, %s11, 1
        %s183 = smul.addr %s182, 32
        %s184 = smul.addr %s183, 4
        %s185 = scalar_lea.vmem %s0, %s184
      $region36: #{residual_block_forward.1} parent=31 // pred_fallthru
        _
    $region32: #{residual_block_forward.1} parent=5 // pred_fallthru
      _
    %p186 = scmp.le.s32.totalorder 1, %s11
    %p187 = scmp.lt.s32.totalorder %s11, 3
    %p188 = pnand %p186, %p187
    %p189 = pneg %p188
    // Predicated region
    $region37: #{residual_block_forward.1} parent=5 // pred_check
      _
    $region38: #{residual_block_forward.1} parent=5 // pred_check_branch
      %191 = sbr.rel (%p188) target = $region40
    $region39: #{residual_block_forward.1} parent=5 // pred_region
      %s192 = ssub.s32 %s11, 1
      %p193 = scmp.lt.s32.totalorder %s16, 1
      %s194 = scalar_select %p193, %s16, 1
      %s195 = smul.addr %s194, 32
      %s196 = smul.addr %s195, 4
      %s197 = scalar_lea.vmem %s0, %s196
      %p198 = pneg %p37
      %p199 = pneg %p34
      %p200 = pneg %p58
      %p201 = pneg %p55
      %p202 = pneg %p79
      %p203 = pneg %p76
      %p204 = pneg %p100
      %p205 = pneg %p97
      %p206 = pneg %p121
      %p207 = pneg %p118
      %p208 = pneg %p147
      %p209 = pneg %p144
      %p210 = scmp.lt.s32.totalorder %s16, 1
      %s211 = scalar_select %p210, %s16, 1
      %s212 = smul.addr %s211, 32
      %s213 = smul.addr %s212, 4
      %s214 = scalar_lea.vmem %s5, %s213
      %p215 = scmp.lt.s32.totalorder %s16, 1
      %s216 = scalar_select %p215, %s16, 1
      %s217 = smul.addr %s216, 32
      %s218 = smul.addr %s217, 4
      %s219 = scalar_lea.vmem %s0, %s218
      %p220 = scmp.lt.s32.totalorder %s16, 1
      %s221 = scalar_select %p220, %s16, 1
      %s222 = smul.addr %s221, 32
      %s223 = smul.addr %s222, 4
      %s224 = scalar_lea.vmem %s5, %s223
      %vm226 = vcmask 11264
      %227 = vst.msk [vmem:[#allocation2] sm:$0xf] %vm226, 0
      %228 = vst.msk [vmem:[#allocation2 + $0x4] sm:$0xf] %vm226, 0
      %vm229 = vcmask 8192
      %230 = vst.msk [vmem:[#allocation2 + $0x8] sm:$0x1] %vm229, 0
      %s231 = scalar_lea.vmem [#allocation2], 204
      %232 = vst.msk [vmem:[%s231] sm:$0xf] %vm226, 0
      %233 = vst.msk [vmem:[%s231 + $0x4] sm:$0xf] %vm226, 0
      %234 = vst.msk [vmem:[%s231 + $0x8] sm:$0x1] %vm229, 0
      %vm235 = vcmask 8192
      %vm236 = vsmask.f32 256
      %vm237 = vmand %vm235, %vm236
      %v238 = vld [vmem:[#allocation2] sm:$0x1]
      %v239 = vsel %vm237, 0, %v238
      %240 = vst [vmem:[#allocation2] sm:$0x1] %v239
      %v241 = vld [vmem:[#allocation2 + $0xc] sm:$0x1]
      %v242 = vsel %vm237, 0, %v241
      %243 = vst [vmem:[#allocation2 + $0xc] sm:$0x1] %v242
      %v244 = vld [vmem:[#allocation2 + $0x18] sm:$0x1]
      %v245 = vsel %vm237, 0, %v244
      %246 = vst [vmem:[#allocation2 + $0x18] sm:$0x1] %v245
      %v247 = vld [vmem:[#allocation2 + $0x24] sm:$0x1]
      %v248 = vsel %vm237, 0, %v247
      %249 = vst [vmem:[#allocation2 + $0x24] sm:$0x1] %v248
      %v250 = vld [vmem:[#allocation2 + $0x30] sm:$0x1]
      %v251 = vsel %vm237, 0, %v250
      %252 = vst [vmem:[#allocation2 + $0x30] sm:$0x1] %v251
      %v253 = vld [vmem:[#allocation2 + $0x3c] sm:$0x1]
      %v254 = vsel %vm237, 0, %v253
      %255 = vst [vmem:[#allocation2 + $0x3c] sm:$0x1] %v254
      %v256 = vld [vmem:[#allocation2 + $0x48] sm:$0x1]
      %v257 = vsel %vm237, 0, %v256
      %258 = vst [vmem:[#allocation2 + $0x48] sm:$0x1] %v257
      %v259 = vld [vmem:[#allocation2 + $0x54] sm:$0x1]
      %v260 = vsel %vm237, 0, %v259
      %261 = vst [vmem:[#allocation2 + $0x54] sm:$0x1] %v260
      %v262 = vld [vmem:[#allocation2 + $0x60] sm:$0x1]
      %v263 = vsel %vm237, 0, %v262
      %264 = vst [vmem:[#allocation2 + $0x60] sm:$0x1] %v263
      %v265 = vld [vmem:[#allocation2 + $0x6c] sm:$0x1]
      %v266 = vsel %vm237, 0, %v265
      %267 = vst [vmem:[#allocation2 + $0x6c] sm:$0x1] %v266
      %v268 = vld [vmem:[#allocation2 + $0x78] sm:$0x1]
      %v269 = vsel %vm237, 0, %v268
      %270 = vst [vmem:[#allocation2 + $0x78] sm:$0x1] %v269
      %v271 = vld [vmem:[#allocation2 + $0x84] sm:$0x1]
      %v272 = vsel %vm237, 0, %v271
      %273 = vst [vmem:[#allocation2 + $0x84] sm:$0x1] %v272
      %v274 = vld [vmem:[#allocation2 + $0x90] sm:$0x1]
      %v275 = vsel %vm237, 0, %v274
      %276 = vst [vmem:[#allocation2 + $0x90] sm:$0x1] %v275
      %v277 = vld [vmem:[#allocation2 + $0x9c] sm:$0x1]
      %v278 = vsel %vm237, 0, %v277
      %279 = vst [vmem:[#allocation2 + $0x9c] sm:$0x1] %v278
      %v280 = vld [vmem:[#allocation2 + $0xa8] sm:$0x1]
      %v281 = vsel %vm237, 0, %v280
      %282 = vst [vmem:[#allocation2 + $0xa8] sm:$0x1] %v281
      %v283 = vld [vmem:[#allocation2 + $0xb4] sm:$0x1]
      %v284 = vsel %vm237, 0, %v283
      %285 = vst [vmem:[#allocation2 + $0xb4] sm:$0x1] %v284
      %v286 = vld [vmem:[#allocation2 + $0xc0] sm:$0x1]
      %v287 = vsel %vm237, 0, %v286
      %288 = vst [vmem:[#allocation2 + $0xc0] sm:$0x1] %v287
      %v289 = vld [vmem:[#allocation2 + $0xcc] sm:$0x1]
      %v290 = vsel %vm237, 0, %v289
      %291 = vst [vmem:[#allocation2 + $0xcc] sm:$0x1] %v290
      %vm292 = vsmask.f32 7938
      %vm293 = vmand %vm235, %vm292
      %v294 = vld [vmem:[#allocation2 + $0x8] sm:$0x1]
      %v295 = vsel %vm293, 0, %v294
      %296 = vst [vmem:[#allocation2 + $0x8] sm:$0x1] %v295
      %v297 = vld [vmem:[#allocation2 + $0x14] sm:$0x1]
      %v298 = vsel %vm293, 0, %v297
      %299 = vst [vmem:[#allocation2 + $0x14] sm:$0x1] %v298
      %v300 = vld [vmem:[#allocation2 + $0x20] sm:$0x1]
      %v301 = vsel %vm293, 0, %v300
      %302 = vst [vmem:[#allocation2 + $0x20] sm:$0x1] %v301
      %v303 = vld [vmem:[#allocation2 + $0x2c] sm:$0x1]
      %v304 = vsel %vm293, 0, %v303
      %305 = vst [vmem:[#allocation2 + $0x2c] sm:$0x1] %v304
      %v306 = vld [vmem:[#allocation2 + $0x38] sm:$0x1]
      %v307 = vsel %vm293, 0, %v306
      %308 = vst [vmem:[#allocation2 + $0x38] sm:$0x1] %v307
      %v309 = vld [vmem:[#allocation2 + $0x44] sm:$0x1]
      %v310 = vsel %vm293, 0, %v309
      %311 = vst [vmem:[#allocation2 + $0x44] sm:$0x1] %v310
      %v312 = vld [vmem:[#allocation2 + $0x50] sm:$0x1]
      %v313 = vsel %vm293, 0, %v312
      %314 = vst [vmem:[#allocation2 + $0x50] sm:$0x1] %v313
      %v315 = vld [vmem:[#allocation2 + $0x5c] sm:$0x1]
      %v316 = vsel %vm293, 0, %v315
      %317 = vst [vmem:[#allocation2 + $0x5c] sm:$0x1] %v316
      %v318 = vld [vmem:[#allocation2 + $0x68] sm:$0x1]
      %v319 = vsel %vm293, 0, %v318
      %320 = vst [vmem:[#allocation2 + $0x68] sm:$0x1] %v319
      %v321 = vld [vmem:[#allocation2 + $0x74] sm:$0x1]
      %v322 = vsel %vm293, 0, %v321
      %323 = vst [vmem:[#allocation2 + $0x74] sm:$0x1] %v322
      %v324 = vld [vmem:[#allocation2 + $0x80] sm:$0x1]
      %v325 = vsel %vm293, 0, %v324
      %326 = vst [vmem:[#allocation2 + $0x80] sm:$0x1] %v325
      %v327 = vld [vmem:[#allocation2 + $0x8c] sm:$0x1]
      %v328 = vsel %vm293, 0, %v327
      %329 = vst [vmem:[#allocation2 + $0x8c] sm:$0x1] %v328
      %v330 = vld [vmem:[#allocation2 + $0x98] sm:$0x1]
      %v331 = vsel %vm293, 0, %v330
      %332 = vst [vmem:[#allocation2 + $0x98] sm:$0x1] %v331
      %v333 = vld [vmem:[#allocation2 + $0xa4] sm:$0x1]
      %v334 = vsel %vm293, 0, %v333
      %335 = vst [vmem:[#allocation2 + $0xa4] sm:$0x1] %v334
      %v336 = vld [vmem:[#allocation2 + $0xb0] sm:$0x1]
      %v337 = vsel %vm293, 0, %v336
      %338 = vst [vmem:[#allocation2 + $0xb0] sm:$0x1] %v337
      %v339 = vld [vmem:[#allocation2 + $0xbc] sm:$0x1]
      %v340 = vsel %vm293, 0, %v339
      %341 = vst [vmem:[#allocation2 + $0xbc] sm:$0x1] %v340
      %v342 = vld [vmem:[#allocation2 + $0xc8] sm:$0x1]
      %v343 = vsel %vm293, 0, %v342
      %344 = vst [vmem:[#allocation2 + $0xc8] sm:$0x1] %v343
      %v345 = vld [vmem:[#allocation2 + $0xd4] sm:$0x1]
      %v346 = vsel %vm293, 0, %v345
      %347 = vst [vmem:[#allocation2 + $0xd4] sm:$0x1] %v346
      %v348 = vld [vmem:[%s219] sm:$0xf]
      %v349 = vld [vmem:[%s219 + $0x4] sm:$0xf]
      %v350 = vld [vmem:[%s219 + $0x8] sm:$0xf]
      %v351 = vld [vmem:[%s219 + $0xc] sm:$0xf]
      %v352 = vld [vmem:[%s219 + $0x10] sm:$0xf]
      %v353 = vld [vmem:[%s219 + $0x14] sm:$0xf]
      %v354 = vld [vmem:[%s219 + $0x18] sm:$0xf]
      %v355 = vld [vmem:[%s219 + $0x1c] sm:$0xf]
      %v356 = vld [vmem:[%s219 + $0x20] sm:$0xf]
      %v357 = vld [vmem:[%s219 + $0x24] sm:$0xf]
      %v358 = vld [vmem:[%s219 + $0x28] sm:$0xf]
      %v359 = vld [vmem:[%s219 + $0x2c] sm:$0xf]
      %v360 = vld [vmem:[%s219 + $0x30] sm:$0xf]
      %v361 = vld [vmem:[%s219 + $0x34] sm:$0xf]
      %v362 = vld [vmem:[%s219 + $0x38] sm:$0xf]
      %v363 = vld [vmem:[%s219 + $0x3c] sm:$0xf]
      %v364 = vld [vmem:[%s219 + $0x40] sm:$0xf]
      %v365 = vld [vmem:[%s219 + $0x44] sm:$0xf]
      %v366 = vld [vmem:[%s219 + $0x48] sm:$0xf]
      %v367 = vld [vmem:[%s219 + $0x4c] sm:$0xf]
      %v368 = vld [vmem:[%s219 + $0x50] sm:$0xf]
      %v369 = vld [vmem:[%s219 + $0x54] sm:$0xf]
      %v370 = vld [vmem:[%s219 + $0x58] sm:$0xf]
      %v371 = vld [vmem:[%s219 + $0x5c] sm:$0xf]
      %v372 = vld [vmem:[%s219 + $0x60] sm:$0xf]
      %v373 = vld [vmem:[%s219 + $0x64] sm:$0xf]
      %v374 = vld [vmem:[%s219 + $0x68] sm:$0xf]
      %v375 = vld [vmem:[%s219 + $0x6c] sm:$0xf]
      %v376 = vld [vmem:[%s219 + $0x70] sm:$0xf]
      %v377 = vld [vmem:[%s219 + $0x74] sm:$0xf]
      %v378 = vld [vmem:[%s219 + $0x78] sm:$0xf]
      %v379 = vld [vmem:[%s219 + $0x7c] sm:$0xf]
      %v380 = vld [vmem:[%s1] sm:$0x3]
      %v381 = vld [vmem:[%s3] sm:$0x1]
      %v383 = vlaneseq
      %v384 = vshrl.u32 %v383, 7
      %v385 = vsub.s32 0, %v384
      %v386 = vrot.slane %v381, %v385
      %v420 = vunpack.c.l.b16 %v348
      %v421 = vunpack.c.l.b16 %v349
      %v422 = vunpack.c.l.b16 %v350
      %v423 = vunpack.c.l.b16 %v351
      %v424 = vunpack.c.l.b16 %v352
      %v425 = vunpack.c.l.b16 %v353
      %v426 = vunpack.c.l.b16 %v354
      %v427 = vunpack.c.l.b16 %v355
      %v428 = vunpack.c.l.b16 %v356
      %v429 = vunpack.c.l.b16 %v357
      %v430 = vunpack.c.l.b16 %v358
      %v431 = vunpack.c.l.b16 %v359
      %v432 = vunpack.c.l.b16 %v360
      %v433 = vunpack.c.l.b16 %v361
      %v434 = vunpack.c.l.b16 %v362
      %v435 = vunpack.c.l.b16 %v363
      %v436 = vunpack.c.l.b16 %v364
      %v437 = vunpack.c.l.b16 %v365
      %v438 = vunpack.c.l.b16 %v366
      %v439 = vunpack.c.l.b16 %v367
      %v440 = vunpack.c.l.b16 %v368
      %v441 = vunpack.c.l.b16 %v369
      %v442 = vunpack.c.l.b16 %v370
      %v443 = vunpack.c.l.b16 %v371
      %v444 = vunpack.c.l.b16 %v372
      %v445 = vunpack.c.l.b16 %v373
      %v446 = vunpack.c.l.b16 %v374
      %v447 = vunpack.c.l.b16 %v375
      %v448 = vunpack.c.l.b16 %v376
      %v449 = vunpack.c.l.b16 %v377
      %v450 = vunpack.c.l.b16 %v378
      %v451 = vunpack.c.l.b16 %v379
      %v452 = vpack.c.b16 %v421, %v420
      %v453 = vpack.c.b16 %v423, %v422
      %v454 = vpack.c.b16 %v425, %v424
      %v455 = vpack.c.b16 %v427, %v426
      %v456 = vpack.c.b16 %v429, %v428
      %v457 = vpack.c.b16 %v431, %v430
      %v458 = vpack.c.b16 %v433, %v432
      %v459 = vpack.c.b16 %v435, %v434
      %v460 = vpack.c.b16 %v437, %v436
      %v461 = vpack.c.b16 %v439, %v438
      %v462 = vpack.c.b16 %v441, %v440
      %v463 = vpack.c.b16 %v443, %v442
      %v464 = vpack.c.b16 %v445, %v444
      %v465 = vpack.c.b16 %v447, %v446
      %v466 = vpack.c.b16 %v449, %v448
      %v467 = vpack.c.b16 %v451, %v450
      %vm468 = vcmask 31744
      %v470 = vsel %vm468, %v452, 0
      %v473 = vsel %vm468, %v453, 0
      %v476 = vsel %vm468, %v454, 0
      %v479 = vsel %vm468, %v455, 0
      %v482 = vsel %vm468, %v456, 0
      %v485 = vsel %vm468, %v457, 0
      %v488 = vsel %vm468, %v458, 0
      %v491 = vsel %vm468, %v459, 0
      %v494 = vsel %vm468, %v460, 0
      %v497 = vsel %vm468, %v461, 0
      %v500 = vsel %vm468, %v462, 0
      %v503 = vsel %vm468, %v463, 0
      %v506 = vsel %vm468, %v464, 0
      %v509 = vsel %vm468, %v465, 0
      %v512 = vsel %vm468, %v466, 0
      %v515 = vsel %vm468, %v467, 0
      %vm517 = vcmask 1041408
      %v519 = vsel %vm517, %v380, 0
      %521 = vmatprep.subr.bf16.mxu0 0
      %522 = vmatpush1.bf16.msra.mxu0 %v519
      %523 = vmatprep.subr.bf16.mxu0 0
      %524 = vmatpush1.bf16.msra.mxu0 0
      %525 = vmatprep.subr.bf16.mxu0 0
      %526 = vmatpush1.bf16.msra.mxu0 0
      %527 = vmatprep.subr.bf16.mxu0 0
      %528 = vmatpush1.bf16.msra.mxu0 0
      %529 = vmatprep.subr.bf16.mxu0 0
      %530 = vmatpush1.bf16.msra.mxu0 0
      %531 = vmatprep.subr.bf16.mxu0 0
      %532 = vmatpush1.bf16.msra.mxu0 0
      %533 = vmatprep.subr.bf16.mxu0 0
      %534 = vmatpush1.bf16.msra.mxu0 0
      %535 = vmatprep.subr.bf16.mxu0 0
      %536 = vmatpush1.bf16.msra.mxu0 0
      %537 = vmatprep.subr.bf16.mxu0 0
      %538 = vmatpush1.bf16.msra.mxu0 0
      %539 = vmatprep.subr.bf16.mxu0 0
      %540 = vmatpush1.bf16.msra.mxu0 0
      %541 = vmatprep.subr.bf16.mxu0 0
      %542 = vmatpush1.bf16.msra.mxu0 0
      %543 = vmatprep.subr.bf16.mxu0 0
      %544 = vmatpush1.bf16.msra.mxu0 0
      %545 = vmatprep.subr.bf16.mxu0 0
      %546 = vmatpush1.bf16.msra.mxu0 0
      %547 = vmatprep.subr.bf16.mxu0 0
      %548 = vmatpush1.bf16.msra.mxu0 0
      %549 = vmatprep.subr.bf16.mxu0 0
      %550 = vmatpush1.bf16.msra.mxu0 0
      %551 = vmatprep.subr.bf16.mxu0 0
      %552 = vmatpush1.bf16.msra.mxu0 0
      %553 = vmatprep.mubr.bf16.mxu0 0
      %554 = vmatmul.mubr.bf16.gmra.mrb[0].mxu0 %v470
      %v555 = vpop.f32.mrb[0].mxu0
      %v556 = vadd.f32 %v386, %v555
      %v557 = vpop.f32.mrb[0].mxu0
      %v558 = vpop.f32.mrb[0].mxu0
      %v559 = vadd.f32 %v386, %v558
      %v560 = vpop.f32.mrb[0].mxu0
      %561 = vmatprep.mubr.bf16.mxu0 0
      %562 = vmatmul.mubr.bf16.gmra.mrb[0].mxu0 %v473
      %v563 = vpop.f32.mrb[0].mxu0
      %v564 = vadd.f32 %v386, %v563
      %v565 = vpop.f32.mrb[0].mxu0
      %v566 = vpop.f32.mrb[0].mxu0
      %v567 = vadd.f32 %v386, %v566
      %v568 = vpop.f32.mrb[0].mxu0
      %569 = vmatprep.mubr.bf16.mxu0 0
      %570 = vmatmul.mubr.bf16.gmra.mrb[0].mxu0 %v476
      %v571 = vpop.f32.mrb[0].mxu0
      %v572 = vadd.f32 %v386, %v571
      %v573 = vpop.f32.mrb[0].mxu0
      %v574 = vpop.f32.mrb[0].mxu0
      %v575 = vadd.f32 %v386, %v574
      %v576 = vpop.f32.mrb[0].mxu0
      %577 = vmatprep.mubr.bf16.mxu0 0
      %578 = vmatmul.mubr.bf16.gmra.mrb[0].mxu0 %v479
      %v579 = vpop.f32.mrb[0].mxu0
      %v580 = vadd.f32 %v386, %v579
      %v581 = vpop.f32.mrb[0].mxu0
      %v582 = vpop.f32.mrb[0].mxu0
      %v583 = vadd.f32 %v386, %v582
      %v584 = vpop.f32.mrb[0].mxu0
      %585 = vmatprep.mubr.bf16.mxu0 0
      %586 = vmatmul.mubr.bf16.gmra.mrb[0].mxu0 %v482
      %v587 = vpop.f32.mrb[0].mxu0
      %v588 = vadd.f32 %v386, %v587
      %v589 = vpop.f32.mrb[0].mxu0
      %v590 = vpop.f32.mrb[0].mxu0
      %v591 = vadd.f32 %v386, %v590
      %v592 = vpop.f32.mrb[0].mxu0
      %593 = vmatprep.mubr.bf16.mxu0 0
      %594 = vmatmul.mubr.bf16.gmra.mrb[0].mxu0 %v485
      %v595 = vpop.f32.mrb[0].mxu0
      %v596 = vadd.f32 %v386, %v595
      %v597 = vpop.f32.mrb[0].mxu0
      %v598 = vpop.f32.mrb[0].mxu0
      %v599 = vadd.f32 %v386, %v598
      %v600 = vpop.f32.mrb[0].mxu0
      %601 = vmatprep.mubr.bf16.mxu0 0
      %602 = vmatmul.mubr.bf16.gmra.mrb[0].mxu0 %v488
      %v603 = vpop.f32.mrb[0].mxu0
      %v604 = vadd.f32 %v386, %v603
      %v605 = vpop.f32.mrb[0].mxu0
      %v606 = vpop.f32.mrb[0].mxu0
      %v607 = vadd.f32 %v386, %v606
      %v608 = vpop.f32.mrb[0].mxu0
      %609 = vmatprep.mubr.bf16.mxu0 0
      %610 = vmatmul.mubr.bf16.gmra.mrb[0].mxu0 %v491
      %v611 = vpop.f32.mrb[0].mxu0
      %v612 = vadd.f32 %v386, %v611
      %v613 = vpop.f32.mrb[0].mxu0
      %v614 = vpop.f32.mrb[0].mxu0
      %v615 = vadd.f32 %v386, %v614
      %v616 = vpop.f32.mrb[0].mxu0
      %617 = vmatprep.mubr.bf16.mxu0 0
      %618 = vmatmul.mubr.bf16.gmra.mrb[0].mxu0 %v494
      %v619 = vpop.f32.mrb[0].mxu0
      %v620 = vadd.f32 %v386, %v619
      %v621 = vpop.f32.mrb[0].mxu0
      %v622 = vpop.f32.mrb[0].mxu0
      %v623 = vadd.f32 %v386, %v622
      %v624 = vpop.f32.mrb[0].mxu0
      %625 = vmatprep.mubr.bf16.mxu0 0
      %626 = vmatmul.mubr.bf16.gmra.mrb[0].mxu0 %v497
      %v627 = vpop.f32.mrb[0].mxu0
      %v628 = vadd.f32 %v386, %v627
      %v629 = vpop.f32.mrb[0].mxu0
      %v630 = vpop.f32.mrb[0].mxu0
      %v631 = vadd.f32 %v386, %v630
      %v632 = vpop.f32.mrb[0].mxu0
      %633 = vmatprep.mubr.bf16.mxu0 0
      %634 = vmatmul.mubr.bf16.gmra.mrb[0].mxu0 %v500
      %v635 = vpop.f32.mrb[0].mxu0
      %v636 = vadd.f32 %v386, %v635
      %v637 = vpop.f32.mrb[0].mxu0
      %v638 = vpop.f32.mrb[0].mxu0
      %v639 = vadd.f32 %v386, %v638
      %v640 = vpop.f32.mrb[0].mxu0
      %641 = vmatprep.mubr.bf16.mxu0 0
      %642 = vmatmul.mubr.bf16.gmra.mrb[0].mxu0 %v503
      %v643 = vpop.f32.mrb[0].mxu0
      %v644 = vadd.f32 %v386, %v643
      %v645 = vpop.f32.mrb[0].mxu0
      %v646 = vpop.f32.mrb[0].mxu0
      %v647 = vadd.f32 %v386, %v646
      %v648 = vpop.f32.mrb[0].mxu0
      %649 = vmatprep.mubr.bf16.mxu0 0
      %650 = vmatmul.mubr.bf16.gmra.mrb[0].mxu0 %v506
      %v651 = vpop.f32.mrb[0].mxu0
      %v652 = vadd.f32 %v386, %v651
      %v653 = vpop.f32.mrb[0].mxu0
      %v654 = vpop.f32.mrb[0].mxu0
      %v655 = vadd.f32 %v386, %v654
      %v656 = vpop.f32.mrb[0].mxu0
      %657 = vmatprep.mubr.bf16.mxu0 0
      %658 = vmatmul.mubr.bf16.gmra.mrb[0].mxu0 %v509
      %v659 = vpop.f32.mrb[0].mxu0
      %v660 = vadd.f32 %v386, %v659
      %v661 = vpop.f32.mrb[0].mxu0
      %v662 = vpop.f32.mrb[0].mxu0
      %v663 = vadd.f32 %v386, %v662
      %v664 = vpop.f32.mrb[0].mxu0
      %665 = vmatprep.mubr.bf16.mxu0 0
      %666 = vmatmul.mubr.bf16.gmra.mrb[0].mxu0 %v512
      %v667 = vpop.f32.mrb[0].mxu0
      %v668 = vadd.f32 %v386, %v667
      %v669 = vpop.f32.mrb[0].mxu0
      %v670 = vpop.f32.mrb[0].mxu0
      %v671 = vadd.f32 %v386, %v670
      %v672 = vpop.f32.mrb[0].mxu0
      %673 = vmatprep.mubr.bf16.mxu0 0
      %674 = vmatmul.mubr.bf16.gmra.mrb[0].mxu0 %v515
      %v675 = vpop.f32.mrb[0].mxu0
      %v676 = vadd.f32 %v386, %v675
      %v677 = vpop.f32.mrb[0].mxu0
      %v678 = vpop.f32.mrb[0].mxu0
      %v679 = vadd.f32 %v386, %v678
      %v680 = vpop.f32.mrb[0].mxu0
      %681 = vdwg.mxu0
      %vm682 = vcmp.gt.f32.partialorder %v556, 0.0
      %vm683 = vcmp.gt.f32.partialorder %v559, 0.0
      %vm684 = vcmp.gt.f32.partialorder %v564, 0.0
      %vm685 = vcmp.gt.f32.partialorder %v567, 0.0
      %vm686 = vcmp.gt.f32.partialorder %v572, 0.0
      %vm687 = vcmp.gt.f32.partialorder %v575, 0.0
      %vm688 = vcmp.gt.f32.partialorder %v580, 0.0
      %vm689 = vcmp.gt.f32.partialorder %v583, 0.0
      %vm690 = vcmp.gt.f32.partialorder %v588, 0.0
      %vm691 = vcmp.gt.f32.partialorder %v591, 0.0
      %vm692 = vcmp.gt.f32.partialorder %v596, 0.0
      %vm693 = vcmp.gt.f32.partialorder %v599, 0.0
      %vm694 = vcmp.gt.f32.partialorder %v604, 0.0
      %vm695 = vcmp.gt.f32.partialorder %v607, 0.0
      %vm696 = vcmp.gt.f32.partialorder %v612, 0.0
      %vm697 = vcmp.gt.f32.partialorder %v615, 0.0
      %vm698 = vcmp.gt.f32.partialorder %v620, 0.0
      %vm699 = vcmp.gt.f32.partialorder %v623, 0.0
      %vm700 = vcmp.gt.f32.partialorder %v628, 0.0
      %vm701 = vcmp.gt.f32.partialorder %v631, 0.0
      %vm702 = vcmp.gt.f32.partialorder %v636, 0.0
      %vm703 = vcmp.gt.f32.partialorder %v639, 0.0
      %vm704 = vcmp.gt.f32.partialorder %v644, 0.0
      %vm705 = vcmp.gt.f32.partialorder %v647, 0.0
      %vm706 = vcmp.gt.f32.partialorder %v652, 0.0
      %vm707 = vcmp.gt.f32.partialorder %v655, 0.0
      %vm708 = vcmp.gt.f32.partialorder %v660, 0.0
      %vm709 = vcmp.gt.f32.partialorder %v663, 0.0
      %vm710 = vcmp.gt.f32.partialorder %v668, 0.0
      %vm711 = vcmp.gt.f32.partialorder %v671, 0.0
      %vm712 = vcmp.gt.f32.partialorder %v676, 0.0
      %vm713 = vcmp.gt.f32.partialorder %v679, 0.0
      %v714 = vmul.f32 %v556, 0.1
      %v715 = vmul.f32 %v559, 0.1
      %v716 = vmul.f32 %v564, 0.1
      %v717 = vmul.f32 %v567, 0.1
      %v718 = vmul.f32 %v572, 0.1
      %v719 = vmul.f32 %v575, 0.1
      %v720 = vmul.f32 %v580, 0.1
      %v721 = vmul.f32 %v583, 0.1
      %v722 = vmul.f32 %v588, 0.1
      %v723 = vmul.f32 %v591, 0.1
      %v724 = vmul.f32 %v596, 0.1
      %v725 = vmul.f32 %v599, 0.1
      %v726 = vmul.f32 %v604, 0.1
      %v727 = vmul.f32 %v607, 0.1
      %v728 = vmul.f32 %v612, 0.1
      %v729 = vmul.f32 %v615, 0.1
      %v730 = vmul.f32 %v620, 0.1
      %v731 = vmul.f32 %v623, 0.1
      %v732 = vmul.f32 %v628, 0.1
      %v733 = vmul.f32 %v631, 0.1
      %v734 = vmul.f32 %v636, 0.1
      %v735 = vmul.f32 %v639, 0.1
      %v736 = vmul.f32 %v644, 0.1
      %v737 = vmul.f32 %v647, 0.1
      %v738 = vmul.f32 %v652, 0.1
      %v739 = vmul.f32 %v655, 0.1
      %v740 = vmul.f32 %v660, 0.1
      %v741 = vmul.f32 %v663, 0.1
      %v742 = vmul.f32 %v668, 0.1
      %v743 = vmul.f32 %v671, 0.1
      %v744 = vmul.f32 %v676, 0.1
      %v745 = vmul.f32 %v679, 0.1
      %v746 = vsel %vm682, %v556, %v714
      %v747 = vsel %vm683, %v559, %v715
      %v748 = vsel %vm684, %v564, %v716
      %v749 = vsel %vm685, %v567, %v717
      %v750 = vsel %vm686, %v572, %v718
      %v751 = vsel %vm687, %v575, %v719
      %v752 = vsel %vm688, %v580, %v720
      %v753 = vsel %vm689, %v583, %v721
      %v754 = vsel %vm690, %v588, %v722
      %v755 = vsel %vm691, %v591, %v723
      %v756 = vsel %vm692, %v596, %v724
      %v757 = vsel %vm693, %v599, %v725
      %v758 = vsel %vm694, %v604, %v726
      %v759 = vsel %vm695, %v607, %v727
      %v760 = vsel %vm696, %v612, %v728
      %v761 = vsel %vm697, %v615, %v729
      %v762 = vsel %vm698, %v620, %v730
      %v763 = vsel %vm699, %v623, %v731
      %v764 = vsel %vm700, %v628, %v732
      %v765 = vsel %vm701, %v631, %v733
      %v766 = vsel %vm702, %v636, %v734
      %v767 = vsel %vm703, %v639, %v735
      %v768 = vsel %vm704, %v644, %v736
      %v769 = vsel %vm705, %v647, %v737
      %v770 = vsel %vm706, %v652, %v738
      %v771 = vsel %vm707, %v655, %v739
      %v772 = vsel %vm708, %v660, %v740
      %v773 = vsel %vm709, %v663, %v741
      %v774 = vsel %vm710, %v668, %v742
      %v775 = vsel %vm711, %v671, %v743
      %v776 = vsel %vm712, %v676, %v744
      %v777 = vsel %vm713, %v679, %v745
      %v778 = vpack.c.bf16 %v747, %v746
      %v779 = vpack.c.bf16 %v749, %v748
      %v780 = vpack.c.bf16 %v751, %v750
      %v781 = vpack.c.bf16 %v753, %v752
      %v782 = vpack.c.bf16 %v755, %v754
      %v783 = vpack.c.bf16 %v757, %v756
      %v784 = vpack.c.bf16 %v759, %v758
      %v785 = vpack.c.bf16 %v761, %v760
      %v786 = vpack.c.bf16 %v763, %v762
      %v787 = vpack.c.bf16 %v765, %v764
      %v788 = vpack.c.bf16 %v767, %v766
      %v789 = vpack.c.bf16 %v769, %v768
      %v790 = vpack.c.bf16 %v771, %v770
      %v791 = vpack.c.bf16 %v773, %v772
      %v792 = vpack.c.bf16 %v775, %v774
      %v793 = vpack.c.bf16 %v777, %v776
      %v810 = vunpack.c.l.b16 %v778
      %v811 = vunpack.c.h.b16 %v778
      %v812 = vunpack.c.l.b16 %v779
      %v813 = vunpack.c.h.b16 %v779
      %v814 = vunpack.c.l.b16 %v780
      %v815 = vunpack.c.h.b16 %v780
      %v816 = vunpack.c.l.b16 %v781
      %v817 = vunpack.c.h.b16 %v781
      %v818 = vunpack.c.l.b16 %v782
      %v819 = vunpack.c.h.b16 %v782
      %v820 = vunpack.c.l.b16 %v783
      %v821 = vunpack.c.h.b16 %v783
      %v822 = vunpack.c.l.b16 %v784
      %v823 = vunpack.c.h.b16 %v784
      %v824 = vunpack.c.l.b16 %v785
      %v825 = vunpack.c.h.b16 %v785
      %v826 = vunpack.c.l.b16 %v786
      %v827 = vunpack.c.h.b16 %v786
      %v828 = vunpack.c.l.b16 %v787
      %v829 = vunpack.c.h.b16 %v787
      %v830 = vunpack.c.l.b16 %v788
      %v831 = vunpack.c.h.b16 %v788
      %v832 = vunpack.c.l.b16 %v789
      %v833 = vunpack.c.h.b16 %v789
      %v834 = vunpack.c.l.b16 %v790
      %v835 = vunpack.c.h.b16 %v790
      %v836 = vunpack.c.l.b16 %v791
      %v837 = vunpack.c.h.b16 %v791
      %v838 = vunpack.c.l.b16 %v792
      %v839 = vunpack.c.h.b16 %v792
      %v840 = vunpack.c.l.b16 %v793
      %v841 = vunpack.c.h.b16 %v793
      %v842 = vpack.c.b16 %v810, %v810
      %v843 = vpack.c.b16 %v811, %v811
      %v844 = vpack.c.b16 %v812, %v812
      %v845 = vpack.c.b16 %v813, %v813
      %v846 = vpack.c.b16 %v814, %v814
      %v847 = vpack.c.b16 %v815, %v815
      %v848 = vpack.c.b16 %v816, %v816
      %v849 = vpack.c.b16 %v817, %v817
      %v850 = vpack.c.b16 %v818, %v818
      %v851 = vpack.c.b16 %v819, %v819
      %v852 = vpack.c.b16 %v820, %v820
      %v853 = vpack.c.b16 %v821, %v821
      %v854 = vpack.c.b16 %v822, %v822
      %v855 = vpack.c.b16 %v823, %v823
      %v856 = vpack.c.b16 %v824, %v824
      %v857 = vpack.c.b16 %v825, %v825
      %v858 = vpack.c.b16 %v826, %v826
      %v859 = vpack.c.b16 %v827, %v827
      %v860 = vpack.c.b16 %v828, %v828
      %v861 = vpack.c.b16 %v829, %v829
      %v862 = vpack.c.b16 %v830, %v830
      %v863 = vpack.c.b16 %v831, %v831
      %v864 = vpack.c.b16 %v832, %v832
      %v865 = vpack.c.b16 %v833, %v833
      %v866 = vpack.c.b16 %v834, %v834
      %v867 = vpack.c.b16 %v835, %v835
      %v868 = vpack.c.b16 %v836, %v836
      %v869 = vpack.c.b16 %v837, %v837
      %v870 = vpack.c.b16 %v838, %v838
      %v871 = vpack.c.b16 %v839, %v839
      %v872 = vpack.c.b16 %v840, %v840
      %v873 = vpack.c.b16 %v841, %v841
      %vm874 = vsmask.f32 4368
      %vm875 = vmor %vm236, %vm874
      %v877 = vshrl.u32 %v842, 16
      %v879 = vrot.slane %v877, 7
      %v880 = vshll.u32 %v842, 16
      %v882 = vor.u32 %v879, %v880
      %v883 = vrot.slane %v879, 4
      %v885 = vshrl.u32 %v843, 16
      %v887 = vrot.slane %v885, 7
      %v888 = vshll.u32 %v843, 16
      %v890 = vor.u32 %v887, %v888
      %v891 = vsel %vm875, %v883, %v890
      %v892 = vrot.slane %v887, 4
      %v894 = vshrl.u32 %v844, 16
      %v896 = vrot.slane %v894, 7
      %v897 = vshll.u32 %v844, 16
      %v899 = vor.u32 %v896, %v897
      %v900 = vrot.slane %v896, 4
      %v902 = vshrl.u32 %v845, 16
      %v904 = vrot.slane %v902, 7
      %v905 = vshll.u32 %v845, 16
      %v907 = vor.u32 %v904, %v905
      %v908 = vsel %vm875, %v900, %v907
      %v909 = vrot.slane %v904, 4
      %v911 = vshrl.u32 %v846, 16
      %v913 = vrot.slane %v911, 7
      %v914 = vshll.u32 %v846, 16
      %v916 = vor.u32 %v913, %v914
      %v917 = vrot.slane %v913, 4
      %v919 = vshrl.u32 %v847, 16
      %v921 = vrot.slane %v919, 7
      %v922 = vshll.u32 %v847, 16
      %v924 = vor.u32 %v921, %v922
      %v925 = vsel %vm875, %v917, %v924
      %v926 = vrot.slane %v921, 4
      %v928 = vshrl.u32 %v848, 16
      %v930 = vrot.slane %v928, 7
      %v931 = vshll.u32 %v848, 16
      %v933 = vor.u32 %v930, %v931
      %v934 = vrot.slane %v930, 4
      %v936 = vshrl.u32 %v849, 16
      %v938 = vrot.slane %v936, 7
      %v939 = vshll.u32 %v849, 16
      %v941 = vor.u32 %v938, %v939
      %v942 = vsel %vm875, %v934, %v941
      %v943 = vrot.slane %v938, 4
      %v945 = vshrl.u32 %v850, 16
      %v947 = vrot.slane %v945, 7
      %v948 = vshll.u32 %v850, 16
      %v950 = vor.u32 %v947, %v948
      %v951 = vrot.slane %v947, 4
      %v953 = vshrl.u32 %v851, 16
      %v955 = vrot.slane %v953, 7
      %v956 = vshll.u32 %v851, 16
      %v958 = vor.u32 %v955, %v956
      %v959 = vsel %vm875, %v951, %v958
      %v960 = vrot.slane %v955, 4
      %v962 = vshrl.u32 %v852, 16
      %v964 = vrot.slane %v962, 7
      %v965 = vshll.u32 %v852, 16
      %v967 = vor.u32 %v964, %v965
      %v968 = vrot.slane %v964, 4
      %v970 = vshrl.u32 %v853, 16
      %v972 = vrot.slane %v970, 7
      %v973 = vshll.u32 %v853, 16
      %v975 = vor.u32 %v972, %v973
      %v976 = vsel %vm875, %v968, %v975
      %v977 = vrot.slane %v972, 4
      %v979 = vshrl.u32 %v854, 16
      %v981 = vrot.slane %v979, 7
      %v982 = vshll.u32 %v854, 16
      %v984 = vor.u32 %v981, %v982
      %v985 = vrot.slane %v981, 4
      %v987 = vshrl.u32 %v855, 16
      %v989 = vrot.slane %v987, 7
      %v990 = vshll.u32 %v855, 16
      %v992 = vor.u32 %v989, %v990
      %v993 = vsel %vm875, %v985, %v992
      %v994 = vrot.slane %v989, 4
      %v996 = vshrl.u32 %v856, 16
      %v998 = vrot.slane %v996, 7
      %v999 = vshll.u32 %v856, 16
      %v1001 = vor.u32 %v998, %v999
      %v1002 = vrot.slane %v998, 4
      %v1004 = vshrl.u32 %v857, 16
      %v1006 = vrot.slane %v1004, 7
      %v1007 = vshll.u32 %v857, 16
      %v1009 = vor.u32 %v1006, %v1007
      %v1010 = vsel %vm875, %v1002, %v1009
      %v1011 = vrot.slane %v1006, 4
      %v1013 = vshrl.u32 %v858, 16
      %v1015 = vrot.slane %v1013, 7
      %v1016 = vshll.u32 %v858, 16
      %v1018 = vor.u32 %v1015, %v1016
      %v1019 = vrot.slane %v1015, 4
      %v1021 = vshrl.u32 %v859, 16
      %v1023 = vrot.slane %v1021, 7
      %v1024 = vshll.u32 %v859, 16
      %v1026 = vor.u32 %v1023, %v1024
      %v1027 = vsel %vm875, %v1019, %v1026
      %v1028 = vrot.slane %v1023, 4
      %v1030 = vshrl.u32 %v860, 16
      %v1032 = vrot.slane %v1030, 7
      %v1033 = vshll.u32 %v860, 16
      %v1035 = vor.u32 %v1032, %v1033
      %v1036 = vrot.slane %v1032, 4
      %v1038 = vshrl.u32 %v861, 16
      %v1040 = vrot.slane %v1038, 7
      %v1041 = vshll.u32 %v861, 16
      %v1043 = vor.u32 %v1040, %v1041
      %v1044 = vsel %vm875, %v1036, %v1043
      %v1045 = vrot.slane %v1040, 4
      %v1047 = vshrl.u32 %v862, 16
      %v1049 = vrot.slane %v1047, 7
      %v1050 = vshll.u32 %v862, 16
      %v1052 = vor.u32 %v1049, %v1050
      %v1053 = vrot.slane %v1049, 4
      %v1055 = vshrl.u32 %v863, 16
      %v1057 = vrot.slane %v1055, 7
      %v1058 = vshll.u32 %v863, 16
      %v1060 = vor.u32 %v1057, %v1058
      %v1061 = vsel %vm875, %v1053, %v1060
      %v1062 = vrot.slane %v1057, 4
      %v1064 = vshrl.u32 %v864, 16
      %v1066 = vrot.slane %v1064, 7
      %v1067 = vshll.u32 %v864, 16
      %v1069 = vor.u32 %v1066, %v1067
      %v1070 = vrot.slane %v1066, 4
      %v1072 = vshrl.u32 %v865, 16
      %v1074 = vrot.slane %v1072, 7
      %v1075 = vshll.u32 %v865, 16
      %v1077 = vor.u32 %v1074, %v1075
      %v1078 = vsel %vm875, %v1070, %v1077
      %v1079 = vrot.slane %v1074, 4
      %v1081 = vshrl.u32 %v866, 16
      %v1083 = vrot.slane %v1081, 7
      %v1084 = vshll.u32 %v866, 16
      %v1086 = vor.u32 %v1083, %v1084
      %v1087 = vrot.slane %v1083, 4
      %v1089 = vshrl.u32 %v867, 16
      %v1091 = vrot.slane %v1089, 7
      %v1092 = vshll.u32 %v867, 16
      %v1094 = vor.u32 %v1091, %v1092
      %v1095 = vsel %vm875, %v1087, %v1094
      %v1096 = vrot.slane %v1091, 4
      %v1098 = vshrl.u32 %v868, 16
      %v1100 = vrot.slane %v1098, 7
      %v1101 = vshll.u32 %v868, 16
      %v1103 = vor.u32 %v1100, %v1101
      %v1104 = vrot.slane %v1100, 4
      %v1106 = vshrl.u32 %v869, 16
      %v1108 = vrot.slane %v1106, 7
      %v1109 = vshll.u32 %v869, 16
      %v1111 = vor.u32 %v1108, %v1109
      %v1112 = vsel %vm875, %v1104, %v1111
      %v1113 = vrot.slane %v1108, 4
      %v1115 = vshrl.u32 %v870, 16
      %v1117 = vrot.slane %v1115, 7
      %v1118 = vshll.u32 %v870, 16
      %v1120 = vor.u32 %v1117, %v1118
      %v1121 = vrot.slane %v1117, 4
      %v1123 = vshrl.u32 %v871, 16
      %v1125 = vrot.slane %v1123, 7
      %v1126 = vshll.u32 %v871, 16
      %v1128 = vor.u32 %v1125, %v1126
      %v1129 = vsel %vm875, %v1121, %v1128
      %v1130 = vrot.slane %v1125, 4
      %v1132 = vshrl.u32 %v872, 16
      %v1134 = vrot.slane %v1132, 7
      %v1135 = vshll.u32 %v872, 16
      %v1137 = vor.u32 %v1134, %v1135
      %v1138 = vrot.slane %v1134, 4
      %v1140 = vshrl.u32 %v873, 16
      %v1142 = vrot.slane %v1140, 7
      %v1143 = vshll.u32 %v873, 16
      %v1145 = vor.u32 %v1142, %v1143
      %v1146 = vsel %vm875, %v1138, %v1145
      %v1147 = vrot.slane %v1142, 4
      %s1196 = scalar_lea.vmem [#allocation2], 12
      %vm1197 = vcmask 11264
      %vm1198 = vmand %vm1197, %vm292
      %v1199 = vld [vmem:[%s1196] sm:$0xf]
      %v1200 = vsel %vm1198, %v882, %v1199
      %1201 = vst [vmem:[%s1196] sm:$0xf] %v1200
      %1202 = vst.msk [vmem:[%s1196 + $0x4] sm:$0xf] %vm226, %v891
      %v1203 = vld [vmem:[%s1196 + $0x8] sm:$0x1]
      %v1204 = vsel %vm237, %v892, %v1203
      %1205 = vst [vmem:[%s1196 + $0x8] sm:$0x1] %v1204
      %v1206 = vld [vmem:[%s1196 + $0xc] sm:$0xf]
      %v1207 = vsel %vm1198, %v899, %v1206
      %1208 = vst [vmem:[%s1196 + $0xc] sm:$0xf] %v1207
      %1209 = vst.msk [vmem:[%s1196 + $0x10] sm:$0xf] %vm226, %v908
      %v1210 = vld [vmem:[%s1196 + $0x14] sm:$0x1]
      %v1211 = vsel %vm237, %v909, %v1210
      %1212 = vst [vmem:[%s1196 + $0x14] sm:$0x1] %v1211
      %v1213 = vld [vmem:[%s1196 + $0x18] sm:$0xf]
      %v1214 = vsel %vm1198, %v916, %v1213
      %1215 = vst [vmem:[%s1196 + $0x18] sm:$0xf] %v1214
      %1216 = vst.msk [vmem:[%s1196 + $0x1c] sm:$0xf] %vm226, %v925
      %v1217 = vld [vmem:[%s1196 + $0x20] sm:$0x1]
      %v1218 = vsel %vm237, %v926, %v1217
      %1219 = vst [vmem:[%s1196 + $0x20] sm:$0x1] %v1218
      %v1220 = vld [vmem:[%s1196 + $0x24] sm:$0xf]
      %v1221 = vsel %vm1198, %v933, %v1220
      %1222 = vst [vmem:[%s1196 + $0x24] sm:$0xf] %v1221
      %1223 = vst.msk [vmem:[%s1196 + $0x28] sm:$0xf] %vm226, %v942
      %v1224 = vld [vmem:[%s1196 + $0x2c] sm:$0x1]
      %v1225 = vsel %vm237, %v943, %v1224
      %1226 = vst [vmem:[%s1196 + $0x2c] sm:$0x1] %v1225
      %v1227 = vld [vmem:[%s1196 + $0x30] sm:$0xf]
      %v1228 = vsel %vm1198, %v950, %v1227
      %1229 = vst [vmem:[%s1196 + $0x30] sm:$0xf] %v1228
      %1230 = vst.msk [vmem:[%s1196 + $0x34] sm:$0xf] %vm226, %v959
      %v1231 = vld [vmem:[%s1196 + $0x38] sm:$0x1]
      %v1232 = vsel %vm237, %v960, %v1231
      %1233 = vst [vmem:[%s1196 + $0x38] sm:$0x1] %v1232
      %v1234 = vld [vmem:[%s1196 + $0x3c] sm:$0xf]
      %v1235 = vsel %vm1198, %v967, %v1234
      %1236 = vst [vmem:[%s1196 + $0x3c] sm:$0xf] %v1235
      %1237 = vst.msk [vmem:[%s1196 + $0x40] sm:$0xf] %vm226, %v976
      %v1238 = vld [vmem:[%s1196 + $0x44] sm:$0x1]
      %v1239 = vsel %vm237, %v977, %v1238
      %1240 = vst [vmem:[%s1196 + $0x44] sm:$0x1] %v1239
      %v1241 = vld [vmem:[%s1196 + $0x48] sm:$0xf]
      %v1242 = vsel %vm1198, %v984, %v1241
      %1243 = vst [vmem:[%s1196 + $0x48] sm:$0xf] %v1242
      %1244 = vst.msk [vmem:[%s1196 + $0x4c] sm:$0xf] %vm226, %v993
      %v1245 = vld [vmem:[%s1196 + $0x50] sm:$0x1]
      %v1246 = vsel %vm237, %v994, %v1245
      %1247 = vst [vmem:[%s1196 + $0x50] sm:$0x1] %v1246
      %v1248 = vld [vmem:[%s1196 + $0x54] sm:$0xf]
      %v1249 = vsel %vm1198, %v1001, %v1248
      %1250 = vst [vmem:[%s1196 + $0x54] sm:$0xf] %v1249
      %1251 = vst.msk [vmem:[%s1196 + $0x58] sm:$0xf] %vm226, %v1010
      %v1252 = vld [vmem:[%s1196 + $0x5c] sm:$0x1]
      %v1253 = vsel %vm237, %v1011, %v1252
      %1254 = vst [vmem:[%s1196 + $0x5c] sm:$0x1] %v1253
      %v1255 = vld [vmem:[%s1196 + $0x60] sm:$0xf]
      %v1256 = vsel %vm1198, %v1018, %v1255
      %1257 = vst [vmem:[%s1196 + $0x60] sm:$0xf] %v1256
      %1258 = vst.msk [vmem:[%s1196 + $0x64] sm:$0xf] %vm226, %v1027
      %v1259 = vld [vmem:[%s1196 + $0x68] sm:$0x1]
      %v1260 = vsel %vm237, %v1028, %v1259
      %1261 = vst [vmem:[%s1196 + $0x68] sm:$0x1] %v1260
      %v1262 = vld [vmem:[%s1196 + $0x6c] sm:$0xf]
      %v1263 = vsel %vm1198, %v1035, %v1262
      %1264 = vst [vmem:[%s1196 + $0x6c] sm:$0xf] %v1263
      %1265 = vst.msk [vmem:[%s1196 + $0x70] sm:$0xf] %vm226, %v1044
      %v1266 = vld [vmem:[%s1196 + $0x74] sm:$0x1]
      %v1267 = vsel %vm237, %v1045, %v1266
      %1268 = vst [vmem:[%s1196 + $0x74] sm:$0x1] %v1267
      %v1269 = vld [vmem:[%s1196 + $0x78] sm:$0xf]
      %v1270 = vsel %vm1198, %v1052, %v1269
      %1271 = vst [vmem:[%s1196 + $0x78] sm:$0xf] %v1270
      %1272 = vst.msk [vmem:[%s1196 + $0x7c] sm:$0xf] %vm226, %v1061
      %v1273 = vld [vmem:[%s1196 + $0x80] sm:$0x1]
      %v1274 = vsel %vm237, %v1062, %v1273
      %1275 = vst [vmem:[%s1196 + $0x80] sm:$0x1] %v1274
      %v1276 = vld [vmem:[%s1196 + $0x84] sm:$0xf]
      %v1277 = vsel %vm1198, %v1069, %v1276
      %1278 = vst [vmem:[%s1196 + $0x84] sm:$0xf] %v1277
      %1279 = vst.msk [vmem:[%s1196 + $0x88] sm:$0xf] %vm226, %v1078
      %v1280 = vld [vmem:[%s1196 + $0x8c] sm:$0x1]
      %v1281 = vsel %vm237, %v1079, %v1280
      %1282 = vst [vmem:[%s1196 + $0x8c] sm:$0x1] %v1281
      %v1283 = vld [vmem:[%s1196 + $0x90] sm:$0xf]
      %v1284 = vsel %vm1198, %v1086, %v1283
      %1285 = vst [vmem:[%s1196 + $0x90] sm:$0xf] %v1284
      %1286 = vst.msk [vmem:[%s1196 + $0x94] sm:$0xf] %vm226, %v1095
      %v1287 = vld [vmem:[%s1196 + $0x98] sm:$0x1]
      %v1288 = vsel %vm237, %v1096, %v1287
      %1289 = vst [vmem:[%s1196 + $0x98] sm:$0x1] %v1288
      %v1290 = vld [vmem:[%s1196 + $0x9c] sm:$0xf]
      %v1291 = vsel %vm1198, %v1103, %v1290
      %1292 = vst [vmem:[%s1196 + $0x9c] sm:$0xf] %v1291
      %1293 = vst.msk [vmem:[%s1196 + $0xa0] sm:$0xf] %vm226, %v1112
      %v1294 = vld [vmem:[%s1196 + $0xa4] sm:$0x1]
      %v1295 = vsel %vm237, %v1113, %v1294
      %1296 = vst [vmem:[%s1196 + $0xa4] sm:$0x1] %v1295
      %v1297 = vld [vmem:[%s1196 + $0xa8] sm:$0xf]
      %v1298 = vsel %vm1198, %v1120, %v1297
      %1299 = vst [vmem:[%s1196 + $0xa8] sm:$0xf] %v1298
      %1300 = vst.msk [vmem:[%s1196 + $0xac] sm:$0xf] %vm226, %v1129
      %v1301 = vld [vmem:[%s1196 + $0xb0] sm:$0x1]
      %v1302 = vsel %vm237, %v1130, %v1301
      %1303 = vst [vmem:[%s1196 + $0xb0] sm:$0x1] %v1302
      %v1304 = vld [vmem:[%s1196 + $0xb4] sm:$0xf]
      %v1305 = vsel %vm1198, %v1137, %v1304
      %1306 = vst [vmem:[%s1196 + $0xb4] sm:$0xf] %v1305
      %1307 = vst.msk [vmem:[%s1196 + $0xb8] sm:$0xf] %vm226, %v1146
      %v1308 = vld [vmem:[%s1196 + $0xbc] sm:$0x1]
      %v1309 = vsel %vm237, %v1147, %v1308
      %1310 = vst [vmem:[%s1196 + $0xbc] sm:$0x1] %v1309
      %v1311 = vld [vmem:[%s2] sm:$0x7]
      %v1312 = vld [vmem:[%s2 + $0x4] sm:$0x7]
      %v1313 = vld [vmem:[%s2 + $0x8] sm:$0x7]
      %v1314 = vld [vmem:[#allocation2] sm:$0xf]
      %v1315 = vld [vmem:[#allocation2 + $0x4] sm:$0xf]
      %v1316 = vld [vmem:[#allocation2 + $0x8] sm:$0x1]
      %v1317 = vld [vmem:[#allocation2 + $0xc] sm:$0xf]
      %v1318 = vld [vmem:[#allocation2 + $0x10] sm:$0xf]
      %v1319 = vld [vmem:[#allocation2 + $0x14] sm:$0x1]
      %v1320 = vld [vmem:[#allocation2 + $0x18] sm:$0xf]
      %v1321 = vld [vmem:[#allocation2 + $0x1c] sm:$0xf]
      %v1322 = vld [vmem:[#allocation2 + $0x20] sm:$0x1]
      %v1323 = vld [vmem:[#allocation2 + $0x24] sm:$0xf]
      %v1324 = vld [vmem:[#allocation2 + $0x28] sm:$0xf]
      %v1325 = vld [vmem:[#allocation2 + $0x2c] sm:$0x1]
      %v1326 = vld [vmem:[#allocation2 + $0x30] sm:$0xf]
      %v1327 = vld [vmem:[#allocation2 + $0x34] sm:$0xf]
      %v1328 = vld [vmem:[#allocation2 + $0x38] sm:$0x1]
      %v1329 = vld [vmem:[#allocation2 + $0x3c] sm:$0xf]
      %v1330 = vld [vmem:[#allocation2 + $0x40] sm:$0xf]
      %v1331 = vld [vmem:[#allocation2 + $0x44] sm:$0x1]
      %v1332 = vld [vmem:[#allocation2 + $0x48] sm:$0xf]
      %v1333 = vld [vmem:[#allocation2 + $0x4c] sm:$0xf]
      %v1334 = vld [vmem:[#allocation2 + $0x50] sm:$0x1]
      %v1335 = vld [vmem:[#allocation2 + $0x54] sm:$0xf]
      %v1336 = vld [vmem:[#allocation2 + $0x58] sm:$0xf]
      %v1337 = vld [vmem:[#allocation2 + $0x5c] sm:$0x1]
      %v1338 = vld [vmem:[#allocation2 + $0x60] sm:$0xf]
      %v1339 = vld [vmem:[#allocation2 + $0x64] sm:$0xf]
      %v1340 = vld [vmem:[#allocation2 + $0x68] sm:$0x1]
      %v1341 = vld [vmem:[#allocation2 + $0x6c] sm:$0xf]
      %v1342 = vld [vmem:[#allocation2 + $0x70] sm:$0xf]
      %v1343 = vld [vmem:[#allocation2 + $0x74] sm:$0x1]
      %v1344 = vld [vmem:[#allocation2 + $0x78] sm:$0xf]
      %v1345 = vld [vmem:[#allocation2 + $0x7c] sm:$0xf]
      %v1346 = vld [vmem:[#allocation2 + $0x80] sm:$0x1]
      %v1347 = vld [vmem:[#allocation2 + $0x84] sm:$0xf]
      %v1348 = vld [vmem:[#allocation2 + $0x88] sm:$0xf]
      %v1349 = vld [vmem:[#allocation2 + $0x8c] sm:$0x1]
      %v1350 = vld [vmem:[#allocation2 + $0x90] sm:$0xf]
      %v1351 = vld [vmem:[#allocation2 + $0x94] sm:$0xf]
      %v1352 = vld [vmem:[#allocation2 + $0x98] sm:$0x1]
      %v1353 = vld [vmem:[#allocation2 + $0x9c] sm:$0xf]
      %v1354 = vld [vmem:[#allocation2 + $0xa0] sm:$0xf]
      %v1355 = vld [vmem:[#allocation2 + $0xa4] sm:$0x1]
      %v1356 = vld [vmem:[#allocation2 + $0xa8] sm:$0xf]
      %v1357 = vld [vmem:[#allocation2 + $0xac] sm:$0xf]
      %v1358 = vld [vmem:[#allocation2 + $0xb0] sm:$0x1]
      %v1359 = vld [vmem:[#allocation2 + $0xb4] sm:$0xf]
      %v1360 = vld [vmem:[#allocation2 + $0xb8] sm:$0xf]
      %v1361 = vld [vmem:[#allocation2 + $0xbc] sm:$0x1]
      %v1394 = vunpack.c.l.b16 %v1314
      %v1395 = vunpack.c.l.b16 %v1315
      %v1396 = vunpack.c.l.b16 %v1317
      %v1397 = vunpack.c.l.b16 %v1318
      %v1398 = vunpack.c.l.b16 %v1320
      %v1399 = vunpack.c.l.b16 %v1321
      %v1400 = vunpack.c.l.b16 %v1323
      %v1401 = vunpack.c.l.b16 %v1324
      %v1402 = vunpack.c.l.b16 %v1326
      %v1403 = vunpack.c.l.b16 %v1327
      %v1404 = vunpack.c.l.b16 %v1329
      %v1405 = vunpack.c.l.b16 %v1330
      %v1406 = vunpack.c.l.b16 %v1332
      %v1407 = vunpack.c.l.b16 %v1333
      %v1408 = vunpack.c.l.b16 %v1335
      %v1409 = vunpack.c.l.b16 %v1336
      %v1410 = vunpack.c.l.b16 %v1338
      %v1411 = vunpack.c.l.b16 %v1339
      %v1412 = vunpack.c.l.b16 %v1341
      %v1413 = vunpack.c.l.b16 %v1342
      %v1414 = vunpack.c.l.b16 %v1344
      %v1415 = vunpack.c.l.b16 %v1345
      %v1416 = vunpack.c.l.b16 %v1347
      %v1417 = vunpack.c.l.b16 %v1348
      %v1418 = vunpack.c.l.b16 %v1350
      %v1419 = vunpack.c.l.b16 %v1351
      %v1420 = vunpack.c.l.b16 %v1353
      %v1421 = vunpack.c.l.b16 %v1354
      %v1422 = vunpack.c.l.b16 %v1356
      %v1423 = vunpack.c.l.b16 %v1357
      %v1424 = vunpack.c.l.b16 %v1359
      %v1425 = vunpack.c.l.b16 %v1360
      %v1426 = vpack.c.b16 %v1395, %v1394
      %v1427 = vpack.c.b16 %v1397, %v1396
      %v1428 = vpack.c.b16 %v1399, %v1398
      %v1429 = vpack.c.b16 %v1401, %v1400
      %v1430 = vpack.c.b16 %v1403, %v1402
      %v1431 = vpack.c.b16 %v1405, %v1404
      %v1432 = vpack.c.b16 %v1407, %v1406
      %v1433 = vpack.c.b16 %v1409, %v1408
      %v1434 = vpack.c.b16 %v1411, %v1410
      %v1435 = vpack.c.b16 %v1413, %v1412
      %v1436 = vpack.c.b16 %v1415, %v1414
      %v1437 = vpack.c.b16 %v1417, %v1416
      %v1438 = vpack.c.b16 %v1419, %v1418
      %v1439 = vpack.c.b16 %v1421, %v1420
      %v1440 = vpack.c.b16 %v1423, %v1422
      %v1441 = vpack.c.b16 %v1425, %v1424
      %v1458 = vunpack.c.l.b16 %v1316
      %v1459 = vunpack.c.l.b16 %v1319
      %v1460 = vunpack.c.l.b16 %v1322
      %v1461 = vunpack.c.l.b16 %v1325
      %v1462 = vunpack.c.l.b16 %v1328
      %v1463 = vunpack.c.l.b16 %v1331
      %v1464 = vunpack.c.l.b16 %v1334
      %v1465 = vunpack.c.l.b16 %v1337
      %v1466 = vunpack.c.l.b16 %v1340
      %v1467 = vunpack.c.l.b16 %v1343
      %v1468 = vunpack.c.l.b16 %v1346
      %v1469 = vunpack.c.l.b16 %v1349
      %v1470 = vunpack.c.l.b16 %v1352
      %v1471 = vunpack.c.l.b16 %v1355
      %v1472 = vunpack.c.l.b16 %v1358
      %v1473 = vunpack.c.l.b16 %v1361
      %v1474 = vpack.c.b16 %v1458, %v1458
      %v1475 = vpack.c.b16 %v1459, %v1459
      %v1476 = vpack.c.b16 %v1460, %v1460
      %v1477 = vpack.c.b16 %v1461, %v1461
      %v1478 = vpack.c.b16 %v1462, %v1462
      %v1479 = vpack.c.b16 %v1463, %v1463
      %v1480 = vpack.c.b16 %v1464, %v1464
      %v1481 = vpack.c.b16 %v1465, %v1465
      %v1482 = vpack.c.b16 %v1466, %v1466
      %v1483 = vpack.c.b16 %v1467, %v1467
      %v1484 = vpack.c.b16 %v1468, %v1468
      %v1485 = vpack.c.b16 %v1469, %v1469
      %v1486 = vpack.c.b16 %v1470, %v1470
      %v1487 = vpack.c.b16 %v1471, %v1471
      %v1488 = vpack.c.b16 %v1472, %v1472
      %v1489 = vpack.c.b16 %v1473, %v1473
      %vm1490 = vsmask.f32 7424
      %v1492 = vshrl.u32 %v1426, 16
      %v1494 = vshll.u32 %v1426, 16
      %v1496 = vrot.slane %v1494, 1
      %v1497 = vor.u32 %v1492, %v1496
      %v1499 = vshll.u32 %v1474, 16
      %v1501 = vrot.slane %v1499, 1
      %v1502 = vsel %vm1490, %v1497, %v1501
      %v1504 = vshrl.u32 %v1427, 16
      %v1506 = vshll.u32 %v1427, 16
      %v1508 = vrot.slane %v1506, 1
      %v1509 = vor.u32 %v1504, %v1508
      %v1511 = vshll.u32 %v1475, 16
      %v1513 = vrot.slane %v1511, 1
      %v1514 = vsel %vm1490, %v1509, %v1513
      %v1516 = vshrl.u32 %v1428, 16
      %v1518 = vshll.u32 %v1428, 16
      %v1520 = vrot.slane %v1518, 1
      %v1521 = vor.u32 %v1516, %v1520
      %v1523 = vshll.u32 %v1476, 16
      %v1525 = vrot.slane %v1523, 1
      %v1526 = vsel %vm1490, %v1521, %v1525
      %v1528 = vshrl.u32 %v1429, 16
      %v1530 = vshll.u32 %v1429, 16
      %v1532 = vrot.slane %v1530, 1
      %v1533 = vor.u32 %v1528, %v1532
      %v1535 = vshll.u32 %v1477, 16
      %v1537 = vrot.slane %v1535, 1
      %v1538 = vsel %vm1490, %v1533, %v1537
      %v1540 = vshrl.u32 %v1430, 16
      %v1542 = vshll.u32 %v1430, 16
      %v1544 = vrot.slane %v1542, 1
      %v1545 = vor.u32 %v1540, %v1544
      %v1547 = vshll.u32 %v1478, 16
      %v1549 = vrot.slane %v1547, 1
      %v1550 = vsel %vm1490, %v1545, %v1549
      %v1552 = vshrl.u32 %v1431, 16
      %v1554 = vshll.u32 %v1431, 16
      %v1556 = vrot.slane %v1554, 1
      %v1557 = vor.u32 %v1552, %v1556
      %v1559 = vshll.u32 %v1479, 16
      %v1561 = vrot.slane %v1559, 1
      %v1562 = vsel %vm1490, %v1557, %v1561
      %v1564 = vshrl.u32 %v1432, 16
      %v1566 = vshll.u32 %v1432, 16
      %v1568 = vrot.slane %v1566, 1
      %v1569 = vor.u32 %v1564, %v1568
      %v1571 = vshll.u32 %v1480, 16
      %v1573 = vrot.slane %v1571, 1
      %v1574 = vsel %vm1490, %v1569, %v1573
      %v1576 = vshrl.u32 %v1433, 16
      %v1578 = vshll.u32 %v1433, 16
      %v1580 = vrot.slane %v1578, 1
      %v1581 = vor.u32 %v1576, %v1580
      %v1583 = vshll.u32 %v1481, 16
      %v1585 = vrot.slane %v1583, 1
      %v1586 = vsel %vm1490, %v1581, %v1585
      %v1588 = vshrl.u32 %v1434, 16
      %v1590 = vshll.u32 %v1434, 16
      %v1592 = vrot.slane %v1590, 1
      %v1593 = vor.u32 %v1588, %v1592
      %v1595 = vshll.u32 %v1482, 16
      %v1597 = vrot.slane %v1595, 1
      %v1598 = vsel %vm1490, %v1593, %v1597
      %v1600 = vshrl.u32 %v1435, 16
      %v1602 = vshll.u32 %v1435, 16
      %v1604 = vrot.slane %v1602, 1
      %v1605 = vor.u32 %v1600, %v1604
      %v1607 = vshll.u32 %v1483, 16
      %v1609 = vrot.slane %v1607, 1
      %v1610 = vsel %vm1490, %v1605, %v1609
      %v1612 = vshrl.u32 %v1436, 16
      %v1614 = vshll.u32 %v1436, 16
      %v1616 = vrot.slane %v1614, 1
      %v1617 = vor.u32 %v1612, %v1616
      %v1619 = vshll.u32 %v1484, 16
      %v1621 = vrot.slane %v1619, 1
      %v1622 = vsel %vm1490, %v1617, %v1621
      %v1624 = vshrl.u32 %v1437, 16
      %v1626 = vshll.u32 %v1437, 16
      %v1628 = vrot.slane %v1626, 1
      %v1629 = vor.u32 %v1624, %v1628
      %v1631 = vshll.u32 %v1485, 16
      %v1633 = vrot.slane %v1631, 1
      %v1634 = vsel %vm1490, %v1629, %v1633
      %v1636 = vshrl.u32 %v1438, 16
      %v1638 = vshll.u32 %v1438, 16
      %v1640 = vrot.slane %v1638, 1
      %v1641 = vor.u32 %v1636, %v1640
      %v1643 = vshll.u32 %v1486, 16
      %v1645 = vrot.slane %v1643, 1
      %v1646 = vsel %vm1490, %v1641, %v1645
      %v1648 = vshrl.u32 %v1439, 16
      %v1650 = vshll.u32 %v1439, 16
      %v1652 = vrot.slane %v1650, 1
      %v1653 = vor.u32 %v1648, %v1652
      %v1655 = vshll.u32 %v1487, 16
      %v1657 = vrot.slane %v1655, 1
      %v1658 = vsel %vm1490, %v1653, %v1657
      %v1660 = vshrl.u32 %v1440, 16
      %v1662 = vshll.u32 %v1440, 16
      %v1664 = vrot.slane %v1662, 1
      %v1665 = vor.u32 %v1660, %v1664
      %v1667 = vshll.u32 %v1488, 16
      %v1669 = vrot.slane %v1667, 1
      %v1670 = vsel %vm1490, %v1665, %v1669
      %v1672 = vshrl.u32 %v1441, 16
      %v1674 = vshll.u32 %v1441, 16
      %v1676 = vrot.slane %v1674, 1
      %v1677 = vor.u32 %v1672, %v1676
      %v1679 = vshll.u32 %v1489, 16
      %v1681 = vrot.slane %v1679, 1
      %v1682 = vsel %vm1490, %v1677, %v1681
      %1683 = vrot.lane.b32.xlu0 %v1502, 2
      %v1684 = vpop.permute.xlu0 %1683
      %1685 = vrot.lane.b32.xlu0 %v1514, 2
      %v1686 = vpop.permute.xlu0 %1685
      %1687 = vrot.lane.b32.xlu0 %v1526, 2
      %v1688 = vpop.permute.xlu0 %1687
      %1689 = vrot.lane.b32.xlu0 %v1538, 2
      %v1690 = vpop.permute.xlu0 %1689
      %1691 = vrot.lane.b32.xlu0 %v1550, 2
      %v1692 = vpop.permute.xlu0 %1691
      %1693 = vrot.lane.b32.xlu0 %v1562, 2
      %v1694 = vpop.permute.xlu0 %1693
      %1695 = vrot.lane.b32.xlu0 %v1574, 2
      %v1696 = vpop.permute.xlu0 %1695
      %1697 = vrot.lane.b32.xlu0 %v1586, 2
      %v1698 = vpop.permute.xlu0 %1697
      %1699 = vrot.lane.b32.xlu0 %v1598, 2
      %v1700 = vpop.permute.xlu0 %1699
      %1701 = vrot.lane.b32.xlu0 %v1610, 2
      %v1702 = vpop.permute.xlu0 %1701
      %1703 = vrot.lane.b32.xlu0 %v1622, 2
      %v1704 = vpop.permute.xlu0 %1703
      %1705 = vrot.lane.b32.xlu0 %v1634, 2
      %v1706 = vpop.permute.xlu0 %1705
      %1707 = vrot.lane.b32.xlu0 %v1646, 2
      %v1708 = vpop.permute.xlu0 %1707
      %1709 = vrot.lane.b32.xlu0 %v1658, 2
      %v1710 = vpop.permute.xlu0 %1709
      %1711 = vrot.lane.b32.xlu0 %v1670, 2
      %v1712 = vpop.permute.xlu0 %1711
      %1713 = vrot.lane.b32.xlu0 %v1682, 2
      %v1714 = vpop.permute.xlu0 %1713
      %vm1715 = vcmask 1046528
      %v1716 = vrot.slane %v1426, 1
      %v1717 = vrot.slane %v1474, 1
      %v1718 = vsel %vm1715, %v1716, %v1717
      %v1719 = vrot.slane %v1427, 1
      %v1720 = vrot.slane %v1475, 1
      %v1721 = vsel %vm1715, %v1719, %v1720
      %v1722 = vrot.slane %v1428, 1
      %v1723 = vrot.slane %v1476, 1
      %v1724 = vsel %vm1715, %v1722, %v1723
      %v1725 = vrot.slane %v1429, 1
      %v1726 = vrot.slane %v1477, 1
      %v1727 = vsel %vm1715, %v1725, %v1726
      %v1728 = vrot.slane %v1430, 1
      %v1729 = vrot.slane %v1478, 1
      %v1730 = vsel %vm1715, %v1728, %v1729
      %v1731 = vrot.slane %v1431, 1
      %v1732 = vrot.slane %v1479, 1
      %v1733 = vsel %vm1715, %v1731, %v1732
      %v1734 = vrot.slane %v1432, 1
      %v1735 = vrot.slane %v1480, 1
      %v1736 = vsel %vm1715, %v1734, %v1735
      %v1737 = vrot.slane %v1433, 1
      %v1738 = vrot.slane %v1481, 1
      %v1739 = vsel %vm1715, %v1737, %v1738
      %v1740 = vrot.slane %v1434, 1
      %v1741 = vrot.slane %v1482, 1
      %v1742 = vsel %vm1715, %v1740, %v1741
      %v1743 = vrot.slane %v1435, 1
      %v1744 = vrot.slane %v1483, 1
      %v1745 = vsel %vm1715, %v1743, %v1744
      %v1746 = vrot.slane %v1436, 1
      %v1747 = vrot.slane %v1484, 1
      %v1748 = vsel %vm1715, %v1746, %v1747
      %v1749 = vrot.slane %v1437, 1
      %v1750 = vrot.slane %v1485, 1
      %v1751 = vsel %vm1715, %v1749, %v1750
      %v1752 = vrot.slane %v1438, 1
      %v1753 = vrot.slane %v1486, 1
      %v1754 = vsel %vm1715, %v1752, %v1753
      %v1755 = vrot.slane %v1439, 1
      %v1756 = vrot.slane %v1487, 1
      %v1757 = vsel %vm1715, %v1755, %v1756
      %v1758 = vrot.slane %v1440, 1
      %v1759 = vrot.slane %v1488, 1
      %v1760 = vsel %vm1715, %v1758, %v1759
      %v1761 = vrot.slane %v1441, 1
      %v1762 = vrot.slane %v1489, 1
      %v1763 = vsel %vm1715, %v1761, %v1762
      %1764 = vrot.lane.b32.xlu0 %v1718, 4
      %v1765 = vpop.permute.xlu0 %1764
      %1766 = vrot.lane.b32.xlu0 %v1721, 4
      %v1767 = vpop.permute.xlu0 %1766
      %1768 = vrot.lane.b32.xlu0 %v1724, 4
      %v1769 = vpop.permute.xlu0 %1768
      %1770 = vrot.lane.b32.xlu0 %v1727, 4
      %v1771 = vpop.permute.xlu0 %1770
      %1772 = vrot.lane.b32.xlu0 %v1730, 4
      %v1773 = vpop.permute.xlu0 %1772
      %1774 = vrot.lane.b32.xlu0 %v1733, 4
      %v1775 = vpop.permute.xlu0 %1774
      %1776 = vrot.lane.b32.xlu0 %v1736, 4
      %v1777 = vpop.permute.xlu0 %1776
      %1778 = vrot.lane.b32.xlu0 %v1739, 4
      %v1779 = vpop.permute.xlu0 %1778
      %1780 = vrot.lane.b32.xlu0 %v1742, 4
      %v1781 = vpop.permute.xlu0 %1780
      %1782 = vrot.lane.b32.xlu0 %v1745, 4
      %v1783 = vpop.permute.xlu0 %1782
      %1784 = vrot.lane.b32.xlu0 %v1748, 4
      %v1785 = vpop.permute.xlu0 %1784
      %1786 = vrot.lane.b32.xlu0 %v1751, 4
      %v1787 = vpop.permute.xlu0 %1786
      %1788 = vrot.lane.b32.xlu0 %v1754, 4
      %v1789 = vpop.permute.xlu0 %1788
      %1790 = vrot.lane.b32.xlu0 %v1757, 4
      %v1791 = vpop.permute.xlu0 %1790
      %1792 = vrot.lane.b32.xlu0 %v1760, 4
      %v1793 = vpop.permute.xlu0 %1792
      %1794 = vrot.lane.b32.xlu0 %v1763, 4
      %v1795 = vpop.permute.xlu0 %1794
      %vm1796 = vcmask 15360
      %v1798 = vsel %vm1796, %v1426, %v1684
      %v1800 = vsel %vm1796, %v1427, %v1686
      %v1802 = vsel %vm1796, %v1428, %v1688
      %v1804 = vsel %vm1796, %v1429, %v1690
      %v1806 = vsel %vm1796, %v1430, %v1692
      %v1808 = vsel %vm1796, %v1431, %v1694
      %v1810 = vsel %vm1796, %v1432, %v1696
      %v1812 = vsel %vm1796, %v1433, %v1698
      %v1814 = vsel %vm1796, %v1434, %v1700
      %v1816 = vsel %vm1796, %v1435, %v1702
      %v1818 = vsel %vm1796, %v1436, %v1704
      %v1820 = vsel %vm1796, %v1437, %v1706
      %v1822 = vsel %vm1796, %v1438, %v1708
      %v1824 = vsel %vm1796, %v1439, %v1710
      %v1826 = vsel %vm1796, %v1440, %v1712
      %v1828 = vsel %vm1796, %v1441, %v1714
      %v1830 = vsel %vm468, %v1798, %v1765
      %v1832 = vsel %vm468, %v1800, %v1767
      %v1834 = vsel %vm468, %v1802, %v1769
      %v1836 = vsel %vm468, %v1804, %v1771
      %v1838 = vsel %vm468, %v1806, %v1773
      %v1840 = vsel %vm468, %v1808, %v1775
      %v1842 = vsel %vm468, %v1810, %v1777
      %v1844 = vsel %vm468, %v1812, %v1779
      %v1846 = vsel %vm468, %v1814, %v1781
      %v1848 = vsel %vm468, %v1816, %v1783
      %v1850 = vsel %vm468, %v1818, %v1785
      %v1852 = vsel %vm468, %v1820, %v1787
      %v1854 = vsel %vm468, %v1822, %v1789
      %v1856 = vsel %vm468, %v1824, %v1791
      %v1858 = vsel %vm468, %v1826, %v1793
      %v1860 = vsel %vm468, %v1828, %v1795
      %v1861 = vld [vmem:[%s1196] sm:$0xf]
      %v1862 = vld [vmem:[%s1196 + $0x4] sm:$0xf]
      %v1863 = vld [vmem:[%s1196 + $0x8] sm:$0x1]
      %v1864 = vld [vmem:[%s1196 + $0xc] sm:$0xf]
      %v1865 = vld [vmem:[%s1196 + $0x10] sm:$0xf]
      %v1866 = vld [vmem:[%s1196 + $0x14] sm:$0x1]
      %v1867 = vld [vmem:[%s1196 + $0x18] sm:$0xf]
      %v1868 = vld [vmem:[%s1196 + $0x1c] sm:$0xf]
      %v1869 = vld [vmem:[%s1196 + $0x20] sm:$0x1]
      %v1870 = vld [vmem:[%s1196 + $0x24] sm:$0xf]
      %v1871 = vld [vmem:[%s1196 + $0x28] sm:$0xf]
      %v1872 = vld [vmem:[%s1196 + $0x2c] sm:$0x1]
      %v1873 = vld [vmem:[%s1196 + $0x30] sm:$0xf]
      %v1874 = vld [vmem:[%s1196 + $0x34] sm:$0xf]
      %v1875 = vld [vmem:[%s1196 + $0x38] sm:$0x1]
      %v1876 = vld [vmem:[%s1196 + $0x3c] sm:$0xf]
      %v1877 = vld [vmem:[%s1196 + $0x40] sm:$0xf]
      %v1878 = vld [vmem:[%s1196 + $0x44] sm:$0x1]
      %v1879 = vld [vmem:[%s1196 + $0x48] sm:$0xf]
      %v1880 = vld [vmem:[%s1196 + $0x4c] sm:$0xf]
      %v1881 = vld [vmem:[%s1196 + $0x50] sm:$0x1]
      %v1882 = vld [vmem:[%s1196 + $0x54] sm:$0xf]
      %v1883 = vld [vmem:[%s1196 + $0x58] sm:$0xf]
      %v1884 = vld [vmem:[%s1196 + $0x5c] sm:$0x1]
      %v1885 = vld [vmem:[%s1196 + $0x60] sm:$0xf]
      %v1886 = vld [vmem:[%s1196 + $0x64] sm:$0xf]
      %v1887 = vld [vmem:[%s1196 + $0x68] sm:$0x1]
      %v1888 = vld [vmem:[%s1196 + $0x6c] sm:$0xf]
      %v1889 = vld [vmem:[%s1196 + $0x70] sm:$0xf]
      %v1890 = vld [vmem:[%s1196 + $0x74] sm:$0x1]
      %v1891 = vld [vmem:[%s1196 + $0x78] sm:$0xf]
      %v1892 = vld [vmem:[%s1196 + $0x7c] sm:$0xf]
      %v1893 = vld [vmem:[%s1196 + $0x80] sm:$0x1]
      %v1894 = vld [vmem:[%s1196 + $0x84] sm:$0xf]
      %v1895 = vld [vmem:[%s1196 + $0x88] sm:$0xf]
      %v1896 = vld [vmem:[%s1196 + $0x8c] sm:$0x1]
      %v1897 = vld [vmem:[%s1196 + $0x90] sm:$0xf]
      %v1898 = vld [vmem:[%s1196 + $0x94] sm:$0xf]
      %v1899 = vld [vmem:[%s1196 + $0x98] sm:$0x1]
      %v1900 = vld [vmem:[%s1196 + $0x9c] sm:$0xf]
      %v1901 = vld [vmem:[%s1196 + $0xa0] sm:$0xf]
      %v1902 = vld [vmem:[%s1196 + $0xa4] sm:$0x1]
      %v1903 = vld [vmem:[%s1196 + $0xa8] sm:$0xf]
      %v1904 = vld [vmem:[%s1196 + $0xac] sm:$0xf]
      %v1905 = vld [vmem:[%s1196 + $0xb0] sm:$0x1]
      %v1906 = vld [vmem:[%s1196 + $0xb4] sm:$0xf]
      %v1907 = vld [vmem:[%s1196 + $0xb8] sm:$0xf]
      %v1908 = vld [vmem:[%s1196 + $0xbc] sm:$0x1]
      %v1941 = vunpack.c.l.b16 %v1861
      %v1942 = vunpack.c.l.b16 %v1862
      %v1943 = vunpack.c.l.b16 %v1864
      %v1944 = vunpack.c.l.b16 %v1865
      %v1945 = vunpack.c.l.b16 %v1867
      %v1946 = vunpack.c.l.b16 %v1868
      %v1947 = vunpack.c.l.b16 %v1870
      %v1948 = vunpack.c.l.b16 %v1871
      %v1949 = vunpack.c.l.b16 %v1873
      %v1950 = vunpack.c.l.b16 %v1874
      %v1951 = vunpack.c.l.b16 %v1876
      %v1952 = vunpack.c.l.b16 %v1877
      %v1953 = vunpack.c.l.b16 %v1879
      %v1954 = vunpack.c.l.b16 %v1880
      %v1955 = vunpack.c.l.b16 %v1882
      %v1956 = vunpack.c.l.b16 %v1883
      %v1957 = vunpack.c.l.b16 %v1885
      %v1958 = vunpack.c.l.b16 %v1886
      %v1959 = vunpack.c.l.b16 %v1888
      %v1960 = vunpack.c.l.b16 %v1889
      %v1961 = vunpack.c.l.b16 %v1891
      %v1962 = vunpack.c.l.b16 %v1892
      %v1963 = vunpack.c.l.b16 %v1894
      %v1964 = vunpack.c.l.b16 %v1895
      %v1965 = vunpack.c.l.b16 %v1897
      %v1966 = vunpack.c.l.b16 %v1898
      %v1967 = vunpack.c.l.b16 %v1900
      %v1968 = vunpack.c.l.b16 %v1901
      %v1969 = vunpack.c.l.b16 %v1903
      %v1970 = vunpack.c.l.b16 %v1904
      %v1971 = vunpack.c.l.b16 %v1906
      %v1972 = vunpack.c.l.b16 %v1907
      %v1973 = vpack.c.b16 %v1942, %v1941
      %v1974 = vpack.c.b16 %v1944, %v1943
      %v1975 = vpack.c.b16 %v1946, %v1945
      %v1976 = vpack.c.b16 %v1948, %v1947
      %v1977 = vpack.c.b16 %v1950, %v1949
      %v1978 = vpack.c.b16 %v1952, %v1951
      %v1979 = vpack.c.b16 %v1954, %v1953
      %v1980 = vpack.c.b16 %v1956, %v1955
      %v1981 = vpack.c.b16 %v1958, %v1957
      %v1982 = vpack.c.b16 %v1960, %v1959
      %v1983 = vpack.c.b16 %v1962, %v1961
      %v1984 = vpack.c.b16 %v1964, %v1963
      %v1985 = vpack.c.b16 %v1966, %v1965
      %v1986 = vpack.c.b16 %v1968, %v1967
      %v1987 = vpack.c.b16 %v1970, %v1969
      %v1988 = vpack.c.b16 %v1972, %v1971
      %v2005 = vunpack.c.l.b16 %v1863
      %v2006 = vunpack.c.l.b16 %v1866
      %v2007 = vunpack.c.l.b16 %v1869
      %v2008 = vunpack.c.l.b16 %v1872
      %v2009 = vunpack.c.l.b16 %v1875
      %v2010 = vunpack.c.l.b16 %v1878
      %v2011 = vunpack.c.l.b16 %v1881
      %v2012 = vunpack.c.l.b16 %v1884
      %v2013 = vunpack.c.l.b16 %v1887
      %v2014 = vunpack.c.l.b16 %v1890
      %v2015 = vunpack.c.l.b16 %v1893
      %v2016 = vunpack.c.l.b16 %v1896
      %v2017 = vunpack.c.l.b16 %v1899
      %v2018 = vunpack.c.l.b16 %v1902
      %v2019 = vunpack.c.l.b16 %v1905
      %v2020 = vunpack.c.l.b16 %v1908
      %v2021 = vpack.c.b16 %v2005, %v2005
      %v2022 = vpack.c.b16 %v2006, %v2006
      %v2023 = vpack.c.b16 %v2007, %v2007
      %v2024 = vpack.c.b16 %v2008, %v2008
      %v2025 = vpack.c.b16 %v2009, %v2009
      %v2026 = vpack.c.b16 %v2010, %v2010
      %v2027 = vpack.c.b16 %v2011, %v2011
      %v2028 = vpack.c.b16 %v2012, %v2012
      %v2029 = vpack.c.b16 %v2013, %v2013
      %v2030 = vpack.c.b16 %v2014, %v2014
      %v2031 = vpack.c.b16 %v2015, %v2015
      %v2032 = vpack.c.b16 %v2016, %v2016
      %v2033 = vpack.c.b16 %v2017, %v2017
      %v2034 = vpack.c.b16 %v2018, %v2018
      %v2035 = vpack.c.b16 %v2019, %v2019
      %v2036 = vpack.c.b16 %v2020, %v2020
      %v2038 = vshrl.u32 %v1973, 16
      %v2040 = vshll.u32 %v1973, 16
      %v2042 = vrot.slane %v2040, 1
      %v2043 = vor.u32 %v2038, %v2042
      %v2045 = vshll.u32 %v2021, 16
      %v2047 = vrot.slane %v2045, 1
      %v2048 = vsel %vm1490, %v2043, %v2047
      %v2050 = vshrl.u32 %v1974, 16
      %v2052 = vshll.u32 %v1974, 16
      %v2054 = vrot.slane %v2052, 1
      %v2055 = vor.u32 %v2050, %v2054
      %v2057 = vshll.u32 %v2022, 16
      %v2059 = vrot.slane %v2057, 1
      %v2060 = vsel %vm1490, %v2055, %v2059
      %v2062 = vshrl.u32 %v1975, 16
      %v2064 = vshll.u32 %v1975, 16
      %v2066 = vrot.slane %v2064, 1
      %v2067 = vor.u32 %v2062, %v2066
      %v2069 = vshll.u32 %v2023, 16
      %v2071 = vrot.slane %v2069, 1
      %v2072 = vsel %vm1490, %v2067, %v2071
      %v2074 = vshrl.u32 %v1976, 16
      %v2076 = vshll.u32 %v1976, 16
      %v2078 = vrot.slane %v2076, 1
      %v2079 = vor.u32 %v2074, %v2078
      %v2081 = vshll.u32 %v2024, 16
      %v2083 = vrot.slane %v2081, 1
      %v2084 = vsel %vm1490, %v2079, %v2083
      %v2086 = vshrl.u32 %v1977, 16
      %v2088 = vshll.u32 %v1977, 16
      %v2090 = vrot.slane %v2088, 1
      %v2091 = vor.u32 %v2086, %v2090
      %v2093 = vshll.u32 %v2025, 16
      %v2095 = vrot.slane %v2093, 1
      %v2096 = vsel %vm1490, %v2091, %v2095
      %v2098 = vshrl.u32 %v1978, 16
      %v2100 = vshll.u32 %v1978, 16
      %v2102 = vrot.slane %v2100, 1
      %v2103 = vor.u32 %v2098, %v2102
      %v2105 = vshll.u32 %v2026, 16
      %v2107 = vrot.slane %v2105, 1
      %v2108 = vsel %vm1490, %v2103, %v2107
      %v2110 = vshrl.u32 %v1979, 16
      %v2112 = vshll.u32 %v1979, 16
      %v2114 = vrot.slane %v2112, 1
      %v2115 = vor.u32 %v2110, %v2114
      %v2117 = vshll.u32 %v2027, 16
      %v2119 = vrot.slane %v2117, 1
      %v2120 = vsel %vm1490, %v2115, %v2119
      %v2122 = vshrl.u32 %v1980, 16
      %v2124 = vshll.u32 %v1980, 16
      %v2126 = vrot.slane %v2124, 1
      %v2127 = vor.u32 %v2122, %v2126
      %v2129 = vshll.u32 %v2028, 16
      %v2131 = vrot.slane %v2129, 1
      %v2132 = vsel %vm1490, %v2127, %v2131
      %v2134 = vshrl.u32 %v1981, 16
      %v2136 = vshll.u32 %v1981, 16
      %v2138 = vrot.slane %v2136, 1
      %v2139 = vor.u32 %v2134, %v2138
      %v2141 = vshll.u32 %v2029, 16
      %v2143 = vrot.slane %v2141, 1
      %v2144 = vsel %vm1490, %v2139, %v2143
      %v2146 = vshrl.u32 %v1982, 16
      %v2148 = vshll.u32 %v1982, 16
      %v2150 = vrot.slane %v2148, 1
      %v2151 = vor.u32 %v2146, %v2150
      %v2153 = vshll.u32 %v2030, 16
      %v2155 = vrot.slane %v2153, 1
      %v2156 = vsel %vm1490, %v2151, %v2155
      %v2158 = vshrl.u32 %v1983, 16
      %v2160 = vshll.u32 %v1983, 16
      %v2162 = vrot.slane %v2160, 1
      %v2163 = vor.u32 %v2158, %v2162
      %v2165 = vshll.u32 %v2031, 16
      %v2167 = vrot.slane %v2165, 1
      %v2168 = vsel %vm1490, %v2163, %v2167
      %v2170 = vshrl.u32 %v1984, 16
      %v2172 = vshll.u32 %v1984, 16
      %v2174 = vrot.slane %v2172, 1
      %v2175 = vor.u32 %v2170, %v2174
      %v2177 = vshll.u32 %v2032, 16
      %v2179 = vrot.slane %v2177, 1
      %v2180 = vsel %vm1490, %v2175, %v2179
      %v2182 = vshrl.u32 %v1985, 16
      %v2184 = vshll.u32 %v1985, 16
      %v2186 = vrot.slane %v2184, 1
      %v2187 = vor.u32 %v2182, %v2186
      %v2189 = vshll.u32 %v2033, 16
      %v2191 = vrot.slane %v2189, 1
      %v2192 = vsel %vm1490, %v2187, %v2191
      %v2194 = vshrl.u32 %v1986, 16
      %v2196 = vshll.u32 %v1986, 16
      %v2198 = vrot.slane %v2196, 1
      %v2199 = vor.u32 %v2194, %v2198
      %v2201 = vshll.u32 %v2034, 16
      %v2203 = vrot.slane %v2201, 1
      %v2204 = vsel %vm1490, %v2199, %v2203
      %v2206 = vshrl.u32 %v1987, 16
      %v2208 = vshll.u32 %v1987, 16
      %v2210 = vrot.slane %v2208, 1
      %v2211 = vor.u32 %v2206, %v2210
      %v2213 = vshll.u32 %v2035, 16
      %v2215 = vrot.slane %v2213, 1
      %v2216 = vsel %vm1490, %v2211, %v2215
      %v2218 = vshrl.u32 %v1988, 16
      %v2220 = vshll.u32 %v1988, 16
      %v2222 = vrot.slane %v2220, 1
      %v2223 = vor.u32 %v2218, %v2222
      %v2225 = vshll.u32 %v2036, 16
      %v2227 = vrot.slane %v2225, 1
      %v2228 = vsel %vm1490, %v2223, %v2227
      %2229 = vrot.lane.b32.xlu0 %v2048, 2
      %v2230 = vpop.permute.xlu0 %2229
      %2231 = vrot.lane.b32.xlu0 %v2060, 2
      %v2232 = vpop.permute.xlu0 %2231
      %2233 = vrot.lane.b32.xlu0 %v2072, 2
      %v2234 = vpop.permute.xlu0 %2233
      %2235 = vrot.lane.b32.xlu0 %v2084, 2
      %v2236 = vpop.permute.xlu0 %2235
      %2237 = vrot.lane.b32.xlu0 %v2096, 2
      %v2238 = vpop.permute.xlu0 %2237
      %2239 = vrot.lane.b32.xlu0 %v2108, 2
      %v2240 = vpop.permute.xlu0 %2239
      %2241 = vrot.lane.b32.xlu0 %v2120, 2
      %v2242 = vpop.permute.xlu0 %2241
      %2243 = vrot.lane.b32.xlu0 %v2132, 2
      %v2244 = vpop.permute.xlu0 %2243
      %2245 = vrot.lane.b32.xlu0 %v2144, 2
      %v2246 = vpop.permute.xlu0 %2245
      %2247 = vrot.lane.b32.xlu0 %v2156, 2
      %v2248 = vpop.permute.xlu0 %2247
      %2249 = vrot.lane.b32.xlu0 %v2168, 2
      %v2250 = vpop.permute.xlu0 %2249
      %2251 = vrot.lane.b32.xlu0 %v2180, 2
      %v2252 = vpop.permute.xlu0 %2251
      %2253 = vrot.lane.b32.xlu0 %v2192, 2
      %v2254 = vpop.permute.xlu0 %2253
      %2255 = vrot.lane.b32.xlu0 %v2204, 2
      %v2256 = vpop.permute.xlu0 %2255
      %2257 = vrot.lane.b32.xlu0 %v2216, 2
      %v2258 = vpop.permute.xlu0 %2257
      %2259 = vrot.lane.b32.xlu0 %v2228, 2
      %v2260 = vpop.permute.xlu0 %2259
      %v2261 = vrot.slane %v1973, 1
      %v2262 = vrot.slane %v2021, 1
      %v2263 = vsel %vm1715, %v2261, %v2262
      %v2264 = vrot.slane %v1974, 1
      %v2265 = vrot.slane %v2022, 1
      %v2266 = vsel %vm1715, %v2264, %v2265
      %v2267 = vrot.slane %v1975, 1
      %v2268 = vrot.slane %v2023, 1
      %v2269 = vsel %vm1715, %v2267, %v2268
      %v2270 = vrot.slane %v1976, 1
      %v2271 = vrot.slane %v2024, 1
      %v2272 = vsel %vm1715, %v2270, %v2271
      %v2273 = vrot.slane %v1977, 1
      %v2274 = vrot.slane %v2025, 1
      %v2275 = vsel %vm1715, %v2273, %v2274
      %v2276 = vrot.slane %v1978, 1
      %v2277 = vrot.slane %v2026, 1
      %v2278 = vsel %vm1715, %v2276, %v2277
      %v2279 = vrot.slane %v1979, 1
      %v2280 = vrot.slane %v2027, 1
      %v2281 = vsel %vm1715, %v2279, %v2280
      %v2282 = vrot.slane %v1980, 1
      %v2283 = vrot.slane %v2028, 1
      %v2284 = vsel %vm1715, %v2282, %v2283
      %v2285 = vrot.slane %v1981, 1
      %v2286 = vrot.slane %v2029, 1
      %v2287 = vsel %vm1715, %v2285, %v2286
      %v2288 = vrot.slane %v1982, 1
      %v2289 = vrot.slane %v2030, 1
      %v2290 = vsel %vm1715, %v2288, %v2289
      %v2291 = vrot.slane %v1983, 1
      %v2292 = vrot.slane %v2031, 1
      %v2293 = vsel %vm1715, %v2291, %v2292
      %v2294 = vrot.slane %v1984, 1
      %v2295 = vrot.slane %v2032, 1
      %v2296 = vsel %vm1715, %v2294, %v2295
      %v2297 = vrot.slane %v1985, 1
      %v2298 = vrot.slane %v2033, 1
      %v2299 = vsel %vm1715, %v2297, %v2298
      %v2300 = vrot.slane %v1986, 1
      %v2301 = vrot.slane %v2034, 1
      %v2302 = vsel %vm1715, %v2300, %v2301
      %v2303 = vrot.slane %v1987, 1
      %v2304 = vrot.slane %v2035, 1
      %v2305 = vsel %vm1715, %v2303, %v2304
      %v2306 = vrot.slane %v1988, 1
      %v2307 = vrot.slane %v2036, 1
      %v2308 = vsel %vm1715, %v2306, %v2307
      %2309 = vrot.lane.b32.xlu0 %v2263, 4
      %v2310 = vpop.permute.xlu0 %2309
      %2311 = vrot.lane.b32.xlu0 %v2266, 4
      %v2312 = vpop.permute.xlu0 %2311
      %2313 = vrot.lane.b32.xlu0 %v2269, 4
      %v2314 = vpop.permute.xlu0 %2313
      %2315 = vrot.lane.b32.xlu0 %v2272, 4
      %v2316 = vpop.permute.xlu0 %2315
      %2317 = vrot.lane.b32.xlu0 %v2275, 4
      %v2318 = vpop.permute.xlu0 %2317
      %2319 = vrot.lane.b32.xlu0 %v2278, 4
      %v2320 = vpop.permute.xlu0 %2319
      %2321 = vrot.lane.b32.xlu0 %v2281, 4
      %v2322 = vpop.permute.xlu0 %2321
      %2323 = vrot.lane.b32.xlu0 %v2284, 4
      %v2324 = vpop.permute.xlu0 %2323
      %2325 = vrot.lane.b32.xlu0 %v2287, 4
      %v2326 = vpop.permute.xlu0 %2325
      %2327 = vrot.lane.b32.xlu0 %v2290, 4
      %v2328 = vpop.permute.xlu0 %2327
      %2329 = vrot.lane.b32.xlu0 %v2293, 4
      %v2330 = vpop.permute.xlu0 %2329
      %2331 = vrot.lane.b32.xlu0 %v2296, 4
      %v2332 = vpop.permute.xlu0 %2331
      %2333 = vrot.lane.b32.xlu0 %v2299, 4
      %v2334 = vpop.permute.xlu0 %2333
      %2335 = vrot.lane.b32.xlu0 %v2302, 4
      %v2336 = vpop.permute.xlu0 %2335
      %2337 = vrot.lane.b32.xlu0 %v2305, 4
      %v2338 = vpop.permute.xlu0 %2337
      %2339 = vrot.lane.b32.xlu0 %v2308, 4
      %v2340 = vpop.permute.xlu0 %2339
      %v2342 = vsel %vm1796, %v1973, %v2230
      %v2344 = vsel %vm1796, %v1974, %v2232
      %v2346 = vsel %vm1796, %v1975, %v2234
      %v2348 = vsel %vm1796, %v1976, %v2236
      %v2350 = vsel %vm1796, %v1977, %v2238
      %v2352 = vsel %vm1796, %v1978, %v2240
      %v2354 = vsel %vm1796, %v1979, %v2242
      %v2356 = vsel %vm1796, %v1980, %v2244
      %v2358 = vsel %vm1796, %v1981, %v2246
      %v2360 = vsel %vm1796, %v1982, %v2248
      %v2362 = vsel %vm1796, %v1983, %v2250
      %v2364 = vsel %vm1796, %v1984, %v2252
      %v2366 = vsel %vm1796, %v1985, %v2254
      %v2368 = vsel %vm1796, %v1986, %v2256
      %v2370 = vsel %vm1796, %v1987, %v2258
      %v2372 = vsel %vm1796, %v1988, %v2260
      %v2374 = vsel %vm468, %v2342, %v2310
      %v2376 = vsel %vm468, %v2344, %v2312
      %v2378 = vsel %vm468, %v2346, %v2314
      %v2380 = vsel %vm468, %v2348, %v2316
      %v2382 = vsel %vm468, %v2350, %v2318
      %v2384 = vsel %vm468, %v2352, %v2320
      %v2386 = vsel %vm468, %v2354, %v2322
      %v2388 = vsel %vm468, %v2356, %v2324
      %v2390 = vsel %vm468, %v2358, %v2326
      %v2392 = vsel %vm468, %v2360, %v2328
      %v2394 = vsel %vm468, %v2362, %v2330
      %v2396 = vsel %vm468, %v2364, %v2332
      %v2398 = vsel %vm468, %v2366, %v2334
      %v2400 = vsel %vm468, %v2368, %v2336
      %v2402 = vsel %vm468, %v2370, %v2338
      %v2404 = vsel %vm468, %v2372, %v2340
      %vm2405 = vcmask 48128
      %v2406 = vsel %vm2405, %v2374, 0
      %v2408 = vsel %vm2405, %v2376, 0
      %v2410 = vsel %vm2405, %v2378, 0
      %v2412 = vsel %vm2405, %v2380, 0
      %v2414 = vsel %vm2405, %v2382, 0
      %v2416 = vsel %vm2405, %v2384, 0
      %v2418 = vsel %vm2405, %v2386, 0
      %v2420 = vsel %vm2405, %v2388, 0
      %v2422 = vsel %vm2405, %v2390, 0
      %v2424 = vsel %vm2405, %v2392, 0
      %v2426 = vsel %vm2405, %v2394, 0
      %v2428 = vsel %vm2405, %v2396, 0
      %v2430 = vsel %vm2405, %v2398, 0
      %v2432 = vsel %vm2405, %v2400, 0
      %v2434 = vsel %vm2405, %v2402, 0
      %v2436 = vsel %vm2405, %v2404, 0
      %vm2438 = vcmask 1042432
      %v2440 = vsel %vm2438, %v1312, 0
      %2442 = vmatprep.subr.bf16.mxu0 0
      %2443 = vmatpush1.bf16.msra.mxu0 %v2440
      %2444 = vmatprep.subr.bf16.mxu0 0
      %2445 = vmatpush1.bf16.msra.mxu0 0
      %2446 = vmatprep.subr.bf16.mxu0 0
      %2447 = vmatpush1.bf16.msra.mxu0 0
      %2448 = vmatprep.subr.bf16.mxu0 0
      %2449 = vmatpush1.bf16.msra.mxu0 0
      %2450 = vmatprep.subr.bf16.mxu0 0
      %2451 = vmatpush1.bf16.msra.mxu0 0
      %2452 = vmatprep.subr.bf16.mxu0 0
      %2453 = vmatpush1.bf16.msra.mxu0 0
      %2454 = vmatprep.subr.bf16.mxu0 0
      %2455 = vmatpush1.bf16.msra.mxu0 0
      %2456 = vmatprep.subr.bf16.mxu0 0
      %2457 = vmatpush1.bf16.msra.mxu0 0
      %2458 = vmatprep.subr.bf16.mxu0 0
      %2459 = vmatpush1.bf16.msra.mxu0 0
      %2460 = vmatprep.subr.bf16.mxu0 0
      %2461 = vmatpush1.bf16.msra.mxu0 0
      %2462 = vmatprep.subr.bf16.mxu0 0
      %2463 = vmatpush1.bf16.msra.mxu0 0
      %2464 = vmatprep.subr.bf16.mxu0 0
      %2465 = vmatpush1.bf16.msra.mxu0 0
      %2466 = vmatprep.subr.bf16.mxu0 0
      %2467 = vmatpush1.bf16.msra.mxu0 0
      %2468 = vmatprep.subr.bf16.mxu0 0
      %2469 = vmatpush1.bf16.msra.mxu0 0
      %2470 = vmatprep.subr.bf16.mxu0 0
      %2471 = vmatpush1.bf16.msra.mxu0 0
      %2472 = vmatprep.subr.bf16.mxu0 0
      %2473 = vmatpush1.bf16.msra.mxu0 0
      %2474 = vmatprep.mubr.bf16.mxu0 0
      %2475 = vmatmul.mubr.bf16.gmra.mrb[0].mxu0 %v2406
      %v2476 = vpop.f32.mrb[0].mxu0
      %v2477 = vadd.f32 0.0, %v2476
      %v2478 = vpop.f32.mrb[0].mxu0
      %v2479 = vpop.f32.mrb[0].mxu0
      %v2480 = vadd.f32 0.0, %v2479
      %v2481 = vpop.f32.mrb[0].mxu0
      %2482 = vmatprep.mubr.bf16.mxu0 0
      %2483 = vmatmul.mubr.bf16.gmra.mrb[0].mxu0 %v2408
      %v2484 = vpop.f32.mrb[0].mxu0
      %v2485 = vadd.f32 0.0, %v2484
      %v2486 = vpop.f32.mrb[0].mxu0
      %v2487 = vpop.f32.mrb[0].mxu0
      %v2488 = vadd.f32 0.0, %v2487
      %v2489 = vpop.f32.mrb[0].mxu0
      %2490 = vmatprep.mubr.bf16.mxu0 0
      %2491 = vmatmul.mubr.bf16.gmra.mrb[0].mxu0 %v2410
      %v2492 = vpop.f32.mrb[0].mxu0
      %v2493 = vadd.f32 0.0, %v2492
      %v2494 = vpop.f32.mrb[0].mxu0
      %v2495 = vpop.f32.mrb[0].mxu0
      %v2496 = vadd.f32 0.0, %v2495
      %v2497 = vpop.f32.mrb[0].mxu0
      %2498 = vmatprep.mubr.bf16.mxu0 0
      %2499 = vmatmul.mubr.bf16.gmra.mrb[0].mxu0 %v2412
      %v2500 = vpop.f32.mrb[0].mxu0
      %v2501 = vadd.f32 0.0, %v2500
      %v2502 = vpop.f32.mrb[0].mxu0
      %v2503 = vpop.f32.mrb[0].mxu0
      %v2504 = vadd.f32 0.0, %v2503
      %v2505 = vpop.f32.mrb[0].mxu0
      %2506 = vmatprep.mubr.bf16.mxu0 0
      %2507 = vmatmul.mubr.bf16.gmra.mrb[0].mxu0 %v2414
      %v2508 = vpop.f32.mrb[0].mxu0
      %v2509 = vadd.f32 0.0, %v2508
      %v2510 = vpop.f32.mrb[0].mxu0
      %v2511 = vpop.f32.mrb[0].mxu0
      %v2512 = vadd.f32 0.0, %v2511
      %v2513 = vpop.f32.mrb[0].mxu0
      %2514 = vmatprep.mubr.bf16.mxu0 0
      %2515 = vmatmul.mubr.bf16.gmra.mrb[0].mxu0 %v2416
      %v2516 = vpop.f32.mrb[0].mxu0
      %v2517 = vadd.f32 0.0, %v2516
      %v2518 = vpop.f32.mrb[0].mxu0
      %v2519 = vpop.f32.mrb[0].mxu0
      %v2520 = vadd.f32 0.0, %v2519
      %v2521 = vpop.f32.mrb[0].mxu0
      %2522 = vmatprep.mubr.bf16.mxu0 0
      %2523 = vmatmul.mubr.bf16.gmra.mrb[0].mxu0 %v2418
      %v2524 = vpop.f32.mrb[0].mxu0
      %v2525 = vadd.f32 0.0, %v2524
      %v2526 = vpop.f32.mrb[0].mxu0
      %v2527 = vpop.f32.mrb[0].mxu0
      %v2528 = vadd.f32 0.0, %v2527
      %v2529 = vpop.f32.mrb[0].mxu0
      %2530 = vmatprep.mubr.bf16.mxu0 0
      %2531 = vmatmul.mubr.bf16.gmra.mrb[0].mxu0 %v2420
      %v2532 = vpop.f32.mrb[0].mxu0
      %v2533 = vadd.f32 0.0, %v2532
      %v2534 = vpop.f32.mrb[0].mxu0
      %v2535 = vpop.f32.mrb[0].mxu0
      %v2536 = vadd.f32 0.0, %v2535
      %v2537 = vpop.f32.mrb[0].mxu0
      %2538 = vmatprep.mubr.bf16.mxu0 0
      %2539 = vmatmul.mubr.bf16.gmra.mrb[0].mxu0 %v2422
      %v2540 = vpop.f32.mrb[0].mxu0
      %v2541 = vadd.f32 0.0, %v2540
      %v2542 = vpop.f32.mrb[0].mxu0
      %v2543 = vpop.f32.mrb[0].mxu0
      %v2544 = vadd.f32 0.0, %v2543
      %v2545 = vpop.f32.mrb[0].mxu0
      %2546 = vmatprep.mubr.bf16.mxu0 0
      %2547 = vmatmul.mubr.bf16.gmra.mrb[0].mxu0 %v2424
      %v2548 = vpop.f32.mrb[0].mxu0
      %v2549 = vadd.f32 0.0, %v2548
      %v2550 = vpop.f32.mrb[0].mxu0
      %v2551 = vpop.f32.mrb[0].mxu0
      %v2552 = vadd.f32 0.0, %v2551
      %v2553 = vpop.f32.mrb[0].mxu0
      %2554 = vmatprep.mubr.bf16.mxu0 0
      %2555 = vmatmul.mubr.bf16.gmra.mrb[0].mxu0 %v2426
      %v2556 = vpop.f32.mrb[0].mxu0
      %v2557 = vadd.f32 0.0, %v2556
      %v2558 = vpop.f32.mrb[0].mxu0
      %v2559 = vpop.f32.mrb[0].mxu0
      %v2560 = vadd.f32 0.0, %v2559
      %v2561 = vpop.f32.mrb[0].mxu0
      %2562 = vmatprep.mubr.bf16.mxu0 0
      %2563 = vmatmul.mubr.bf16.gmra.mrb[0].mxu0 %v2428
      %v2564 = vpop.f32.mrb[0].mxu0
      %v2565 = vadd.f32 0.0, %v2564
      %v2566 = vpop.f32.mrb[0].mxu0
      %v2567 = vpop.f32.mrb[0].mxu0
      %v2568 = vadd.f32 0.0, %v2567
      %v2569 = vpop.f32.mrb[0].mxu0
      %2570 = vmatprep.mubr.bf16.mxu0 0
      %2571 = vmatmul.mubr.bf16.gmra.mrb[0].mxu0 %v2430
      %v2572 = vpop.f32.mrb[0].mxu0
      %v2573 = vadd.f32 0.0, %v2572
      %v2574 = vpop.f32.mrb[0].mxu0
      %v2575 = vpop.f32.mrb[0].mxu0
      %v2576 = vadd.f32 0.0, %v2575
      %v2577 = vpop.f32.mrb[0].mxu0
      %2578 = vmatprep.mubr.bf16.mxu0 0
      %2579 = vmatmul.mubr.bf16.gmra.mrb[0].mxu0 %v2432
      %v2580 = vpop.f32.mrb[0].mxu0
      %v2581 = vadd.f32 0.0, %v2580
      %v2582 = vpop.f32.mrb[0].mxu0
      %v2583 = vpop.f32.mrb[0].mxu0
      %v2584 = vadd.f32 0.0, %v2583
      %v2585 = vpop.f32.mrb[0].mxu0
      %2586 = vmatprep.mubr.bf16.mxu0 0
      %2587 = vmatmul.mubr.bf16.gmra.mrb[0].mxu0 %v2434
      %v2588 = vpop.f32.mrb[0].mxu0
      %v2589 = vadd.f32 0.0, %v2588
      %v2590 = vpop.f32.mrb[0].mxu0
      %v2591 = vpop.f32.mrb[0].mxu0
      %v2592 = vadd.f32 0.0, %v2591
      %v2593 = vpop.f32.mrb[0].mxu0
      %2594 = vmatprep.mubr.bf16.mxu0 0
      %2595 = vmatmul.mubr.bf16.gmra.mrb[0].mxu0 %v2436
      %v2596 = vpop.f32.mrb[0].mxu0
      %v2597 = vadd.f32 0.0, %v2596
      %v2598 = vpop.f32.mrb[0].mxu0
      %v2599 = vpop.f32.mrb[0].mxu0
      %v2600 = vadd.f32 0.0, %v2599
      %v2601 = vpop.f32.mrb[0].mxu0
      %2602 = vdwg.mxu0
      %v2603 = vsel %vm2405, %v1830, 0
      %v2605 = vsel %vm2405, %v1832, 0
      %v2607 = vsel %vm2405, %v1834, 0
      %v2609 = vsel %vm2405, %v1836, 0
      %v2611 = vsel %vm2405, %v1838, 0
      %v2613 = vsel %vm2405, %v1840, 0
      %v2615 = vsel %vm2405, %v1842, 0
      %v2617 = vsel %vm2405, %v1844, 0
      %v2619 = vsel %vm2405, %v1846, 0
      %v2621 = vsel %vm2405, %v1848, 0
      %v2623 = vsel %vm2405, %v1850, 0
      %v2625 = vsel %vm2405, %v1852, 0
      %v2627 = vsel %vm2405, %v1854, 0
      %v2629 = vsel %vm2405, %v1856, 0
      %v2631 = vsel %vm2405, %v1858, 0
      %v2633 = vsel %vm2405, %v1860, 0
      %v2636 = vsel %vm2438, %v1311, 0
      %2638 = vmatprep.subr.bf16.mxu0 0
      %2639 = vmatpush1.bf16.msra.mxu0 %v2636
      %2640 = vmatprep.subr.bf16.mxu0 0
      %2641 = vmatpush1.bf16.msra.mxu0 0
      %2642 = vmatprep.subr.bf16.mxu0 0
      %2643 = vmatpush1.bf16.msra.mxu0 0
      %2644 = vmatprep.subr.bf16.mxu0 0
      %2645 = vmatpush1.bf16.msra.mxu0 0
      %2646 = vmatprep.subr.bf16.mxu0 0
      %2647 = vmatpush1.bf16.msra.mxu0 0
      %2648 = vmatprep.subr.bf16.mxu0 0
      %2649 = vmatpush1.bf16.msra.mxu0 0
      %2650 = vmatprep.subr.bf16.mxu0 0
      %2651 = vmatpush1.bf16.msra.mxu0 0
      %2652 = vmatprep.subr.bf16.mxu0 0
      %2653 = vmatpush1.bf16.msra.mxu0 0
      %2654 = vmatprep.subr.bf16.mxu0 0
      %2655 = vmatpush1.bf16.msra.mxu0 0
      %2656 = vmatprep.subr.bf16.mxu0 0
      %2657 = vmatpush1.bf16.msra.mxu0 0
      %2658 = vmatprep.subr.bf16.mxu0 0
      %2659 = vmatpush1.bf16.msra.mxu0 0
      %2660 = vmatprep.subr.bf16.mxu0 0
      %2661 = vmatpush1.bf16.msra.mxu0 0
      %2662 = vmatprep.subr.bf16.mxu0 0
      %2663 = vmatpush1.bf16.msra.mxu0 0
      %2664 = vmatprep.subr.bf16.mxu0 0
      %2665 = vmatpush1.bf16.msra.mxu0 0
      %2666 = vmatprep.subr.bf16.mxu0 0
      %2667 = vmatpush1.bf16.msra.mxu0 0
      %2668 = vmatprep.subr.bf16.mxu0 0
      %2669 = vmatpush1.bf16.msra.mxu0 0
      %2670 = vmatprep.mubr.bf16.mxu0 0
      %2671 = vmatmul.mubr.bf16.gmra.mrb[0].mxu0 %v2603
      %v2672 = vpop.f32.mrb[0].mxu0
      %v2673 = vadd.f32 %v2477, %v2672
      %v2674 = vpop.f32.mrb[0].mxu0
      %v2675 = vpop.f32.mrb[0].mxu0
      %v2676 = vadd.f32 %v2480, %v2675
      %v2677 = vpop.f32.mrb[0].mxu0
      %2678 = vmatprep.mubr.bf16.mxu0 0
      %2679 = vmatmul.mubr.bf16.gmra.mrb[0].mxu0 %v2605
      %v2680 = vpop.f32.mrb[0].mxu0
      %v2681 = vadd.f32 %v2485, %v2680
      %v2682 = vpop.f32.mrb[0].mxu0
      %v2683 = vpop.f32.mrb[0].mxu0
      %v2684 = vadd.f32 %v2488, %v2683
      %v2685 = vpop.f32.mrb[0].mxu0
      %2686 = vmatprep.mubr.bf16.mxu0 0
      %2687 = vmatmul.mubr.bf16.gmra.mrb[0].mxu0 %v2607
      %v2688 = vpop.f32.mrb[0].mxu0
      %v2689 = vadd.f32 %v2493, %v2688
      %v2690 = vpop.f32.mrb[0].mxu0
      %v2691 = vpop.f32.mrb[0].mxu0
      %v2692 = vadd.f32 %v2496, %v2691
      %v2693 = vpop.f32.mrb[0].mxu0
      %2694 = vmatprep.mubr.bf16.mxu0 0
      %2695 = vmatmul.mubr.bf16.gmra.mrb[0].mxu0 %v2609
      %v2696 = vpop.f32.mrb[0].mxu0
      %v2697 = vadd.f32 %v2501, %v2696
      %v2698 = vpop.f32.mrb[0].mxu0
      %v2699 = vpop.f32.mrb[0].mxu0
      %v2700 = vadd.f32 %v2504, %v2699
      %v2701 = vpop.f32.mrb[0].mxu0
      %2702 = vmatprep.mubr.bf16.mxu0 0
      %2703 = vmatmul.mubr.bf16.gmra.mrb[0].mxu0 %v2611
      %v2704 = vpop.f32.mrb[0].mxu0
      %v2705 = vadd.f32 %v2509, %v2704
      %v2706 = vpop.f32.mrb[0].mxu0
      %v2707 = vpop.f32.mrb[0].mxu0
      %v2708 = vadd.f32 %v2512, %v2707
      %v2709 = vpop.f32.mrb[0].mxu0
      %2710 = vmatprep.mubr.bf16.mxu0 0
      %2711 = vmatmul.mubr.bf16.gmra.mrb[0].mxu0 %v2613
      %v2712 = vpop.f32.mrb[0].mxu0
      %v2713 = vadd.f32 %v2517, %v2712
      %v2714 = vpop.f32.mrb[0].mxu0
      %v2715 = vpop.f32.mrb[0].mxu0
      %v2716 = vadd.f32 %v2520, %v2715
      %v2717 = vpop.f32.mrb[0].mxu0
      %2718 = vmatprep.mubr.bf16.mxu0 0
      %2719 = vmatmul.mubr.bf16.gmra.mrb[0].mxu0 %v2615
      %v2720 = vpop.f32.mrb[0].mxu0
      %v2721 = vadd.f32 %v2525, %v2720
      %v2722 = vpop.f32.mrb[0].mxu0
      %v2723 = vpop.f32.mrb[0].mxu0
      %v2724 = vadd.f32 %v2528, %v2723
      %v2725 = vpop.f32.mrb[0].mxu0
      %2726 = vmatprep.mubr.bf16.mxu0 0
      %2727 = vmatmul.mubr.bf16.gmra.mrb[0].mxu0 %v2617
      %v2728 = vpop.f32.mrb[0].mxu0
      %v2729 = vadd.f32 %v2533, %v2728
      %v2730 = vpop.f32.mrb[0].mxu0
      %v2731 = vpop.f32.mrb[0].mxu0
      %v2732 = vadd.f32 %v2536, %v2731
      %v2733 = vpop.f32.mrb[0].mxu0
      %2734 = vmatprep.mubr.bf16.mxu0 0
      %2735 = vmatmul.mubr.bf16.gmra.mrb[0].mxu0 %v2619
      %v2736 = vpop.f32.mrb[0].mxu0
      %v2737 = vadd.f32 %v2541, %v2736
      %v2738 = vpop.f32.mrb[0].mxu0
      %v2739 = vpop.f32.mrb[0].mxu0
      %v2740 = vadd.f32 %v2544, %v2739
      %v2741 = vpop.f32.mrb[0].mxu0
      %2742 = vmatprep.mubr.bf16.mxu0 0
      %2743 = vmatmul.mubr.bf16.gmra.mrb[0].mxu0 %v2621
      %v2744 = vpop.f32.mrb[0].mxu0
      %v2745 = vadd.f32 %v2549, %v2744
      %v2746 = vpop.f32.mrb[0].mxu0
      %v2747 = vpop.f32.mrb[0].mxu0
      %v2748 = vadd.f32 %v2552, %v2747
      %v2749 = vpop.f32.mrb[0].mxu0
      %2750 = vmatprep.mubr.bf16.mxu0 0
      %2751 = vmatmul.mubr.bf16.gmra.mrb[0].mxu0 %v2623
      %v2752 = vpop.f32.mrb[0].mxu0
      %v2753 = vadd.f32 %v2557, %v2752
      %v2754 = vpop.f32.mrb[0].mxu0
      %v2755 = vpop.f32.mrb[0].mxu0
      %v2756 = vadd.f32 %v2560, %v2755
      %v2757 = vpop.f32.mrb[0].mxu0
      %2758 = vmatprep.mubr.bf16.mxu0 0
      %2759 = vmatmul.mubr.bf16.gmra.mrb[0].mxu0 %v2625
      %v2760 = vpop.f32.mrb[0].mxu0
      %v2761 = vadd.f32 %v2565, %v2760
      %v2762 = vpop.f32.mrb[0].mxu0
      %v2763 = vpop.f32.mrb[0].mxu0
      %v2764 = vadd.f32 %v2568, %v2763
      %v2765 = vpop.f32.mrb[0].mxu0
      %2766 = vmatprep.mubr.bf16.mxu0 0
      %2767 = vmatmul.mubr.bf16.gmra.mrb[0].mxu0 %v2627
      %v2768 = vpop.f32.mrb[0].mxu0
      %v2769 = vadd.f32 %v2573, %v2768
      %v2770 = vpop.f32.mrb[0].mxu0
      %v2771 = vpop.f32.mrb[0].mxu0
      %v2772 = vadd.f32 %v2576, %v2771
      %v2773 = vpop.f32.mrb[0].mxu0
      %2774 = vmatprep.mubr.bf16.mxu0 0
      %2775 = vmatmul.mubr.bf16.gmra.mrb[0].mxu0 %v2629
      %v2776 = vpop.f32.mrb[0].mxu0
      %v2777 = vadd.f32 %v2581, %v2776
      %v2778 = vpop.f32.mrb[0].mxu0
      %v2779 = vpop.f32.mrb[0].mxu0
      %v2780 = vadd.f32 %v2584, %v2779
      %v2781 = vpop.f32.mrb[0].mxu0
      %2782 = vmatprep.mubr.bf16.mxu0 0
      %2783 = vmatmul.mubr.bf16.gmra.mrb[0].mxu0 %v2631
      %v2784 = vpop.f32.mrb[0].mxu0
      %v2785 = vadd.f32 %v2589, %v2784
      %v2786 = vpop.f32.mrb[0].mxu0
      %v2787 = vpop.f32.mrb[0].mxu0
      %v2788 = vadd.f32 %v2592, %v2787
      %v2789 = vpop.f32.mrb[0].mxu0
      %2790 = vmatprep.mubr.bf16.mxu0 0
      %2791 = vmatmul.mubr.bf16.gmra.mrb[0].mxu0 %v2633
      %v2792 = vpop.f32.mrb[0].mxu0
      %v2793 = vadd.f32 %v2597, %v2792
      %v2794 = vpop.f32.mrb[0].mxu0
      %v2795 = vpop.f32.mrb[0].mxu0
      %v2796 = vadd.f32 %v2600, %v2795
      %v2797 = vpop.f32.mrb[0].mxu0
      %2798 = vdwg.mxu0
      %s2799 = scalar_lea.vmem [#allocation2], 24
      %v2800 = vld [vmem:[%s2799] sm:$0xf]
      %v2801 = vld [vmem:[%s2799 + $0x4] sm:$0xf]
      %v2802 = vld [vmem:[%s2799 + $0x8] sm:$0x1]
      %v2803 = vld [vmem:[%s2799 + $0xc] sm:$0xf]
      %v2804 = vld [vmem:[%s2799 + $0x10] sm:$0xf]
      %v2805 = vld [vmem:[%s2799 + $0x14] sm:$0x1]
      %v2806 = vld [vmem:[%s2799 + $0x18] sm:$0xf]
      %v2807 = vld [vmem:[%s2799 + $0x1c] sm:$0xf]
      %v2808 = vld [vmem:[%s2799 + $0x20] sm:$0x1]
      %v2809 = vld [vmem:[%s2799 + $0x24] sm:$0xf]
      %v2810 = vld [vmem:[%s2799 + $0x28] sm:$0xf]
      %v2811 = vld [vmem:[%s2799 + $0x2c] sm:$0x1]
      %v2812 = vld [vmem:[%s2799 + $0x30] sm:$0xf]
      %v2813 = vld [vmem:[%s2799 + $0x34] sm:$0xf]
      %v2814 = vld [vmem:[%s2799 + $0x38] sm:$0x1]
      %v2815 = vld [vmem:[%s2799 + $0x3c] sm:$0xf]
      %v2816 = vld [vmem:[%s2799 + $0x40] sm:$0xf]
      %v2817 = vld [vmem:[%s2799 + $0x44] sm:$0x1]
      %v2818 = vld [vmem:[%s2799 + $0x48] sm:$0xf]
      %v2819 = vld [vmem:[%s2799 + $0x4c] sm:$0xf]
      %v2820 = vld [vmem:[%s2799 + $0x50] sm:$0x1]
      %v2821 = vld [vmem:[%s2799 + $0x54] sm:$0xf]
      %v2822 = vld [vmem:[%s2799 + $0x58] sm:$0xf]
      %v2823 = vld [vmem:[%s2799 + $0x5c] sm:$0x1]
      %v2824 = vld [vmem:[%s2799 + $0x60] sm:$0xf]
      %v2825 = vld [vmem:[%s2799 + $0x64] sm:$0xf]
      %v2826 = vld [vmem:[%s2799 + $0x68] sm:$0x1]
      %v2827 = vld [vmem:[%s2799 + $0x6c] sm:$0xf]
      %v2828 = vld [vmem:[%s2799 + $0x70] sm:$0xf]
      %v2829 = vld [vmem:[%s2799 + $0x74] sm:$0x1]
      %v2830 = vld [vmem:[%s2799 + $0x78] sm:$0xf]
      %v2831 = vld [vmem:[%s2799 + $0x7c] sm:$0xf]
      %v2832 = vld [vmem:[%s2799 + $0x80] sm:$0x1]
      %v2833 = vld [vmem:[%s2799 + $0x84] sm:$0xf]
      %v2834 = vld [vmem:[%s2799 + $0x88] sm:$0xf]
      %v2835 = vld [vmem:[%s2799 + $0x8c] sm:$0x1]
      %v2836 = vld [vmem:[%s2799 + $0x90] sm:$0xf]
      %v2837 = vld [vmem:[%s2799 + $0x94] sm:$0xf]
      %v2838 = vld [vmem:[%s2799 + $0x98] sm:$0x1]
      %v2839 = vld [vmem:[%s2799 + $0x9c] sm:$0xf]
      %v2840 = vld [vmem:[%s2799 + $0xa0] sm:$0xf]
      %v2841 = vld [vmem:[%s2799 + $0xa4] sm:$0x1]
      %v2842 = vld [vmem:[%s2799 + $0xa8] sm:$0xf]
      %v2843 = vld [vmem:[%s2799 + $0xac] sm:$0xf]
      %v2844 = vld [vmem:[%s2799 + $0xb0] sm:$0x1]
      %v2845 = vld [vmem:[%s2799 + $0xb4] sm:$0xf]
      %v2846 = vld [vmem:[%s2799 + $0xb8] sm:$0xf]
      %v2847 = vld [vmem:[%s2799 + $0xbc] sm:$0x1]
      %v2880 = vunpack.c.l.b16 %v2800
      %v2881 = vunpack.c.l.b16 %v2801
      %v2882 = vunpack.c.l.b16 %v2803
      %v2883 = vunpack.c.l.b16 %v2804
      %v2884 = vunpack.c.l.b16 %v2806
      %v2885 = vunpack.c.l.b16 %v2807
      %v2886 = vunpack.c.l.b16 %v2809
      %v2887 = vunpack.c.l.b16 %v2810
      %v2888 = vunpack.c.l.b16 %v2812
      %v2889 = vunpack.c.l.b16 %v2813
      %v2890 = vunpack.c.l.b16 %v2815
      %v2891 = vunpack.c.l.b16 %v2816
      %v2892 = vunpack.c.l.b16 %v2818
      %v2893 = vunpack.c.l.b16 %v2819
      %v2894 = vunpack.c.l.b16 %v2821
      %v2895 = vunpack.c.l.b16 %v2822
      %v2896 = vunpack.c.l.b16 %v2824
      %v2897 = vunpack.c.l.b16 %v2825
      %v2898 = vunpack.c.l.b16 %v2827
      %v2899 = vunpack.c.l.b16 %v2828
      %v2900 = vunpack.c.l.b16 %v2830
      %v2901 = vunpack.c.l.b16 %v2831
      %v2902 = vunpack.c.l.b16 %v2833
      %v2903 = vunpack.c.l.b16 %v2834
      %v2904 = vunpack.c.l.b16 %v2836
      %v2905 = vunpack.c.l.b16 %v2837
      %v2906 = vunpack.c.l.b16 %v2839
      %v2907 = vunpack.c.l.b16 %v2840
      %v2908 = vunpack.c.l.b16 %v2842
      %v2909 = vunpack.c.l.b16 %v2843
      %v2910 = vunpack.c.l.b16 %v2845
      %v2911 = vunpack.c.l.b16 %v2846
      %v2912 = vpack.c.b16 %v2881, %v2880
      %v2913 = vpack.c.b16 %v2883, %v2882
      %v2914 = vpack.c.b16 %v2885, %v2884
      %v2915 = vpack.c.b16 %v2887, %v2886
      %v2916 = vpack.c.b16 %v2889, %v2888
      %v2917 = vpack.c.b16 %v2891, %v2890
      %v2918 = vpack.c.b16 %v2893, %v2892
      %v2919 = vpack.c.b16 %v2895, %v2894
      %v2920 = vpack.c.b16 %v2897, %v2896
      %v2921 = vpack.c.b16 %v2899, %v2898
      %v2922 = vpack.c.b16 %v2901, %v2900
      %v2923 = vpack.c.b16 %v2903, %v2902
      %v2924 = vpack.c.b16 %v2905, %v2904
      %v2925 = vpack.c.b16 %v2907, %v2906
      %v2926 = vpack.c.b16 %v2909, %v2908
      %v2927 = vpack.c.b16 %v2911, %v2910
      %v2944 = vunpack.c.l.b16 %v2802
      %v2945 = vunpack.c.l.b16 %v2805
      %v2946 = vunpack.c.l.b16 %v2808
      %v2947 = vunpack.c.l.b16 %v2811
      %v2948 = vunpack.c.l.b16 %v2814
      %v2949 = vunpack.c.l.b16 %v2817
      %v2950 = vunpack.c.l.b16 %v2820
      %v2951 = vunpack.c.l.b16 %v2823
      %v2952 = vunpack.c.l.b16 %v2826
      %v2953 = vunpack.c.l.b16 %v2829
      %v2954 = vunpack.c.l.b16 %v2832
      %v2955 = vunpack.c.l.b16 %v2835
      %v2956 = vunpack.c.l.b16 %v2838
      %v2957 = vunpack.c.l.b16 %v2841
      %v2958 = vunpack.c.l.b16 %v2844
      %v2959 = vunpack.c.l.b16 %v2847
      %v2960 = vpack.c.b16 %v2944, %v2944
      %v2961 = vpack.c.b16 %v2945, %v2945
      %v2962 = vpack.c.b16 %v2946, %v2946
      %v2963 = vpack.c.b16 %v2947, %v2947
      %v2964 = vpack.c.b16 %v2948, %v2948
      %v2965 = vpack.c.b16 %v2949, %v2949
      %v2966 = vpack.c.b16 %v2950, %v2950
      %v2967 = vpack.c.b16 %v2951, %v2951
      %v2968 = vpack.c.b16 %v2952, %v2952
      %v2969 = vpack.c.b16 %v2953, %v2953
      %v2970 = vpack.c.b16 %v2954, %v2954
      %v2971 = vpack.c.b16 %v2955, %v2955
      %v2972 = vpack.c.b16 %v2956, %v2956
      %v2973 = vpack.c.b16 %v2957, %v2957
      %v2974 = vpack.c.b16 %v2958, %v2958
      %v2975 = vpack.c.b16 %v2959, %v2959
      %v2977 = vshrl.u32 %v2912, 16
      %v2979 = vshll.u32 %v2912, 16
      %v2981 = vrot.slane %v2979, 1
      %v2982 = vor.u32 %v2977, %v2981
      %v2984 = vshll.u32 %v2960, 16
      %v2986 = vrot.slane %v2984, 1
      %v2987 = vsel %vm1490, %v2982, %v2986
      %v2989 = vshrl.u32 %v2913, 16
      %v2991 = vshll.u32 %v2913, 16
      %v2993 = vrot.slane %v2991, 1
      %v2994 = vor.u32 %v2989, %v2993
      %v2996 = vshll.u32 %v2961, 16
      %v2998 = vrot.slane %v2996, 1
      %v2999 = vsel %vm1490, %v2994, %v2998
      %v3001 = vshrl.u32 %v2914, 16
      %v3003 = vshll.u32 %v2914, 16
      %v3005 = vrot.slane %v3003, 1
      %v3006 = vor.u32 %v3001, %v3005
      %v3008 = vshll.u32 %v2962, 16
      %v3010 = vrot.slane %v3008, 1
      %v3011 = vsel %vm1490, %v3006, %v3010
      %v3013 = vshrl.u32 %v2915, 16
      %v3015 = vshll.u32 %v2915, 16
      %v3017 = vrot.slane %v3015, 1
      %v3018 = vor.u32 %v3013, %v3017
      %v3020 = vshll.u32 %v2963, 16
      %v3022 = vrot.slane %v3020, 1
      %v3023 = vsel %vm1490, %v3018, %v3022
      %v3025 = vshrl.u32 %v2916, 16
      %v3027 = vshll.u32 %v2916, 16
      %v3029 = vrot.slane %v3027, 1
      %v3030 = vor.u32 %v3025, %v3029
      %v3032 = vshll.u32 %v2964, 16
      %v3034 = vrot.slane %v3032, 1
      %v3035 = vsel %vm1490, %v3030, %v3034
      %v3037 = vshrl.u32 %v2917, 16
      %v3039 = vshll.u32 %v2917, 16
      %v3041 = vrot.slane %v3039, 1
      %v3042 = vor.u32 %v3037, %v3041
      %v3044 = vshll.u32 %v2965, 16
      %v3046 = vrot.slane %v3044, 1
      %v3047 = vsel %vm1490, %v3042, %v3046
      %v3049 = vshrl.u32 %v2918, 16
      %v3051 = vshll.u32 %v2918, 16
      %v3053 = vrot.slane %v3051, 1
      %v3054 = vor.u32 %v3049, %v3053
      %v3056 = vshll.u32 %v2966, 16
      %v3058 = vrot.slane %v3056, 1
      %v3059 = vsel %vm1490, %v3054, %v3058
      %v3061 = vshrl.u32 %v2919, 16
      %v3063 = vshll.u32 %v2919, 16
      %v3065 = vrot.slane %v3063, 1
      %v3066 = vor.u32 %v3061, %v3065
      %v3068 = vshll.u32 %v2967, 16
      %v3070 = vrot.slane %v3068, 1
      %v3071 = vsel %vm1490, %v3066, %v3070
      %v3073 = vshrl.u32 %v2920, 16
      %v3075 = vshll.u32 %v2920, 16
      %v3077 = vrot.slane %v3075, 1
      %v3078 = vor.u32 %v3073, %v3077
      %v3080 = vshll.u32 %v2968, 16
      %v3082 = vrot.slane %v3080, 1
      %v3083 = vsel %vm1490, %v3078, %v3082
      %v3085 = vshrl.u32 %v2921, 16
      %v3087 = vshll.u32 %v2921, 16
      %v3089 = vrot.slane %v3087, 1
      %v3090 = vor.u32 %v3085, %v3089
      %v3092 = vshll.u32 %v2969, 16
      %v3094 = vrot.slane %v3092, 1
      %v3095 = vsel %vm1490, %v3090, %v3094
      %v3097 = vshrl.u32 %v2922, 16
      %v3099 = vshll.u32 %v2922, 16
      %v3101 = vrot.slane %v3099, 1
      %v3102 = vor.u32 %v3097, %v3101
      %v3104 = vshll.u32 %v2970, 16
      %v3106 = vrot.slane %v3104, 1
      %v3107 = vsel %vm1490, %v3102, %v3106
      %v3109 = vshrl.u32 %v2923, 16
      %v3111 = vshll.u32 %v2923, 16
      %v3113 = vrot.slane %v3111, 1
      %v3114 = vor.u32 %v3109, %v3113
      %v3116 = vshll.u32 %v2971, 16
      %v3118 = vrot.slane %v3116, 1
      %v3119 = vsel %vm1490, %v3114, %v3118
      %v3121 = vshrl.u32 %v2924, 16
      %v3123 = vshll.u32 %v2924, 16
      %v3125 = vrot.slane %v3123, 1
      %v3126 = vor.u32 %v3121, %v3125
      %v3128 = vshll.u32 %v2972, 16
      %v3130 = vrot.slane %v3128, 1
      %v3131 = vsel %vm1490, %v3126, %v3130
      %v3133 = vshrl.u32 %v2925, 16
      %v3135 = vshll.u32 %v2925, 16
      %v3137 = vrot.slane %v3135, 1
      %v3138 = vor.u32 %v3133, %v3137
      %v3140 = vshll.u32 %v2973, 16
      %v3142 = vrot.slane %v3140, 1
      %v3143 = vsel %vm1490, %v3138, %v3142
      %v3145 = vshrl.u32 %v2926, 16
      %v3147 = vshll.u32 %v2926, 16
      %v3149 = vrot.slane %v3147, 1
      %v3150 = vor.u32 %v3145, %v3149
      %v3152 = vshll.u32 %v2974, 16
      %v3154 = vrot.slane %v3152, 1
      %v3155 = vsel %vm1490, %v3150, %v3154
      %v3157 = vshrl.u32 %v2927, 16
      %v3159 = vshll.u32 %v2927, 16
      %v3161 = vrot.slane %v3159, 1
      %v3162 = vor.u32 %v3157, %v3161
      %v3164 = vshll.u32 %v2975, 16
      %v3166 = vrot.slane %v3164, 1
      %v3167 = vsel %vm1490, %v3162, %v3166
      %3168 = vrot.lane.b32.xlu0 %v2987, 2
      %v3169 = vpop.permute.xlu0 %3168
      %3170 = vrot.lane.b32.xlu0 %v2999, 2
      %v3171 = vpop.permute.xlu0 %3170
      %3172 = vrot.lane.b32.xlu0 %v3011, 2
      %v3173 = vpop.permute.xlu0 %3172
      %3174 = vrot.lane.b32.xlu0 %v3023, 2
      %v3175 = vpop.permute.xlu0 %3174
      %3176 = vrot.lane.b32.xlu0 %v3035, 2
      %v3177 = vpop.permute.xlu0 %3176
      %3178 = vrot.lane.b32.xlu0 %v3047, 2
      %v3179 = vpop.permute.xlu0 %3178
      %3180 = vrot.lane.b32.xlu0 %v3059, 2
      %v3181 = vpop.permute.xlu0 %3180
      %3182 = vrot.lane.b32.xlu0 %v3071, 2
      %v3183 = vpop.permute.xlu0 %3182
      %3184 = vrot.lane.b32.xlu0 %v3083, 2
      %v3185 = vpop.permute.xlu0 %3184
      %3186 = vrot.lane.b32.xlu0 %v3095, 2
      %v3187 = vpop.permute.xlu0 %3186
      %3188 = vrot.lane.b32.xlu0 %v3107, 2
      %v3189 = vpop.permute.xlu0 %3188
      %3190 = vrot.lane.b32.xlu0 %v3119, 2
      %v3191 = vpop.permute.xlu0 %3190
      %3192 = vrot.lane.b32.xlu0 %v3131, 2
      %v3193 = vpop.permute.xlu0 %3192
      %3194 = vrot.lane.b32.xlu0 %v3143, 2
      %v3195 = vpop.permute.xlu0 %3194
      %3196 = vrot.lane.b32.xlu0 %v3155, 2
      %v3197 = vpop.permute.xlu0 %3196
      %3198 = vrot.lane.b32.xlu0 %v3167, 2
      %v3199 = vpop.permute.xlu0 %3198
      %v3200 = vrot.slane %v2912, 1
      %v3201 = vrot.slane %v2960, 1
      %v3202 = vsel %vm1715, %v3200, %v3201
      %v3203 = vrot.slane %v2913, 1
      %v3204 = vrot.slane %v2961, 1
      %v3205 = vsel %vm1715, %v3203, %v3204
      %v3206 = vrot.slane %v2914, 1
      %v3207 = vrot.slane %v2962, 1
      %v3208 = vsel %vm1715, %v3206, %v3207
      %v3209 = vrot.slane %v2915, 1
      %v3210 = vrot.slane %v2963, 1
      %v3211 = vsel %vm1715, %v3209, %v3210
      %v3212 = vrot.slane %v2916, 1
      %v3213 = vrot.slane %v2964, 1
      %v3214 = vsel %vm1715, %v3212, %v3213
      %v3215 = vrot.slane %v2917, 1
      %v3216 = vrot.slane %v2965, 1
      %v3217 = vsel %vm1715, %v3215, %v3216
      %v3218 = vrot.slane %v2918, 1
      %v3219 = vrot.slane %v2966, 1
      %v3220 = vsel %vm1715, %v3218, %v3219
      %v3221 = vrot.slane %v2919, 1
      %v3222 = vrot.slane %v2967, 1
      %v3223 = vsel %vm1715, %v3221, %v3222
      %v3224 = vrot.slane %v2920, 1
      %v3225 = vrot.slane %v2968, 1
      %v3226 = vsel %vm1715, %v3224, %v3225
      %v3227 = vrot.slane %v2921, 1
      %v3228 = vrot.slane %v2969, 1
      %v3229 = vsel %vm1715, %v3227, %v3228
      %v3230 = vrot.slane %v2922, 1
      %v3231 = vrot.slane %v2970, 1
      %v3232 = vsel %vm1715, %v3230, %v3231
      %v3233 = vrot.slane %v2923, 1
      %v3234 = vrot.slane %v2971, 1
      %v3235 = vsel %vm1715, %v3233, %v3234
      %v3236 = vrot.slane %v2924, 1
      %v3237 = vrot.slane %v2972, 1
      %v3238 = vsel %vm1715, %v3236, %v3237
      %v3239 = vrot.slane %v2925, 1
      %v3240 = vrot.slane %v2973, 1
      %v3241 = vsel %vm1715, %v3239, %v3240
      %v3242 = vrot.slane %v2926, 1
      %v3243 = vrot.slane %v2974, 1
      %v3244 = vsel %vm1715, %v3242, %v3243
      %v3245 = vrot.slane %v2927, 1
      %v3246 = vrot.slane %v2975, 1
      %v3247 = vsel %vm1715, %v3245, %v3246
      %3248 = vrot.lane.b32.xlu0 %v3202, 4
      %v3249 = vpop.permute.xlu0 %3248
      %3250 = vrot.lane.b32.xlu0 %v3205, 4
      %v3251 = vpop.permute.xlu0 %3250
      %3252 = vrot.lane.b32.xlu0 %v3208, 4
      %v3253 = vpop.permute.xlu0 %3252
      %3254 = vrot.lane.b32.xlu0 %v3211, 4
      %v3255 = vpop.permute.xlu0 %3254
      %3256 = vrot.lane.b32.xlu0 %v3214, 4
      %v3257 = vpop.permute.xlu0 %3256
      %3258 = vrot.lane.b32.xlu0 %v3217, 4
      %v3259 = vpop.permute.xlu0 %3258
      %3260 = vrot.lane.b32.xlu0 %v3220, 4
      %v3261 = vpop.permute.xlu0 %3260
      %3262 = vrot.lane.b32.xlu0 %v3223, 4
      %v3263 = vpop.permute.xlu0 %3262
      %3264 = vrot.lane.b32.xlu0 %v3226, 4
      %v3265 = vpop.permute.xlu0 %3264
      %3266 = vrot.lane.b32.xlu0 %v3229, 4
      %v3267 = vpop.permute.xlu0 %3266
      %3268 = vrot.lane.b32.xlu0 %v3232, 4
      %v3269 = vpop.permute.xlu0 %3268
      %3270 = vrot.lane.b32.xlu0 %v3235, 4
      %v3271 = vpop.permute.xlu0 %3270
      %3272 = vrot.lane.b32.xlu0 %v3238, 4
      %v3273 = vpop.permute.xlu0 %3272
      %3274 = vrot.lane.b32.xlu0 %v3241, 4
      %v3275 = vpop.permute.xlu0 %3274
      %3276 = vrot.lane.b32.xlu0 %v3244, 4
      %v3277 = vpop.permute.xlu0 %3276
      %3278 = vrot.lane.b32.xlu0 %v3247, 4
      %v3279 = vpop.permute.xlu0 %3278
      %v3281 = vsel %vm1796, %v2912, %v3169
      %v3283 = vsel %vm1796, %v2913, %v3171
      %v3285 = vsel %vm1796, %v2914, %v3173
      %v3287 = vsel %vm1796, %v2915, %v3175
      %v3289 = vsel %vm1796, %v2916, %v3177
      %v3291 = vsel %vm1796, %v2917, %v3179
      %v3293 = vsel %vm1796, %v2918, %v3181
      %v3295 = vsel %vm1796, %v2919, %v3183
      %v3297 = vsel %vm1796, %v2920, %v3185
      %v3299 = vsel %vm1796, %v2921, %v3187
      %v3301 = vsel %vm1796, %v2922, %v3189
      %v3303 = vsel %vm1796, %v2923, %v3191
      %v3305 = vsel %vm1796, %v2924, %v3193
      %v3307 = vsel %vm1796, %v2925, %v3195
      %v3309 = vsel %vm1796, %v2926, %v3197
      %v3311 = vsel %vm1796, %v2927, %v3199
      %v3313 = vsel %vm468, %v3281, %v3249
      %v3315 = vsel %vm468, %v3283, %v3251
      %v3317 = vsel %vm468, %v3285, %v3253
      %v3319 = vsel %vm468, %v3287, %v3255
      %v3321 = vsel %vm468, %v3289, %v3257
      %v3323 = vsel %vm468, %v3291, %v3259
      %v3325 = vsel %vm468, %v3293, %v3261
      %v3327 = vsel %vm468, %v3295, %v3263
      %v3329 = vsel %vm468, %v3297, %v3265
      %v3331 = vsel %vm468, %v3299, %v3267
      %v3333 = vsel %vm468, %v3301, %v3269
      %v3335 = vsel %vm468, %v3303, %v3271
      %v3337 = vsel %vm468, %v3305, %v3273
      %v3339 = vsel %vm468, %v3307, %v3275
      %v3341 = vsel %vm468, %v3309, %v3277
      %v3343 = vsel %vm468, %v3311, %v3279
      %v3344 = vsel %vm2405, %v3313, 0
      %v3346 = vsel %vm2405, %v3315, 0
      %v3348 = vsel %vm2405, %v3317, 0
      %v3350 = vsel %vm2405, %v3319, 0
      %v3352 = vsel %vm2405, %v3321, 0
      %v3354 = vsel %vm2405, %v3323, 0
      %v3356 = vsel %vm2405, %v3325, 0
      %v3358 = vsel %vm2405, %v3327, 0
      %v3360 = vsel %vm2405, %v3329, 0
      %v3362 = vsel %vm2405, %v3331, 0
      %v3364 = vsel %vm2405, %v3333, 0
      %v3366 = vsel %vm2405, %v3335, 0
      %v3368 = vsel %vm2405, %v3337, 0
      %v3370 = vsel %vm2405, %v3339, 0
      %v3372 = vsel %vm2405, %v3341, 0
      %v3374 = vsel %vm2405, %v3343, 0
      %v3377 = vsel %vm2438, %v1313, 0
      %3379 = vmatprep.subr.bf16.mxu0 0
      %3380 = vmatpush1.bf16.msra.mxu0 %v3377
      %3381 = vmatprep.subr.bf16.mxu0 0
      %3382 = vmatpush1.bf16.msra.mxu0 0
      %3383 = vmatprep.subr.bf16.mxu0 0
      %3384 = vmatpush1.bf16.msra.mxu0 0
      %3385 = vmatprep.subr.bf16.mxu0 0
      %3386 = vmatpush1.bf16.msra.mxu0 0
      %3387 = vmatprep.subr.bf16.mxu0 0
      %3388 = vmatpush1.bf16.msra.mxu0 0
      %3389 = vmatprep.subr.bf16.mxu0 0
      %3390 = vmatpush1.bf16.msra.mxu0 0
      %3391 = vmatprep.subr.bf16.mxu0 0
      %3392 = vmatpush1.bf16.msra.mxu0 0
      %3393 = vmatprep.subr.bf16.mxu0 0
      %3394 = vmatpush1.bf16.msra.mxu0 0
      %3395 = vmatprep.subr.bf16.mxu0 0
      %3396 = vmatpush1.bf16.msra.mxu0 0
      %3397 = vmatprep.subr.bf16.mxu0 0
      %3398 = vmatpush1.bf16.msra.mxu0 0
      %3399 = vmatprep.subr.bf16.mxu0 0
      %3400 = vmatpush1.bf16.msra.mxu0 0
      %3401 = vmatprep.subr.bf16.mxu0 0
      %3402 = vmatpush1.bf16.msra.mxu0 0
      %3403 = vmatprep.subr.bf16.mxu0 0
      %3404 = vmatpush1.bf16.msra.mxu0 0
      %3405 = vmatprep.subr.bf16.mxu0 0
      %3406 = vmatpush1.bf16.msra.mxu0 0
      %3407 = vmatprep.subr.bf16.mxu0 0
      %3408 = vmatpush1.bf16.msra.mxu0 0
      %3409 = vmatprep.subr.bf16.mxu0 0
      %3410 = vmatpush1.bf16.msra.mxu0 0
      %3411 = vmatprep.mubr.bf16.mxu0 0
      %3412 = vmatmul.mubr.bf16.gmra.mrb[0].mxu0 %v3344
      %v3413 = vpop.f32.mrb[0].mxu0
      %v3414 = vadd.f32 0.0, %v3413
      %v3415 = vpop.f32.mrb[0].mxu0
      %v3416 = vpop.f32.mrb[0].mxu0
      %v3417 = vadd.f32 0.0, %v3416
      %v3418 = vpop.f32.mrb[0].mxu0
      %3419 = vmatprep.mubr.bf16.mxu0 0
      %3420 = vmatmul.mubr.bf16.gmra.mrb[0].mxu0 %v3346
      %v3421 = vpop.f32.mrb[0].mxu0
      %v3422 = vadd.f32 0.0, %v3421
      %v3423 = vpop.f32.mrb[0].mxu0
      %v3424 = vpop.f32.mrb[0].mxu0
      %v3425 = vadd.f32 0.0, %v3424
      %v3426 = vpop.f32.mrb[0].mxu0
      %3427 = vmatprep.mubr.bf16.mxu0 0
      %3428 = vmatmul.mubr.bf16.gmra.mrb[0].mxu0 %v3348
      %v3429 = vpop.f32.mrb[0].mxu0
      %v3430 = vadd.f32 0.0, %v3429
      %v3431 = vpop.f32.mrb[0].mxu0
      %v3432 = vpop.f32.mrb[0].mxu0
      %v3433 = vadd.f32 0.0, %v3432
      %v3434 = vpop.f32.mrb[0].mxu0
      %3435 = vmatprep.mubr.bf16.mxu0 0
      %3436 = vmatmul.mubr.bf16.gmra.mrb[0].mxu0 %v3350
      %v3437 = vpop.f32.mrb[0].mxu0
      %v3438 = vadd.f32 0.0, %v3437
      %v3439 = vpop.f32.mrb[0].mxu0
      %v3440 = vpop.f32.mrb[0].mxu0
      %v3441 = vadd.f32 0.0, %v3440
      %v3442 = vpop.f32.mrb[0].mxu0
      %3443 = vmatprep.mubr.bf16.mxu0 0
      %3444 = vmatmul.mubr.bf16.gmra.mrb[0].mxu0 %v3352
      %v3445 = vpop.f32.mrb[0].mxu0
      %v3446 = vadd.f32 0.0, %v3445
      %v3447 = vpop.f32.mrb[0].mxu0
      %v3448 = vpop.f32.mrb[0].mxu0
      %v3449 = vadd.f32 0.0, %v3448
      %v3450 = vpop.f32.mrb[0].mxu0
      %3451 = vmatprep.mubr.bf16.mxu0 0
      %3452 = vmatmul.mubr.bf16.gmra.mrb[0].mxu0 %v3354
      %v3453 = vpop.f32.mrb[0].mxu0
      %v3454 = vadd.f32 0.0, %v3453
      %v3455 = vpop.f32.mrb[0].mxu0
      %v3456 = vpop.f32.mrb[0].mxu0
      %v3457 = vadd.f32 0.0, %v3456
      %v3458 = vpop.f32.mrb[0].mxu0
      %3459 = vmatprep.mubr.bf16.mxu0 0
      %3460 = vmatmul.mubr.bf16.gmra.mrb[0].mxu0 %v3356
      %v3461 = vpop.f32.mrb[0].mxu0
      %v3462 = vadd.f32 0.0, %v3461
      %v3463 = vpop.f32.mrb[0].mxu0
      %v3464 = vpop.f32.mrb[0].mxu0
      %v3465 = vadd.f32 0.0, %v3464
      %v3466 = vpop.f32.mrb[0].mxu0
      %3467 = vmatprep.mubr.bf16.mxu0 0
      %3468 = vmatmul.mubr.bf16.gmra.mrb[0].mxu0 %v3358
      %v3469 = vpop.f32.mrb[0].mxu0
      %v3470 = vadd.f32 0.0, %v3469
      %v3471 = vpop.f32.mrb[0].mxu0
      %v3472 = vpop.f32.mrb[0].mxu0
      %v3473 = vadd.f32 0.0, %v3472
      %v3474 = vpop.f32.mrb[0].mxu0
      %3475 = vmatprep.mubr.bf16.mxu0 0
      %3476 = vmatmul.mubr.bf16.gmra.mrb[0].mxu0 %v3360
      %v3477 = vpop.f32.mrb[0].mxu0
      %v3478 = vadd.f32 0.0, %v3477
      %v3479 = vpop.f32.mrb[0].mxu0
      %v3480 = vpop.f32.mrb[0].mxu0
      %v3481 = vadd.f32 0.0, %v3480
      %v3482 = vpop.f32.mrb[0].mxu0
      %3483 = vmatprep.mubr.bf16.mxu0 0
      %3484 = vmatmul.mubr.bf16.gmra.mrb[0].mxu0 %v3362
      %v3485 = vpop.f32.mrb[0].mxu0
      %v3486 = vadd.f32 0.0, %v3485
      %v3487 = vpop.f32.mrb[0].mxu0
      %v3488 = vpop.f32.mrb[0].mxu0
      %v3489 = vadd.f32 0.0, %v3488
      %v3490 = vpop.f32.mrb[0].mxu0
      %3491 = vmatprep.mubr.bf16.mxu0 0
      %3492 = vmatmul.mubr.bf16.gmra.mrb[0].mxu0 %v3364
      %v3493 = vpop.f32.mrb[0].mxu0
      %v3494 = vadd.f32 0.0, %v3493
      %v3495 = vpop.f32.mrb[0].mxu0
      %v3496 = vpop.f32.mrb[0].mxu0
      %v3497 = vadd.f32 0.0, %v3496
      %v3498 = vpop.f32.mrb[0].mxu0
      %3499 = vmatprep.mubr.bf16.mxu0 0
      %3500 = vmatmul.mubr.bf16.gmra.mrb[0].mxu0 %v3366
      %v3501 = vpop.f32.mrb[0].mxu0
      %v3502 = vadd.f32 0.0, %v3501
      %v3503 = vpop.f32.mrb[0].mxu0
      %v3504 = vpop.f32.mrb[0].mxu0
      %v3505 = vadd.f32 0.0, %v3504
      %v3506 = vpop.f32.mrb[0].mxu0
      %3507 = vmatprep.mubr.bf16.mxu0 0
      %3508 = vmatmul.mubr.bf16.gmra.mrb[0].mxu0 %v3368
      %v3509 = vpop.f32.mrb[0].mxu0
      %v3510 = vadd.f32 0.0, %v3509
      %v3511 = vpop.f32.mrb[0].mxu0
      %v3512 = vpop.f32.mrb[0].mxu0
      %v3513 = vadd.f32 0.0, %v3512
      %v3514 = vpop.f32.mrb[0].mxu0
      %3515 = vmatprep.mubr.bf16.mxu0 0
      %3516 = vmatmul.mubr.bf16.gmra.mrb[0].mxu0 %v3370
      %v3517 = vpop.f32.mrb[0].mxu0
      %v3518 = vadd.f32 0.0, %v3517
      %v3519 = vpop.f32.mrb[0].mxu0
      %v3520 = vpop.f32.mrb[0].mxu0
      %v3521 = vadd.f32 0.0, %v3520
      %v3522 = vpop.f32.mrb[0].mxu0
      %3523 = vmatprep.mubr.bf16.mxu0 0
      %3524 = vmatmul.mubr.bf16.gmra.mrb[0].mxu0 %v3372
      %v3525 = vpop.f32.mrb[0].mxu0
      %v3526 = vadd.f32 0.0, %v3525
      %v3527 = vpop.f32.mrb[0].mxu0
      %v3528 = vpop.f32.mrb[0].mxu0
      %v3529 = vadd.f32 0.0, %v3528
      %v3530 = vpop.f32.mrb[0].mxu0
      %3531 = vmatprep.mubr.bf16.mxu0 0
      %3532 = vmatmul.mubr.bf16.gmra.mrb[0].mxu0 %v3374
      %v3533 = vpop.f32.mrb[0].mxu0
      %v3534 = vadd.f32 0.0, %v3533
      %v3535 = vpop.f32.mrb[0].mxu0
      %v3536 = vpop.f32.mrb[0].mxu0
      %v3537 = vadd.f32 0.0, %v3536
      %v3538 = vpop.f32.mrb[0].mxu0
      %3539 = vdwg.mxu0
      %v3540 = vadd.f32 %v2673, %v3414
      %v3541 = vadd.f32 %v2676, %v3417
      %v3542 = vadd.f32 %v2681, %v3422
      %v3543 = vadd.f32 %v2684, %v3425
      %v3544 = vadd.f32 %v2689, %v3430
      %v3545 = vadd.f32 %v2692, %v3433
      %v3546 = vadd.f32 %v2697, %v3438
      %v3547 = vadd.f32 %v2700, %v3441
      %v3548 = vadd.f32 %v2705, %v3446
      %v3549 = vadd.f32 %v2708, %v3449
      %v3550 = vadd.f32 %v2713, %v3454
      %v3551 = vadd.f32 %v2716, %v3457
      %v3552 = vadd.f32 %v2721, %v3462
      %v3553 = vadd.f32 %v2724, %v3465
      %v3554 = vadd.f32 %v2729, %v3470
      %v3555 = vadd.f32 %v2732, %v3473
      %v3556 = vadd.f32 %v2737, %v3478
      %v3557 = vadd.f32 %v2740, %v3481
      %v3558 = vadd.f32 %v2745, %v3486
      %v3559 = vadd.f32 %v2748, %v3489
      %v3560 = vadd.f32 %v2753, %v3494
      %v3561 = vadd.f32 %v2756, %v3497
      %v3562 = vadd.f32 %v2761, %v3502
      %v3563 = vadd.f32 %v2764, %v3505
      %v3564 = vadd.f32 %v2769, %v3510
      %v3565 = vadd.f32 %v2772, %v3513
      %v3566 = vadd.f32 %v2777, %v3518
      %v3567 = vadd.f32 %v2780, %v3521
      %v3568 = vadd.f32 %v2785, %v3526
      %v3569 = vadd.f32 %v2788, %v3529
      %v3570 = vadd.f32 %v2793, %v3534
      %v3571 = vadd.f32 %v2796, %v3537
      %v3572 = vld [vmem:[%s4] sm:$0x1]
      %v3574 = vlaneseq
      %v3575 = vshrl.u32 %v3574, 7
      %v3576 = vsub.s32 0, %v3575
      %v3577 = vrot.slane %v3572, %v3576
      %v3579 = vadd.f32 %v3540, %v3577
      %v3580 = vadd.f32 %v3541, %v3577
      %v3581 = vadd.f32 %v3542, %v3577
      %v3582 = vadd.f32 %v3543, %v3577
      %v3583 = vadd.f32 %v3544, %v3577
      %v3584 = vadd.f32 %v3545, %v3577
      %v3585 = vadd.f32 %v3546, %v3577
      %v3586 = vadd.f32 %v3547, %v3577
      %v3587 = vadd.f32 %v3548, %v3577
      %v3588 = vadd.f32 %v3549, %v3577
      %v3589 = vadd.f32 %v3550, %v3577
      %v3590 = vadd.f32 %v3551, %v3577
      %v3591 = vadd.f32 %v3552, %v3577
      %v3592 = vadd.f32 %v3553, %v3577
      %v3593 = vadd.f32 %v3554, %v3577
      %v3594 = vadd.f32 %v3555, %v3577
      %v3595 = vadd.f32 %v3556, %v3577
      %v3596 = vadd.f32 %v3557, %v3577
      %v3597 = vadd.f32 %v3558, %v3577
      %v3598 = vadd.f32 %v3559, %v3577
      %v3599 = vadd.f32 %v3560, %v3577
      %v3600 = vadd.f32 %v3561, %v3577
      %v3601 = vadd.f32 %v3562, %v3577
      %v3602 = vadd.f32 %v3563, %v3577
      %v3603 = vadd.f32 %v3564, %v3577
      %v3604 = vadd.f32 %v3565, %v3577
      %v3605 = vadd.f32 %v3566, %v3577
      %v3606 = vadd.f32 %v3567, %v3577
      %v3607 = vadd.f32 %v3568, %v3577
      %v3608 = vadd.f32 %v3569, %v3577
      %v3609 = vadd.f32 %v3570, %v3577
      %v3610 = vadd.f32 %v3571, %v3577
      %vm3611 = vcmp.gt.f32.partialorder %v3579, 0.0
      %vm3612 = vcmp.gt.f32.partialorder %v3580, 0.0
      %vm3613 = vcmp.gt.f32.partialorder %v3581, 0.0
      %vm3614 = vcmp.gt.f32.partialorder %v3582, 0.0
      %vm3615 = vcmp.gt.f32.partialorder %v3583, 0.0
      %vm3616 = vcmp.gt.f32.partialorder %v3584, 0.0
      %vm3617 = vcmp.gt.f32.partialorder %v3585, 0.0
      %vm3618 = vcmp.gt.f32.partialorder %v3586, 0.0
      %vm3619 = vcmp.gt.f32.partialorder %v3587, 0.0
      %vm3620 = vcmp.gt.f32.partialorder %v3588, 0.0
      %vm3621 = vcmp.gt.f32.partialorder %v3589, 0.0
      %vm3622 = vcmp.gt.f32.partialorder %v3590, 0.0
      %vm3623 = vcmp.gt.f32.partialorder %v3591, 0.0
      %vm3624 = vcmp.gt.f32.partialorder %v3592, 0.0
      %vm3625 = vcmp.gt.f32.partialorder %v3593, 0.0
      %vm3626 = vcmp.gt.f32.partialorder %v3594, 0.0
      %vm3627 = vcmp.gt.f32.partialorder %v3595, 0.0
      %vm3628 = vcmp.gt.f32.partialorder %v3596, 0.0
      %vm3629 = vcmp.gt.f32.partialorder %v3597, 0.0
      %vm3630 = vcmp.gt.f32.partialorder %v3598, 0.0
      %vm3631 = vcmp.gt.f32.partialorder %v3599, 0.0
      %vm3632 = vcmp.gt.f32.partialorder %v3600, 0.0
      %vm3633 = vcmp.gt.f32.partialorder %v3601, 0.0
      %vm3634 = vcmp.gt.f32.partialorder %v3602, 0.0
      %vm3635 = vcmp.gt.f32.partialorder %v3603, 0.0
      %vm3636 = vcmp.gt.f32.partialorder %v3604, 0.0
      %vm3637 = vcmp.gt.f32.partialorder %v3605, 0.0
      %vm3638 = vcmp.gt.f32.partialorder %v3606, 0.0
      %vm3639 = vcmp.gt.f32.partialorder %v3607, 0.0
      %vm3640 = vcmp.gt.f32.partialorder %v3608, 0.0
      %vm3641 = vcmp.gt.f32.partialorder %v3609, 0.0
      %vm3642 = vcmp.gt.f32.partialorder %v3610, 0.0
      %v3643 = vmul.f32 %v3579, 0.1
      %v3644 = vmul.f32 %v3580, 0.1
      %v3645 = vmul.f32 %v3581, 0.1
      %v3646 = vmul.f32 %v3582, 0.1
      %v3647 = vmul.f32 %v3583, 0.1
      %v3648 = vmul.f32 %v3584, 0.1
      %v3649 = vmul.f32 %v3585, 0.1
      %v3650 = vmul.f32 %v3586, 0.1
      %v3651 = vmul.f32 %v3587, 0.1
      %v3652 = vmul.f32 %v3588, 0.1
      %v3653 = vmul.f32 %v3589, 0.1
      %v3654 = vmul.f32 %v3590, 0.1
      %v3655 = vmul.f32 %v3591, 0.1
      %v3656 = vmul.f32 %v3592, 0.1
      %v3657 = vmul.f32 %v3593, 0.1
      %v3658 = vmul.f32 %v3594, 0.1
      %v3659 = vmul.f32 %v3595, 0.1
      %v3660 = vmul.f32 %v3596, 0.1
      %v3661 = vmul.f32 %v3597, 0.1
      %v3662 = vmul.f32 %v3598, 0.1
      %v3663 = vmul.f32 %v3599, 0.1
      %v3664 = vmul.f32 %v3600, 0.1
      %v3665 = vmul.f32 %v3601, 0.1
      %v3666 = vmul.f32 %v3602, 0.1
      %v3667 = vmul.f32 %v3603, 0.1
      %v3668 = vmul.f32 %v3604, 0.1
      %v3669 = vmul.f32 %v3605, 0.1
      %v3670 = vmul.f32 %v3606, 0.1
      %v3671 = vmul.f32 %v3607, 0.1
      %v3672 = vmul.f32 %v3608, 0.1
      %v3673 = vmul.f32 %v3609, 0.1
      %v3674 = vmul.f32 %v3610, 0.1
      %v3675 = vsel %vm3611, %v3579, %v3643
      %v3676 = vsel %vm3612, %v3580, %v3644
      %v3677 = vsel %vm3613, %v3581, %v3645
      %v3678 = vsel %vm3614, %v3582, %v3646
      %v3679 = vsel %vm3615, %v3583, %v3647
      %v3680 = vsel %vm3616, %v3584, %v3648
      %v3681 = vsel %vm3617, %v3585, %v3649
      %v3682 = vsel %vm3618, %v3586, %v3650
      %v3683 = vsel %vm3619, %v3587, %v3651
      %v3684 = vsel %vm3620, %v3588, %v3652
      %v3685 = vsel %vm3621, %v3589, %v3653
      %v3686 = vsel %vm3622, %v3590, %v3654
      %v3687 = vsel %vm3623, %v3591, %v3655
      %v3688 = vsel %vm3624, %v3592, %v3656
      %v3689 = vsel %vm3625, %v3593, %v3657
      %v3690 = vsel %vm3626, %v3594, %v3658
      %v3691 = vsel %vm3627, %v3595, %v3659
      %v3692 = vsel %vm3628, %v3596, %v3660
      %v3693 = vsel %vm3629, %v3597, %v3661
      %v3694 = vsel %vm3630, %v3598, %v3662
      %v3695 = vsel %vm3631, %v3599, %v3663
      %v3696 = vsel %vm3632, %v3600, %v3664
      %v3697 = vsel %vm3633, %v3601, %v3665
      %v3698 = vsel %vm3634, %v3602, %v3666
      %v3699 = vsel %vm3635, %v3603, %v3667
      %v3700 = vsel %vm3636, %v3604, %v3668
      %v3701 = vsel %vm3637, %v3605, %v3669
      %v3702 = vsel %vm3638, %v3606, %v3670
      %v3703 = vsel %vm3639, %v3607, %v3671
      %v3704 = vsel %vm3640, %v3608, %v3672
      %v3705 = vsel %vm3641, %v3609, %v3673
      %v3706 = vsel %vm3642, %v3610, %v3674
      %v3707 = vunpack.c.l.bf16 %v348
      %v3708 = vunpack.c.l.bf16 %v349
      %v3709 = vunpack.c.l.bf16 %v350
      %v3710 = vunpack.c.l.bf16 %v351
      %v3711 = vunpack.c.l.bf16 %v352
      %v3712 = vunpack.c.l.bf16 %v353
      %v3713 = vunpack.c.l.bf16 %v354
      %v3714 = vunpack.c.l.bf16 %v355
      %v3715 = vunpack.c.l.bf16 %v356
      %v3716 = vunpack.c.l.bf16 %v357
      %v3717 = vunpack.c.l.bf16 %v358
      %v3718 = vunpack.c.l.bf16 %v359
      %v3719 = vunpack.c.l.bf16 %v360
      %v3720 = vunpack.c.l.bf16 %v361
      %v3721 = vunpack.c.l.bf16 %v362
      %v3722 = vunpack.c.l.bf16 %v363
      %v3723 = vunpack.c.l.bf16 %v364
      %v3724 = vunpack.c.l.bf16 %v365
      %v3725 = vunpack.c.l.bf16 %v366
      %v3726 = vunpack.c.l.bf16 %v367
      %v3727 = vunpack.c.l.bf16 %v368
      %v3728 = vunpack.c.l.bf16 %v369
      %v3729 = vunpack.c.l.bf16 %v370
      %v3730 = vunpack.c.l.bf16 %v371
      %v3731 = vunpack.c.l.bf16 %v372
      %v3732 = vunpack.c.l.bf16 %v373
      %v3733 = vunpack.c.l.bf16 %v374
      %v3734 = vunpack.c.l.bf16 %v375
      %v3735 = vunpack.c.l.bf16 %v376
      %v3736 = vunpack.c.l.bf16 %v377
      %v3737 = vunpack.c.l.bf16 %v378
      %v3738 = vunpack.c.l.bf16 %v379
      %v3739 = vadd.f32 %v3675, %v3707
      %v3740 = vadd.f32 %v3676, %v3708
      %v3741 = vadd.f32 %v3677, %v3709
      %v3742 = vadd.f32 %v3678, %v3710
      %v3743 = vadd.f32 %v3679, %v3711
      %v3744 = vadd.f32 %v3680, %v3712
      %v3745 = vadd.f32 %v3681, %v3713
      %v3746 = vadd.f32 %v3682, %v3714
      %v3747 = vadd.f32 %v3683, %v3715
      %v3748 = vadd.f32 %v3684, %v3716
      %v3749 = vadd.f32 %v3685, %v3717
      %v3750 = vadd.f32 %v3686, %v3718
      %v3751 = vadd.f32 %v3687, %v3719
      %v3752 = vadd.f32 %v3688, %v3720
      %v3753 = vadd.f32 %v3689, %v3721
      %v3754 = vadd.f32 %v3690, %v3722
      %v3755 = vadd.f32 %v3691, %v3723
      %v3756 = vadd.f32 %v3692, %v3724
      %v3757 = vadd.f32 %v3693, %v3725
      %v3758 = vadd.f32 %v3694, %v3726
      %v3759 = vadd.f32 %v3695, %v3727
      %v3760 = vadd.f32 %v3696, %v3728
      %v3761 = vadd.f32 %v3697, %v3729
      %v3762 = vadd.f32 %v3698, %v3730
      %v3763 = vadd.f32 %v3699, %v3731
      %v3764 = vadd.f32 %v3700, %v3732
      %v3765 = vadd.f32 %v3701, %v3733
      %v3766 = vadd.f32 %v3702, %v3734
      %v3767 = vadd.f32 %v3703, %v3735
      %v3768 = vadd.f32 %v3704, %v3736
      %v3769 = vadd.f32 %v3705, %v3737
      %v3770 = vadd.f32 %v3706, %v3738
      %v3771 = vpack.c.bf16 %v3740, %v3739
      %v3772 = vpack.c.bf16 %v3742, %v3741
      %v3773 = vpack.c.bf16 %v3744, %v3743
      %v3774 = vpack.c.bf16 %v3746, %v3745
      %v3775 = vpack.c.bf16 %v3748, %v3747
      %v3776 = vpack.c.bf16 %v3750, %v3749
      %v3777 = vpack.c.bf16 %v3752, %v3751
      %v3778 = vpack.c.bf16 %v3754, %v3753
      %v3779 = vpack.c.bf16 %v3756, %v3755
      %v3780 = vpack.c.bf16 %v3758, %v3757
      %v3781 = vpack.c.bf16 %v3760, %v3759
      %v3782 = vpack.c.bf16 %v3762, %v3761
      %v3783 = vpack.c.bf16 %v3764, %v3763
      %v3784 = vpack.c.bf16 %v3766, %v3765
      %v3785 = vpack.c.bf16 %v3768, %v3767
      %v3786 = vpack.c.bf16 %v3770, %v3769
      %s3787 = scalar_lea.vmem %s1, 2
      %v3788 = vld [vmem:[%s3787] sm:$0x3]
      %s3789 = scalar_lea.vmem %s3, 1
      %v3790 = vld [vmem:[%s3789] sm:$0x1]
      %v3792 = vlaneseq
      %v3793 = vshrl.u32 %v3792, 7
      %v3794 = vsub.s32 0, %v3793
      %v3795 = vrot.slane %v3790, %v3794
      %v3798 = vsel %vm468, %v3771, 0
      %v3801 = vsel %vm468, %v3772, 0
      %v3804 = vsel %vm468, %v3773, 0
      %v3807 = vsel %vm468, %v3774, 0
      %v3810 = vsel %vm468, %v3775, 0
      %v3813 = vsel %vm468, %v3776, 0
      %v3816 = vsel %vm468, %v3777, 0
      %v3819 = vsel %vm468, %v3778, 0
      %v3822 = vsel %vm468, %v3779, 0
      %v3825 = vsel %vm468, %v3780, 0
      %v3828 = vsel %vm468, %v3781, 0
      %v3831 = vsel %vm468, %v3782, 0
      %v3834 = vsel %vm468, %v3783, 0
      %v3837 = vsel %vm468, %v3784, 0
      %v3840 = vsel %vm468, %v3785, 0
      %v3843 = vsel %vm468, %v3786, 0
      %v3846 = vsel %vm517, %v3788, 0
      %3848 = vmatprep.subr.bf16.mxu0 0
      %3849 = vmatpush1.bf16.msra.mxu0 %v3846
      %3850 = vmatprep.subr.bf16.mxu0 0
      %3851 = vmatpush1.bf16.msra.mxu0 0
      %3852 = vmatprep.subr.bf16.mxu0 0
      %3853 = vmatpush1.bf16.msra.mxu0 0
      %3854 = vmatprep.subr.bf16.mxu0 0
      %3855 = vmatpush1.bf16.msra.mxu0 0
      %3856 = vmatprep.subr.bf16.mxu0 0
      %3857 = vmatpush1.bf16.msra.mxu0 0
      %3858 = vmatprep.subr.bf16.mxu0 0
      %3859 = vmatpush1.bf16.msra.mxu0 0
      %3860 = vmatprep.subr.bf16.mxu0 0
      %3861 = vmatpush1.bf16.msra.mxu0 0
      %3862 = vmatprep.subr.bf16.mxu0 0
      %3863 = vmatpush1.bf16.msra.mxu0 0
      %3864 = vmatprep.subr.bf16.mxu0 0
      %3865 = vmatpush1.bf16.msra.mxu0 0
      %3866 = vmatprep.subr.bf16.mxu0 0
      %3867 = vmatpush1.bf16.msra.mxu0 0
      %3868 = vmatprep.subr.bf16.mxu0 0
      %3869 = vmatpush1.bf16.msra.mxu0 0
      %3870 = vmatprep.subr.bf16.mxu0 0
      %3871 = vmatpush1.bf16.msra.mxu0 0
      %3872 = vmatprep.subr.bf16.mxu0 0
      %3873 = vmatpush1.bf16.msra.mxu0 0
      %3874 = vmatprep.subr.bf16.mxu0 0
      %3875 = vmatpush1.bf16.msra.mxu0 0
      %3876 = vmatprep.subr.bf16.mxu0 0
      %3877 = vmatpush1.bf16.msra.mxu0 0
      %3878 = vmatprep.subr.bf16.mxu0 0
      %3879 = vmatpush1.bf16.msra.mxu0 0
      %3880 = vmatprep.mubr.bf16.mxu0 0
      %3881 = vmatmul.mubr.bf16.gmra.mrb[0].mxu0 %v3798
      %v3882 = vpop.f32.mrb[0].mxu0
      %v3883 = vadd.f32 %v3795, %v3882
      %v3884 = vpop.f32.mrb[0].mxu0
      %v3885 = vpop.f32.mrb[0].mxu0
      %v3886 = vadd.f32 %v3795, %v3885
      %v3887 = vpop.f32.mrb[0].mxu0
      %3888 = vmatprep.mubr.bf16.mxu0 0
      %3889 = vmatmul.mubr.bf16.gmra.mrb[0].mxu0 %v3801
      %v3890 = vpop.f32.mrb[0].mxu0
      %v3891 = vadd.f32 %v3795, %v3890
      %v3892 = vpop.f32.mrb[0].mxu0
      %v3893 = vpop.f32.mrb[0].mxu0
      %v3894 = vadd.f32 %v3795, %v3893
      %v3895 = vpop.f32.mrb[0].mxu0
      %3896 = vmatprep.mubr.bf16.mxu0 0
      %3897 = vmatmul.mubr.bf16.gmra.mrb[0].mxu0 %v3804
      %v3898 = vpop.f32.mrb[0].mxu0
      %v3899 = vadd.f32 %v3795, %v3898
      %v3900 = vpop.f32.mrb[0].mxu0
      %v3901 = vpop.f32.mrb[0].mxu0
      %v3902 = vadd.f32 %v3795, %v3901
      %v3903 = vpop.f32.mrb[0].mxu0
      %3904 = vmatprep.mubr.bf16.mxu0 0
      %3905 = vmatmul.mubr.bf16.gmra.mrb[0].mxu0 %v3807
      %v3906 = vpop.f32.mrb[0].mxu0
      %v3907 = vadd.f32 %v3795, %v3906
      %v3908 = vpop.f32.mrb[0].mxu0
      %v3909 = vpop.f32.mrb[0].mxu0
      %v3910 = vadd.f32 %v3795, %v3909
      %v3911 = vpop.f32.mrb[0].mxu0
      %3912 = vmatprep.mubr.bf16.mxu0 0
      %3913 = vmatmul.mubr.bf16.gmra.mrb[0].mxu0 %v3810
      %v3914 = vpop.f32.mrb[0].mxu0
      %v3915 = vadd.f32 %v3795, %v3914
      %v3916 = vpop.f32.mrb[0].mxu0
      %v3917 = vpop.f32.mrb[0].mxu0
      %v3918 = vadd.f32 %v3795, %v3917
      %v3919 = vpop.f32.mrb[0].mxu0
      %3920 = vmatprep.mubr.bf16.mxu0 0
      %3921 = vmatmul.mubr.bf16.gmra.mrb[0].mxu0 %v3813
      %v3922 = vpop.f32.mrb[0].mxu0
      %v3923 = vadd.f32 %v3795, %v3922
      %v3924 = vpop.f32.mrb[0].mxu0
      %v3925 = vpop.f32.mrb[0].mxu0
      %v3926 = vadd.f32 %v3795, %v3925
      %v3927 = vpop.f32.mrb[0].mxu0
      %3928 = vmatprep.mubr.bf16.mxu0 0
      %3929 = vmatmul.mubr.bf16.gmra.mrb[0].mxu0 %v3816
      %v3930 = vpop.f32.mrb[0].mxu0
      %v3931 = vadd.f32 %v3795, %v3930
      %v3932 = vpop.f32.mrb[0].mxu0
      %v3933 = vpop.f32.mrb[0].mxu0
      %v3934 = vadd.f32 %v3795, %v3933
      %v3935 = vpop.f32.mrb[0].mxu0
      %3936 = vmatprep.mubr.bf16.mxu0 0
      %3937 = vmatmul.mubr.bf16.gmra.mrb[0].mxu0 %v3819
      %v3938 = vpop.f32.mrb[0].mxu0
      %v3939 = vadd.f32 %v3795, %v3938
      %v3940 = vpop.f32.mrb[0].mxu0
      %v3941 = vpop.f32.mrb[0].mxu0
      %v3942 = vadd.f32 %v3795, %v3941
      %v3943 = vpop.f32.mrb[0].mxu0
      %3944 = vmatprep.mubr.bf16.mxu0 0
      %3945 = vmatmul.mubr.bf16.gmra.mrb[0].mxu0 %v3822
      %v3946 = vpop.f32.mrb[0].mxu0
      %v3947 = vadd.f32 %v3795, %v3946
      %v3948 = vpop.f32.mrb[0].mxu0
      %v3949 = vpop.f32.mrb[0].mxu0
      %v3950 = vadd.f32 %v3795, %v3949
      %v3951 = vpop.f32.mrb[0].mxu0
      %3952 = vmatprep.mubr.bf16.mxu0 0
      %3953 = vmatmul.mubr.bf16.gmra.mrb[0].mxu0 %v3825
      %v3954 = vpop.f32.mrb[0].mxu0
      %v3955 = vadd.f32 %v3795, %v3954
      %v3956 = vpop.f32.mrb[0].mxu0
      %v3957 = vpop.f32.mrb[0].mxu0
      %v3958 = vadd.f32 %v3795, %v3957
      %v3959 = vpop.f32.mrb[0].mxu0
      %3960 = vmatprep.mubr.bf16.mxu0 0
      %3961 = vmatmul.mubr.bf16.gmra.mrb[0].mxu0 %v3828
      %v3962 = vpop.f32.mrb[0].mxu0
      %v3963 = vadd.f32 %v3795, %v3962
      %v3964 = vpop.f32.mrb[0].mxu0
      %v3965 = vpop.f32.mrb[0].mxu0
      %v3966 = vadd.f32 %v3795, %v3965
      %v3967 = vpop.f32.mrb[0].mxu0
      %3968 = vmatprep.mubr.bf16.mxu0 0
      %3969 = vmatmul.mubr.bf16.gmra.mrb[0].mxu0 %v3831
      %v3970 = vpop.f32.mrb[0].mxu0
      %v3971 = vadd.f32 %v3795, %v3970
      %v3972 = vpop.f32.mrb[0].mxu0
      %v3973 = vpop.f32.mrb[0].mxu0
      %v3974 = vadd.f32 %v3795, %v3973
      %v3975 = vpop.f32.mrb[0].mxu0
      %3976 = vmatprep.mubr.bf16.mxu0 0
      %3977 = vmatmul.mubr.bf16.gmra.mrb[0].mxu0 %v3834
      %v3978 = vpop.f32.mrb[0].mxu0
      %v3979 = vadd.f32 %v3795, %v3978
      %v3980 = vpop.f32.mrb[0].mxu0
      %v3981 = vpop.f32.mrb[0].mxu0
      %v3982 = vadd.f32 %v3795, %v3981
      %v3983 = vpop.f32.mrb[0].mxu0
      %3984 = vmatprep.mubr.bf16.mxu0 0
      %3985 = vmatmul.mubr.bf16.gmra.mrb[0].mxu0 %v3837
      %v3986 = vpop.f32.mrb[0].mxu0
      %v3987 = vadd.f32 %v3795, %v3986
      %v3988 = vpop.f32.mrb[0].mxu0
      %v3989 = vpop.f32.mrb[0].mxu0
      %v3990 = vadd.f32 %v3795, %v3989
      %v3991 = vpop.f32.mrb[0].mxu0
      %3992 = vmatprep.mubr.bf16.mxu0 0
      %3993 = vmatmul.mubr.bf16.gmra.mrb[0].mxu0 %v3840
      %v3994 = vpop.f32.mrb[0].mxu0
      %v3995 = vadd.f32 %v3795, %v3994
      %v3996 = vpop.f32.mrb[0].mxu0
      %v3997 = vpop.f32.mrb[0].mxu0
      %v3998 = vadd.f32 %v3795, %v3997
      %v3999 = vpop.f32.mrb[0].mxu0
      %4000 = vmatprep.mubr.bf16.mxu0 0
      %4001 = vmatmul.mubr.bf16.gmra.mrb[0].mxu0 %v3843
      %v4002 = vpop.f32.mrb[0].mxu0
      %v4003 = vadd.f32 %v3795, %v4002
      %v4004 = vpop.f32.mrb[0].mxu0
      %v4005 = vpop.f32.mrb[0].mxu0
      %v4006 = vadd.f32 %v3795, %v4005
      %v4007 = vpop.f32.mrb[0].mxu0
      %4008 = vdwg.mxu0
      %vm4009 = vcmp.gt.f32.partialorder %v3883, 0.0
      %vm4010 = vcmp.gt.f32.partialorder %v3886, 0.0
      %vm4011 = vcmp.gt.f32.partialorder %v3891, 0.0
      %vm4012 = vcmp.gt.f32.partialorder %v3894, 0.0
      %vm4013 = vcmp.gt.f32.partialorder %v3899, 0.0
      %vm4014 = vcmp.gt.f32.partialorder %v3902, 0.0
      %vm4015 = vcmp.gt.f32.partialorder %v3907, 0.0
      %vm4016 = vcmp.gt.f32.partialorder %v3910, 0.0
      %vm4017 = vcmp.gt.f32.partialorder %v3915, 0.0
      %vm4018 = vcmp.gt.f32.partialorder %v3918, 0.0
      %vm4019 = vcmp.gt.f32.partialorder %v3923, 0.0
      %vm4020 = vcmp.gt.f32.partialorder %v3926, 0.0
      %vm4021 = vcmp.gt.f32.partialorder %v3931, 0.0
      %vm4022 = vcmp.gt.f32.partialorder %v3934, 0.0
      %vm4023 = vcmp.gt.f32.partialorder %v3939, 0.0
      %vm4024 = vcmp.gt.f32.partialorder %v3942, 0.0
      %vm4025 = vcmp.gt.f32.partialorder %v3947, 0.0
      %vm4026 = vcmp.gt.f32.partialorder %v3950, 0.0
      %vm4027 = vcmp.gt.f32.partialorder %v3955, 0.0
      %vm4028 = vcmp.gt.f32.partialorder %v3958, 0.0
      %vm4029 = vcmp.gt.f32.partialorder %v3963, 0.0
      %vm4030 = vcmp.gt.f32.partialorder %v3966, 0.0
      %vm4031 = vcmp.gt.f32.partialorder %v3971, 0.0
      %vm4032 = vcmp.gt.f32.partialorder %v3974, 0.0
      %vm4033 = vcmp.gt.f32.partialorder %v3979, 0.0
      %vm4034 = vcmp.gt.f32.partialorder %v3982, 0.0
      %vm4035 = vcmp.gt.f32.partialorder %v3987, 0.0
      %vm4036 = vcmp.gt.f32.partialorder %v3990, 0.0
      %vm4037 = vcmp.gt.f32.partialorder %v3995, 0.0
      %vm4038 = vcmp.gt.f32.partialorder %v3998, 0.0
      %vm4039 = vcmp.gt.f32.partialorder %v4003, 0.0
      %vm4040 = vcmp.gt.f32.partialorder %v4006, 0.0
      %v4041 = vmul.f32 %v3883, 0.1
      %v4042 = vmul.f32 %v3886, 0.1
      %v4043 = vmul.f32 %v3891, 0.1
      %v4044 = vmul.f32 %v3894, 0.1
      %v4045 = vmul.f32 %v3899, 0.1
      %v4046 = vmul.f32 %v3902, 0.1
      %v4047 = vmul.f32 %v3907, 0.1
      %v4048 = vmul.f32 %v3910, 0.1
      %v4049 = vmul.f32 %v3915, 0.1
      %v4050 = vmul.f32 %v3918, 0.1
      %v4051 = vmul.f32 %v3923, 0.1
      %v4052 = vmul.f32 %v3926, 0.1
      %v4053 = vmul.f32 %v3931, 0.1
      %v4054 = vmul.f32 %v3934, 0.1
      %v4055 = vmul.f32 %v3939, 0.1
      %v4056 = vmul.f32 %v3942, 0.1
      %v4057 = vmul.f32 %v3947, 0.1
      %v4058 = vmul.f32 %v3950, 0.1
      %v4059 = vmul.f32 %v3955, 0.1
      %v4060 = vmul.f32 %v3958, 0.1
      %v4061 = vmul.f32 %v3963, 0.1
      %v4062 = vmul.f32 %v3966, 0.1
      %v4063 = vmul.f32 %v3971, 0.1
      %v4064 = vmul.f32 %v3974, 0.1
      %v4065 = vmul.f32 %v3979, 0.1
      %v4066 = vmul.f32 %v3982, 0.1
      %v4067 = vmul.f32 %v3987, 0.1
      %v4068 = vmul.f32 %v3990, 0.1
      %v4069 = vmul.f32 %v3995, 0.1
      %v4070 = vmul.f32 %v3998, 0.1
      %v4071 = vmul.f32 %v4003, 0.1
      %v4072 = vmul.f32 %v4006, 0.1
      %v4073 = vsel %vm4009, %v3883, %v4041
      %v4074 = vsel %vm4010, %v3886, %v4042
      %v4075 = vsel %vm4011, %v3891, %v4043
      %v4076 = vsel %vm4012, %v3894, %v4044
      %v4077 = vsel %vm4013, %v3899, %v4045
      %v4078 = vsel %vm4014, %v3902, %v4046
      %v4079 = vsel %vm4015, %v3907, %v4047
      %v4080 = vsel %vm4016, %v3910, %v4048
      %v4081 = vsel %vm4017, %v3915, %v4049
      %v4082 = vsel %vm4018, %v3918, %v4050
      %v4083 = vsel %vm4019, %v3923, %v4051
      %v4084 = vsel %vm4020, %v3926, %v4052
      %v4085 = vsel %vm4021, %v3931, %v4053
      %v4086 = vsel %vm4022, %v3934, %v4054
      %v4087 = vsel %vm4023, %v3939, %v4055
      %v4088 = vsel %vm4024, %v3942, %v4056
      %v4089 = vsel %vm4025, %v3947, %v4057
      %v4090 = vsel %vm4026, %v3950, %v4058
      %v4091 = vsel %vm4027, %v3955, %v4059
      %v4092 = vsel %vm4028, %v3958, %v4060
      %v4093 = vsel %vm4029, %v3963, %v4061
      %v4094 = vsel %vm4030, %v3966, %v4062
      %v4095 = vsel %vm4031, %v3971, %v4063
      %v4096 = vsel %vm4032, %v3974, %v4064
      %v4097 = vsel %vm4033, %v3979, %v4065
      %v4098 = vsel %vm4034, %v3982, %v4066
      %v4099 = vsel %vm4035, %v3987, %v4067
      %v4100 = vsel %vm4036, %v3990, %v4068
      %v4101 = vsel %vm4037, %v3995, %v4069
      %v4102 = vsel %vm4038, %v3998, %v4070
      %v4103 = vsel %vm4039, %v4003, %v4071
      %v4104 = vsel %vm4040, %v4006, %v4072
      %v4105 = vpack.c.bf16 %v4074, %v4073
      %v4106 = vpack.c.bf16 %v4076, %v4075
      %v4107 = vpack.c.bf16 %v4078, %v4077
      %v4108 = vpack.c.bf16 %v4080, %v4079
      %v4109 = vpack.c.bf16 %v4082, %v4081
      %v4110 = vpack.c.bf16 %v4084, %v4083
      %v4111 = vpack.c.bf16 %v4086, %v4085
      %v4112 = vpack.c.bf16 %v4088, %v4087
      %v4113 = vpack.c.bf16 %v4090, %v4089
      %v4114 = vpack.c.bf16 %v4092, %v4091
      %v4115 = vpack.c.bf16 %v4094, %v4093
      %v4116 = vpack.c.bf16 %v4096, %v4095
      %v4117 = vpack.c.bf16 %v4098, %v4097
      %v4118 = vpack.c.bf16 %v4100, %v4099
      %v4119 = vpack.c.bf16 %v4102, %v4101
      %v4120 = vpack.c.bf16 %v4104, %v4103
      %v4137 = vunpack.c.l.b16 %v4105
      %v4138 = vunpack.c.h.b16 %v4105
      %v4139 = vunpack.c.l.b16 %v4106
      %v4140 = vunpack.c.h.b16 %v4106
      %v4141 = vunpack.c.l.b16 %v4107
      %v4142 = vunpack.c.h.b16 %v4107
      %v4143 = vunpack.c.l.b16 %v4108
      %v4144 = vunpack.c.h.b16 %v4108
      %v4145 = vunpack.c.l.b16 %v4109
      %v4146 = vunpack.c.h.b16 %v4109
      %v4147 = vunpack.c.l.b16 %v4110
      %v4148 = vunpack.c.h.b16 %v4110
      %v4149 = vunpack.c.l.b16 %v4111
      %v4150 = vunpack.c.h.b16 %v4111
      %v4151 = vunpack.c.l.b16 %v4112
      %v4152 = vunpack.c.h.b16 %v4112
      %v4153 = vunpack.c.l.b16 %v4113
      %v4154 = vunpack.c.h.b16 %v4113
      %v4155 = vunpack.c.l.b16 %v4114
      %v4156 = vunpack.c.h.b16 %v4114
      %v4157 = vunpack.c.l.b16 %v4115
      %v4158 = vunpack.c.h.b16 %v4115
      %v4159 = vunpack.c.l.b16 %v4116
      %v4160 = vunpack.c.h.b16 %v4116
      %v4161 = vunpack.c.l.b16 %v4117
      %v4162 = vunpack.c.h.b16 %v4117
      %v4163 = vunpack.c.l.b16 %v4118
      %v4164 = vunpack.c.h.b16 %v4118
      %v4165 = vunpack.c.l.b16 %v4119
      %v4166 = vunpack.c.h.b16 %v4119
      %v4167 = vunpack.c.l.b16 %v4120
      %v4168 = vunpack.c.h.b16 %v4120
      %v4169 = vpack.c.b16 %v4137, %v4137
      %v4170 = vpack.c.b16 %v4138, %v4138
      %v4171 = vpack.c.b16 %v4139, %v4139
      %v4172 = vpack.c.b16 %v4140, %v4140
      %v4173 = vpack.c.b16 %v4141, %v4141
      %v4174 = vpack.c.b16 %v4142, %v4142
      %v4175 = vpack.c.b16 %v4143, %v4143
      %v4176 = vpack.c.b16 %v4144, %v4144
      %v4177 = vpack.c.b16 %v4145, %v4145
      %v4178 = vpack.c.b16 %v4146, %v4146
      %v4179 = vpack.c.b16 %v4147, %v4147
      %v4180 = vpack.c.b16 %v4148, %v4148
      %v4181 = vpack.c.b16 %v4149, %v4149
      %v4182 = vpack.c.b16 %v4150, %v4150
      %v4183 = vpack.c.b16 %v4151, %v4151
      %v4184 = vpack.c.b16 %v4152, %v4152
      %v4185 = vpack.c.b16 %v4153, %v4153
      %v4186 = vpack.c.b16 %v4154, %v4154
      %v4187 = vpack.c.b16 %v4155, %v4155
      %v4188 = vpack.c.b16 %v4156, %v4156
      %v4189 = vpack.c.b16 %v4157, %v4157
      %v4190 = vpack.c.b16 %v4158, %v4158
      %v4191 = vpack.c.b16 %v4159, %v4159
      %v4192 = vpack.c.b16 %v4160, %v4160
      %v4193 = vpack.c.b16 %v4161, %v4161
      %v4194 = vpack.c.b16 %v4162, %v4162
      %v4195 = vpack.c.b16 %v4163, %v4163
      %v4196 = vpack.c.b16 %v4164, %v4164
      %v4197 = vpack.c.b16 %v4165, %v4165
      %v4198 = vpack.c.b16 %v4166, %v4166
      %v4199 = vpack.c.b16 %v4167, %v4167
      %v4200 = vpack.c.b16 %v4168, %v4168
      %v4202 = vshrl.u32 %v4169, 16
      %v4204 = vrot.slane %v4202, 7
      %v4205 = vshll.u32 %v4169, 16
      %v4207 = vor.u32 %v4204, %v4205
      %v4208 = vrot.slane %v4204, 4
      %v4210 = vshrl.u32 %v4170, 16
      %v4212 = vrot.slane %v4210, 7
      %v4213 = vshll.u32 %v4170, 16
      %v4215 = vor.u32 %v4212, %v4213
      %v4216 = vsel %vm875, %v4208, %v4215
      %v4217 = vrot.slane %v4212, 4
      %v4219 = vshrl.u32 %v4171, 16
      %v4221 = vrot.slane %v4219, 7
      %v4222 = vshll.u32 %v4171, 16
      %v4224 = vor.u32 %v4221, %v4222
      %v4225 = vrot.slane %v4221, 4
      %v4227 = vshrl.u32 %v4172, 16
      %v4229 = vrot.slane %v4227, 7
      %v4230 = vshll.u32 %v4172, 16
      %v4232 = vor.u32 %v4229, %v4230
      %v4233 = vsel %vm875, %v4225, %v4232
      %v4234 = vrot.slane %v4229, 4
      %v4236 = vshrl.u32 %v4173, 16
      %v4238 = vrot.slane %v4236, 7
      %v4239 = vshll.u32 %v4173, 16
      %v4241 = vor.u32 %v4238, %v4239
      %v4242 = vrot.slane %v4238, 4
      %v4244 = vshrl.u32 %v4174, 16
      %v4246 = vrot.slane %v4244, 7
      %v4247 = vshll.u32 %v4174, 16
      %v4249 = vor.u32 %v4246, %v4247
      %v4250 = vsel %vm875, %v4242, %v4249
      %v4251 = vrot.slane %v4246, 4
      %v4253 = vshrl.u32 %v4175, 16
      %v4255 = vrot.slane %v4253, 7
      %v4256 = vshll.u32 %v4175, 16
      %v4258 = vor.u32 %v4255, %v4256
      %v4259 = vrot.slane %v4255, 4
      %v4261 = vshrl.u32 %v4176, 16
      %v4263 = vrot.slane %v4261, 7
      %v4264 = vshll.u32 %v4176, 16
      %v4266 = vor.u32 %v4263, %v4264
      %v4267 = vsel %vm875, %v4259, %v4266
      %v4268 = vrot.slane %v4263, 4
      %v4270 = vshrl.u32 %v4177, 16
      %v4272 = vrot.slane %v4270, 7
      %v4273 = vshll.u32 %v4177, 16
      %v4275 = vor.u32 %v4272, %v4273
      %v4276 = vrot.slane %v4272, 4
      %v4278 = vshrl.u32 %v4178, 16
      %v4280 = vrot.slane %v4278, 7
      %v4281 = vshll.u32 %v4178, 16
      %v4283 = vor.u32 %v4280, %v4281
      %v4284 = vsel %vm875, %v4276, %v4283
      %v4285 = vrot.slane %v4280, 4
      %v4287 = vshrl.u32 %v4179, 16
      %v4289 = vrot.slane %v4287, 7
      %v4290 = vshll.u32 %v4179, 16
      %v4292 = vor.u32 %v4289, %v4290
      %v4293 = vrot.slane %v4289, 4
      %v4295 = vshrl.u32 %v4180, 16
      %v4297 = vrot.slane %v4295, 7
      %v4298 = vshll.u32 %v4180, 16
      %v4300 = vor.u32 %v4297, %v4298
      %v4301 = vsel %vm875, %v4293, %v4300
      %v4302 = vrot.slane %v4297, 4
      %v4304 = vshrl.u32 %v4181, 16
      %v4306 = vrot.slane %v4304, 7
      %v4307 = vshll.u32 %v4181, 16
      %v4309 = vor.u32 %v4306, %v4307
      %v4310 = vrot.slane %v4306, 4
      %v4312 = vshrl.u32 %v4182, 16
      %v4314 = vrot.slane %v4312, 7
      %v4315 = vshll.u32 %v4182, 16
      %v4317 = vor.u32 %v4314, %v4315
      %v4318 = vsel %vm875, %v4310, %v4317
      %v4319 = vrot.slane %v4314, 4
      %v4321 = vshrl.u32 %v4183, 16
      %v4323 = vrot.slane %v4321, 7
      %v4324 = vshll.u32 %v4183, 16
      %v4326 = vor.u32 %v4323, %v4324
      %v4327 = vrot.slane %v4323, 4
      %v4329 = vshrl.u32 %v4184, 16
      %v4331 = vrot.slane %v4329, 7
      %v4332 = vshll.u32 %v4184, 16
      %v4334 = vor.u32 %v4331, %v4332
      %v4335 = vsel %vm875, %v4327, %v4334
      %v4336 = vrot.slane %v4331, 4
      %v4338 = vshrl.u32 %v4185, 16
      %v4340 = vrot.slane %v4338, 7
      %v4341 = vshll.u32 %v4185, 16
      %v4343 = vor.u32 %v4340, %v4341
      %v4344 = vrot.slane %v4340, 4
      %v4346 = vshrl.u32 %v4186, 16
      %v4348 = vrot.slane %v4346, 7
      %v4349 = vshll.u32 %v4186, 16
      %v4351 = vor.u32 %v4348, %v4349
      %v4352 = vsel %vm875, %v4344, %v4351
      %v4353 = vrot.slane %v4348, 4
      %v4355 = vshrl.u32 %v4187, 16
      %v4357 = vrot.slane %v4355, 7
      %v4358 = vshll.u32 %v4187, 16
      %v4360 = vor.u32 %v4357, %v4358
      %v4361 = vrot.slane %v4357, 4
      %v4363 = vshrl.u32 %v4188, 16
      %v4365 = vrot.slane %v4363, 7
      %v4366 = vshll.u32 %v4188, 16
      %v4368 = vor.u32 %v4365, %v4366
      %v4369 = vsel %vm875, %v4361, %v4368
      %v4370 = vrot.slane %v4365, 4
      %v4372 = vshrl.u32 %v4189, 16
      %v4374 = vrot.slane %v4372, 7
      %v4375 = vshll.u32 %v4189, 16
      %v4377 = vor.u32 %v4374, %v4375
      %v4378 = vrot.slane %v4374, 4
      %v4380 = vshrl.u32 %v4190, 16
      %v4382 = vrot.slane %v4380, 7
      %v4383 = vshll.u32 %v4190, 16
      %v4385 = vor.u32 %v4382, %v4383
      %v4386 = vsel %vm875, %v4378, %v4385
      %v4387 = vrot.slane %v4382, 4
      %v4389 = vshrl.u32 %v4191, 16
      %v4391 = vrot.slane %v4389, 7
      %v4392 = vshll.u32 %v4191, 16
      %v4394 = vor.u32 %v4391, %v4392
      %v4395 = vrot.slane %v4391, 4
      %v4397 = vshrl.u32 %v4192, 16
      %v4399 = vrot.slane %v4397, 7
      %v4400 = vshll.u32 %v4192, 16
      %v4402 = vor.u32 %v4399, %v4400
      %v4403 = vsel %vm875, %v4395, %v4402
      %v4404 = vrot.slane %v4399, 4
      %v4406 = vshrl.u32 %v4193, 16
      %v4408 = vrot.slane %v4406, 7
      %v4409 = vshll.u32 %v4193, 16
      %v4411 = vor.u32 %v4408, %v4409
      %v4412 = vrot.slane %v4408, 4
      %v4414 = vshrl.u32 %v4194, 16
      %v4416 = vrot.slane %v4414, 7
      %v4417 = vshll.u32 %v4194, 16
      %v4419 = vor.u32 %v4416, %v4417
      %v4420 = vsel %vm875, %v4412, %v4419
      %v4421 = vrot.slane %v4416, 4
      %v4423 = vshrl.u32 %v4195, 16
      %v4425 = vrot.slane %v4423, 7
      %v4426 = vshll.u32 %v4195, 16
      %v4428 = vor.u32 %v4425, %v4426
      %v4429 = vrot.slane %v4425, 4
      %v4431 = vshrl.u32 %v4196, 16
      %v4433 = vrot.slane %v4431, 7
      %v4434 = vshll.u32 %v4196, 16
      %v4436 = vor.u32 %v4433, %v4434
      %v4437 = vsel %vm875, %v4429, %v4436
      %v4438 = vrot.slane %v4433, 4
      %v4440 = vshrl.u32 %v4197, 16
      %v4442 = vrot.slane %v4440, 7
      %v4443 = vshll.u32 %v4197, 16
      %v4445 = vor.u32 %v4442, %v4443
      %v4446 = vrot.slane %v4442, 4
      %v4448 = vshrl.u32 %v4198, 16
      %v4450 = vrot.slane %v4448, 7
      %v4451 = vshll.u32 %v4198, 16
      %v4453 = vor.u32 %v4450, %v4451
      %v4454 = vsel %vm875, %v4446, %v4453
      %v4455 = vrot.slane %v4450, 4
      %v4457 = vshrl.u32 %v4199, 16
      %v4459 = vrot.slane %v4457, 7
      %v4460 = vshll.u32 %v4199, 16
      %v4462 = vor.u32 %v4459, %v4460
      %v4463 = vrot.slane %v4459, 4
      %v4465 = vshrl.u32 %v4200, 16
      %v4467 = vrot.slane %v4465, 7
      %v4468 = vshll.u32 %v4200, 16
      %v4470 = vor.u32 %v4467, %v4468
      %v4471 = vsel %vm875, %v4463, %v4470
      %v4472 = vrot.slane %v4467, 4
      %v4521 = vsel %vm1198, %v4207, %v1861
      %4522 = vst [vmem:[%s1196] sm:$0xf] %v4521
      %4523 = vst.msk [vmem:[%s1196 + $0x4] sm:$0xf] %vm226, %v4216
      %v4524 = vld [vmem:[%s1196 + $0x8] sm:$0x1]
      %v4525 = vsel %vm237, %v4217, %v4524
      %4526 = vst [vmem:[%s1196 + $0x8] sm:$0x1] %v4525
      %v4527 = vld [vmem:[%s1196 + $0xc] sm:$0xf]
      %v4528 = vsel %vm1198, %v4224, %v4527
      %4529 = vst [vmem:[%s1196 + $0xc] sm:$0xf] %v4528
      %4530 = vst.msk [vmem:[%s1196 + $0x10] sm:$0xf] %vm226, %v4233
      %v4531 = vld [vmem:[%s1196 + $0x14] sm:$0x1]
      %v4532 = vsel %vm237, %v4234, %v4531
      %4533 = vst [vmem:[%s1196 + $0x14] sm:$0x1] %v4532
      %v4534 = vld [vmem:[%s1196 + $0x18] sm:$0xf]
      %v4535 = vsel %vm1198, %v4241, %v4534
      %4536 = vst [vmem:[%s1196 + $0x18] sm:$0xf] %v4535
      %4537 = vst.msk [vmem:[%s1196 + $0x1c] sm:$0xf] %vm226, %v4250
      %v4538 = vld [vmem:[%s1196 + $0x20] sm:$0x1]
      %v4539 = vsel %vm237, %v4251, %v4538
      %4540 = vst [vmem:[%s1196 + $0x20] sm:$0x1] %v4539
      %v4541 = vld [vmem:[%s1196 + $0x24] sm:$0xf]
      %v4542 = vsel %vm1198, %v4258, %v4541
      %4543 = vst [vmem:[%s1196 + $0x24] sm:$0xf] %v4542
      %4544 = vst.msk [vmem:[%s1196 + $0x28] sm:$0xf] %vm226, %v4267
      %v4545 = vld [vmem:[%s1196 + $0x2c] sm:$0x1]
      %v4546 = vsel %vm237, %v4268, %v4545
      %4547 = vst [vmem:[%s1196 + $0x2c] sm:$0x1] %v4546
      %v4548 = vld [vmem:[%s1196 + $0x30] sm:$0xf]
      %v4549 = vsel %vm1198, %v4275, %v4548
      %4550 = vst [vmem:[%s1196 + $0x30] sm:$0xf] %v4549
      %4551 = vst.msk [vmem:[%s1196 + $0x34] sm:$0xf] %vm226, %v4284
      %v4552 = vld [vmem:[%s1196 + $0x38] sm:$0x1]
      %v4553 = vsel %vm237, %v4285, %v4552
      %4554 = vst [vmem:[%s1196 + $0x38] sm:$0x1] %v4553
      %v4555 = vld [vmem:[%s1196 + $0x3c] sm:$0xf]
      %v4556 = vsel %vm1198, %v4292, %v4555
      %4557 = vst [vmem:[%s1196 + $0x3c] sm:$0xf] %v4556
      %4558 = vst.msk [vmem:[%s1196 + $0x40] sm:$0xf] %vm226, %v4301
      %v4559 = vld [vmem:[%s1196 + $0x44] sm:$0x1]
      %v4560 = vsel %vm237, %v4302, %v4559
      %4561 = vst [vmem:[%s1196 + $0x44] sm:$0x1] %v4560
      %v4562 = vld [vmem:[%s1196 + $0x48] sm:$0xf]
      %v4563 = vsel %vm1198, %v4309, %v4562
      %4564 = vst [vmem:[%s1196 + $0x48] sm:$0xf] %v4563
      %4565 = vst.msk [vmem:[%s1196 + $0x4c] sm:$0xf] %vm226, %v4318
      %v4566 = vld [vmem:[%s1196 + $0x50] sm:$0x1]
      %v4567 = vsel %vm237, %v4319, %v4566
      %4568 = vst [vmem:[%s1196 + $0x50] sm:$0x1] %v4567
      %v4569 = vld [vmem:[%s1196 + $0x54] sm:$0xf]
      %v4570 = vsel %vm1198, %v4326, %v4569
      %4571 = vst [vmem:[%s1196 + $0x54] sm:$0xf] %v4570
      %4572 = vst.msk [vmem:[%s1196 + $0x58] sm:$0xf] %vm226, %v4335
      %v4573 = vld [vmem:[%s1196 + $0x5c] sm:$0x1]
      %v4574 = vsel %vm237, %v4336, %v4573
      %4575 = vst [vmem:[%s1196 + $0x5c] sm:$0x1] %v4574
      %v4576 = vld [vmem:[%s1196 + $0x60] sm:$0xf]
      %v4577 = vsel %vm1198, %v4343, %v4576
      %4578 = vst [vmem:[%s1196 + $0x60] sm:$0xf] %v4577
      %4579 = vst.msk [vmem:[%s1196 + $0x64] sm:$0xf] %vm226, %v4352
      %v4580 = vld [vmem:[%s1196 + $0x68] sm:$0x1]
      %v4581 = vsel %vm237, %v4353, %v4580
      %4582 = vst [vmem:[%s1196 + $0x68] sm:$0x1] %v4581
      %v4583 = vld [vmem:[%s1196 + $0x6c] sm:$0xf]
      %v4584 = vsel %vm1198, %v4360, %v4583
      %4585 = vst [vmem:[%s1196 + $0x6c] sm:$0xf] %v4584
      %4586 = vst.msk [vmem:[%s1196 + $0x70] sm:$0xf] %vm226, %v4369
      %v4587 = vld [vmem:[%s1196 + $0x74] sm:$0x1]
      %v4588 = vsel %vm237, %v4370, %v4587
      %4589 = vst [vmem:[%s1196 + $0x74] sm:$0x1] %v4588
      %v4590 = vld [vmem:[%s1196 + $0x78] sm:$0xf]
      %v4591 = vsel %vm1198, %v4377, %v4590
      %4592 = vst [vmem:[%s1196 + $0x78] sm:$0xf] %v4591
      %4593 = vst.msk [vmem:[%s1196 + $0x7c] sm:$0xf] %vm226, %v4386
      %v4594 = vld [vmem:[%s1196 + $0x80] sm:$0x1]
      %v4595 = vsel %vm237, %v4387, %v4594
      %4596 = vst [vmem:[%s1196 + $0x80] sm:$0x1] %v4595
      %v4597 = vld [vmem:[%s1196 + $0x84] sm:$0xf]
      %v4598 = vsel %vm1198, %v4394, %v4597
      %4599 = vst [vmem:[%s1196 + $0x84] sm:$0xf] %v4598
      %4600 = vst.msk [vmem:[%s1196 + $0x88] sm:$0xf] %vm226, %v4403
      %v4601 = vld [vmem:[%s1196 + $0x8c] sm:$0x1]
      %v4602 = vsel %vm237, %v4404, %v4601
      %4603 = vst [vmem:[%s1196 + $0x8c] sm:$0x1] %v4602
      %v4604 = vld [vmem:[%s1196 + $0x90] sm:$0xf]
      %v4605 = vsel %vm1198, %v4411, %v4604
      %4606 = vst [vmem:[%s1196 + $0x90] sm:$0xf] %v4605
      %4607 = vst.msk [vmem:[%s1196 + $0x94] sm:$0xf] %vm226, %v4420
      %v4608 = vld [vmem:[%s1196 + $0x98] sm:$0x1]
      %v4609 = vsel %vm237, %v4421, %v4608
      %4610 = vst [vmem:[%s1196 + $0x98] sm:$0x1] %v4609
      %v4611 = vld [vmem:[%s1196 + $0x9c] sm:$0xf]
      %v4612 = vsel %vm1198, %v4428, %v4611
      %4613 = vst [vmem:[%s1196 + $0x9c] sm:$0xf] %v4612
      %4614 = vst.msk [vmem:[%s1196 + $0xa0] sm:$0xf] %vm226, %v4437
      %v4615 = vld [vmem:[%s1196 + $0xa4] sm:$0x1]
      %v4616 = vsel %vm237, %v4438, %v4615
      %4617 = vst [vmem:[%s1196 + $0xa4] sm:$0x1] %v4616
      %v4618 = vld [vmem:[%s1196 + $0xa8] sm:$0xf]
      %v4619 = vsel %vm1198, %v4445, %v4618
      %4620 = vst [vmem:[%s1196 + $0xa8] sm:$0xf] %v4619
      %4621 = vst.msk [vmem:[%s1196 + $0xac] sm:$0xf] %vm226, %v4454
      %v4622 = vld [vmem:[%s1196 + $0xb0] sm:$0x1]
      %v4623 = vsel %vm237, %v4455, %v4622
      %4624 = vst [vmem:[%s1196 + $0xb0] sm:$0x1] %v4623
      %v4625 = vld [vmem:[%s1196 + $0xb4] sm:$0xf]
      %v4626 = vsel %vm1198, %v4462, %v4625
      %4627 = vst [vmem:[%s1196 + $0xb4] sm:$0xf] %v4626
      %4628 = vst.msk [vmem:[%s1196 + $0xb8] sm:$0xf] %vm226, %v4471
      %v4629 = vld [vmem:[%s1196 + $0xbc] sm:$0x1]
      %v4630 = vsel %vm237, %v4472, %v4629
      %4631 = vst [vmem:[%s1196 + $0xbc] sm:$0x1] %v4630
      %s4632 = scalar_lea.vmem %s2, 12
      %v4633 = vld [vmem:[%s4632] sm:$0x7]
      %v4634 = vld [vmem:[%s4632 + $0x4] sm:$0x7]
      %v4635 = vld [vmem:[%s4632 + $0x8] sm:$0x7]
      %v4636 = vld [vmem:[#allocation2] sm:$0xf]
      %v4637 = vld [vmem:[#allocation2 + $0x4] sm:$0xf]
      %v4638 = vld [vmem:[#allocation2 + $0x8] sm:$0x1]
      %v4639 = vld [vmem:[#allocation2 + $0xc] sm:$0xf]
      %v4640 = vld [vmem:[#allocation2 + $0x10] sm:$0xf]
      %v4641 = vld [vmem:[#allocation2 + $0x14] sm:$0x1]
      %v4642 = vld [vmem:[#allocation2 + $0x18] sm:$0xf]
      %v4643 = vld [vmem:[#allocation2 + $0x1c] sm:$0xf]
      %v4644 = vld [vmem:[#allocation2 + $0x20] sm:$0x1]
      %v4645 = vld [vmem:[#allocation2 + $0x24] sm:$0xf]
      %v4646 = vld [vmem:[#allocation2 + $0x28] sm:$0xf]
      %v4647 = vld [vmem:[#allocation2 + $0x2c] sm:$0x1]
      %v4648 = vld [vmem:[#allocation2 + $0x30] sm:$0xf]
      %v4649 = vld [vmem:[#allocation2 + $0x34] sm:$0xf]
      %v4650 = vld [vmem:[#allocation2 + $0x38] sm:$0x1]
      %v4651 = vld [vmem:[#allocation2 + $0x3c] sm:$0xf]
      %v4652 = vld [vmem:[#allocation2 + $0x40] sm:$0xf]
      %v4653 = vld [vmem:[#allocation2 + $0x44] sm:$0x1]
      %v4654 = vld [vmem:[#allocation2 + $0x48] sm:$0xf]
      %v4655 = vld [vmem:[#allocation2 + $0x4c] sm:$0xf]
      %v4656 = vld [vmem:[#allocation2 + $0x50] sm:$0x1]
      %v4657 = vld [vmem:[#allocation2 + $0x54] sm:$0xf]
      %v4658 = vld [vmem:[#allocation2 + $0x58] sm:$0xf]
      %v4659 = vld [vmem:[#allocation2 + $0x5c] sm:$0x1]
      %v4660 = vld [vmem:[#allocation2 + $0x60] sm:$0xf]
      %v4661 = vld [vmem:[#allocation2 + $0x64] sm:$0xf]
      %v4662 = vld [vmem:[#allocation2 + $0x68] sm:$0x1]
      %v4663 = vld [vmem:[#allocation2 + $0x6c] sm:$0xf]
      %v4664 = vld [vmem:[#allocation2 + $0x70] sm:$0xf]
      %v4665 = vld [vmem:[#allocation2 + $0x74] sm:$0x1]
      %v4666 = vld [vmem:[#allocation2 + $0x78] sm:$0xf]
      %v4667 = vld [vmem:[#allocation2 + $0x7c] sm:$0xf]
      %v4668 = vld [vmem:[#allocation2 + $0x80] sm:$0x1]
      %v4669 = vld [vmem:[#allocation2 + $0x84] sm:$0xf]
      %v4670 = vld [vmem:[#allocation2 + $0x88] sm:$0xf]
      %v4671 = vld [vmem:[#allocation2 + $0x8c] sm:$0x1]
      %v4672 = vld [vmem:[#allocation2 + $0x90] sm:$0xf]
      %v4673 = vld [vmem:[#allocation2 + $0x94] sm:$0xf]
      %v4674 = vld [vmem:[#allocation2 + $0x98] sm:$0x1]
      %v4675 = vld [vmem:[#allocation2 + $0x9c] sm:$0xf]
      %v4676 = vld [vmem:[#allocation2 + $0xa0] sm:$0xf]
      %v4677 = vld [vmem:[#allocation2 + $0xa4] sm:$0x1]
      %v4678 = vld [vmem:[#allocation2 + $0xa8] sm:$0xf]
      %v4679 = vld [vmem:[#allocation2 + $0xac] sm:$0xf]
      %v4680 = vld [vmem:[#allocation2 + $0xb0] sm:$0x1]
      %v4681 = vld [vmem:[#allocation2 + $0xb4] sm:$0xf]
      %v4682 = vld [vmem:[#allocation2 + $0xb8] sm:$0xf]
      %v4683 = vld [vmem:[#allocation2 + $0xbc] sm:$0x1]
      %v4716 = vunpack.c.l.b16 %v4636
      %v4717 = vunpack.c.l.b16 %v4637
      %v4718 = vunpack.c.l.b16 %v4639
      %v4719 = vunpack.c.l.b16 %v4640
      %v4720 = vunpack.c.l.b16 %v4642
      %v4721 = vunpack.c.l.b16 %v4643
      %v4722 = vunpack.c.l.b16 %v4645
      %v4723 = vunpack.c.l.b16 %v4646
      %v4724 = vunpack.c.l.b16 %v4648
      %v4725 = vunpack.c.l.b16 %v4649
      %v4726 = vunpack.c.l.b16 %v4651
      %v4727 = vunpack.c.l.b16 %v4652
      %v4728 = vunpack.c.l.b16 %v4654
      %v4729 = vunpack.c.l.b16 %v4655
      %v4730 = vunpack.c.l.b16 %v4657
      %v4731 = vunpack.c.l.b16 %v4658
      %v4732 = vunpack.c.l.b16 %v4660
      %v4733 = vunpack.c.l.b16 %v4661
      %v4734 = vunpack.c.l.b16 %v4663
      %v4735 = vunpack.c.l.b16 %v4664
      %v4736 = vunpack.c.l.b16 %v4666
      %v4737 = vunpack.c.l.b16 %v4667
      %v4738 = vunpack.c.l.b16 %v4669
      %v4739 = vunpack.c.l.b16 %v4670
      %v4740 = vunpack.c.l.b16 %v4672
      %v4741 = vunpack.c.l.b16 %v4673
      %v4742 = vunpack.c.l.b16 %v4675
      %v4743 = vunpack.c.l.b16 %v4676
      %v4744 = vunpack.c.l.b16 %v4678
      %v4745 = vunpack.c.l.b16 %v4679
      %v4746 = vunpack.c.l.b16 %v4681
      %v4747 = vunpack.c.l.b16 %v4682
      %v4748 = vpack.c.b16 %v4717, %v4716
      %v4749 = vpack.c.b16 %v4719, %v4718
      %v4750 = vpack.c.b16 %v4721, %v4720
      %v4751 = vpack.c.b16 %v4723, %v4722
      %v4752 = vpack.c.b16 %v4725, %v4724
      %v4753 = vpack.c.b16 %v4727, %v4726
      %v4754 = vpack.c.b16 %v4729, %v4728
      %v4755 = vpack.c.b16 %v4731, %v4730
      %v4756 = vpack.c.b16 %v4733, %v4732
      %v4757 = vpack.c.b16 %v4735, %v4734
      %v4758 = vpack.c.b16 %v4737, %v4736
      %v4759 = vpack.c.b16 %v4739, %v4738
      %v4760 = vpack.c.b16 %v4741, %v4740
      %v4761 = vpack.c.b16 %v4743, %v4742
      %v4762 = vpack.c.b16 %v4745, %v4744
      %v4763 = vpack.c.b16 %v4747, %v4746
      %v4780 = vunpack.c.l.b16 %v4638
      %v4781 = vunpack.c.l.b16 %v4641
      %v4782 = vunpack.c.l.b16 %v4644
      %v4783 = vunpack.c.l.b16 %v4647
      %v4784 = vunpack.c.l.b16 %v4650
      %v4785 = vunpack.c.l.b16 %v4653
      %v4786 = vunpack.c.l.b16 %v4656
      %v4787 = vunpack.c.l.b16 %v4659
      %v4788 = vunpack.c.l.b16 %v4662
      %v4789 = vunpack.c.l.b16 %v4665
      %v4790 = vunpack.c.l.b16 %v4668
      %v4791 = vunpack.c.l.b16 %v4671
      %v4792 = vunpack.c.l.b16 %v4674
      %v4793 = vunpack.c.l.b16 %v4677
      %v4794 = vunpack.c.l.b16 %v4680
      %v4795 = vunpack.c.l.b16 %v4683
      %v4796 = vpack.c.b16 %v4780, %v4780
      %v4797 = vpack.c.b16 %v4781, %v4781
      %v4798 = vpack.c.b16 %v4782, %v4782
      %v4799 = vpack.c.b16 %v4783, %v4783
      %v4800 = vpack.c.b16 %v4784, %v4784
      %v4801 = vpack.c.b16 %v4785, %v4785
      %v4802 = vpack.c.b16 %v4786, %v4786
      %v4803 = vpack.c.b16 %v4787, %v4787
      %v4804 = vpack.c.b16 %v4788, %v4788
      %v4805 = vpack.c.b16 %v4789, %v4789
      %v4806 = vpack.c.b16 %v4790, %v4790
      %v4807 = vpack.c.b16 %v4791, %v4791
      %v4808 = vpack.c.b16 %v4792, %v4792
      %v4809 = vpack.c.b16 %v4793, %v4793
      %v4810 = vpack.c.b16 %v4794, %v4794
      %v4811 = vpack.c.b16 %v4795, %v4795
      %v4813 = vshrl.u32 %v4748, 16
      %v4815 = vshll.u32 %v4748, 16
      %v4817 = vrot.slane %v4815, 1
      %v4818 = vor.u32 %v4813, %v4817
      %v4820 = vshll.u32 %v4796, 16
      %v4822 = vrot.slane %v4820, 1
      %v4823 = vsel %vm1490, %v4818, %v4822
      %v4825 = vshrl.u32 %v4749, 16
      %v4827 = vshll.u32 %v4749, 16
      %v4829 = vrot.slane %v4827, 1
      %v4830 = vor.u32 %v4825, %v4829
      %v4832 = vshll.u32 %v4797, 16
      %v4834 = vrot.slane %v4832, 1
      %v4835 = vsel %vm1490, %v4830, %v4834
      %v4837 = vshrl.u32 %v4750, 16
      %v4839 = vshll.u32 %v4750, 16
      %v4841 = vrot.slane %v4839, 1
      %v4842 = vor.u32 %v4837, %v4841
      %v4844 = vshll.u32 %v4798, 16
      %v4846 = vrot.slane %v4844, 1
      %v4847 = vsel %vm1490, %v4842, %v4846
      %v4849 = vshrl.u32 %v4751, 16
      %v4851 = vshll.u32 %v4751, 16
      %v4853 = vrot.slane %v4851, 1
      %v4854 = vor.u32 %v4849, %v4853
      %v4856 = vshll.u32 %v4799, 16
      %v4858 = vrot.slane %v4856, 1
      %v4859 = vsel %vm1490, %v4854, %v4858
      %v4861 = vshrl.u32 %v4752, 16
      %v4863 = vshll.u32 %v4752, 16
      %v4865 = vrot.slane %v4863, 1
      %v4866 = vor.u32 %v4861, %v4865
      %v4868 = vshll.u32 %v4800, 16
      %v4870 = vrot.slane %v4868, 1
      %v4871 = vsel %vm1490, %v4866, %v4870
      %v4873 = vshrl.u32 %v4753, 16
      %v4875 = vshll.u32 %v4753, 16
      %v4877 = vrot.slane %v4875, 1
      %v4878 = vor.u32 %v4873, %v4877
      %v4880 = vshll.u32 %v4801, 16
      %v4882 = vrot.slane %v4880, 1
      %v4883 = vsel %vm1490, %v4878, %v4882
      %v4885 = vshrl.u32 %v4754, 16
      %v4887 = vshll.u32 %v4754, 16
      %v4889 = vrot.slane %v4887, 1
      %v4890 = vor.u32 %v4885, %v4889
      %v4892 = vshll.u32 %v4802, 16
      %v4894 = vrot.slane %v4892, 1
      %v4895 = vsel %vm1490, %v4890, %v4894
      %v4897 = vshrl.u32 %v4755, 16
      %v4899 = vshll.u32 %v4755, 16
      %v4901 = vrot.slane %v4899, 1
      %v4902 = vor.u32 %v4897, %v4901
      %v4904 = vshll.u32 %v4803, 16
      %v4906 = vrot.slane %v4904, 1
      %v4907 = vsel %vm1490, %v4902, %v4906
      %v4909 = vshrl.u32 %v4756, 16
      %v4911 = vshll.u32 %v4756, 16
      %v4913 = vrot.slane %v4911, 1
      %v4914 = vor.u32 %v4909, %v4913
      %v4916 = vshll.u32 %v4804, 16
      %v4918 = vrot.slane %v4916, 1
      %v4919 = vsel %vm1490, %v4914, %v4918
      %v4921 = vshrl.u32 %v4757, 16
      %v4923 = vshll.u32 %v4757, 16
      %v4925 = vrot.slane %v4923, 1
      %v4926 = vor.u32 %v4921, %v4925
      %v4928 = vshll.u32 %v4805, 16
      %v4930 = vrot.slane %v4928, 1
      %v4931 = vsel %vm1490, %v4926, %v4930
      %v4933 = vshrl.u32 %v4758, 16
      %v4935 = vshll.u32 %v4758, 16
      %v4937 = vrot.slane %v4935, 1
      %v4938 = vor.u32 %v4933, %v4937
      %v4940 = vshll.u32 %v4806, 16
      %v4942 = vrot.slane %v4940, 1
      %v4943 = vsel %vm1490, %v4938, %v4942
      %v4945 = vshrl.u32 %v4759, 16
      %v4947 = vshll.u32 %v4759, 16
      %v4949 = vrot.slane %v4947, 1
      %v4950 = vor.u32 %v4945, %v4949
      %v4952 = vshll.u32 %v4807, 16
      %v4954 = vrot.slane %v4952, 1
      %v4955 = vsel %vm1490, %v4950, %v4954
      %v4957 = vshrl.u32 %v4760, 16
      %v4959 = vshll.u32 %v4760, 16
      %v4961 = vrot.slane %v4959, 1
      %v4962 = vor.u32 %v4957, %v4961
      %v4964 = vshll.u32 %v4808, 16
      %v4966 = vrot.slane %v4964, 1
      %v4967 = vsel %vm1490, %v4962, %v4966
      %v4969 = vshrl.u32 %v4761, 16
      %v4971 = vshll.u32 %v4761, 16
      %v4973 = vrot.slane %v4971, 1
      %v4974 = vor.u32 %v4969, %v4973
      %v4976 = vshll.u32 %v4809, 16
      %v4978 = vrot.slane %v4976, 1
      %v4979 = vsel %vm1490, %v4974, %v4978
      %v4981 = vshrl.u32 %v4762, 16
      %v4983 = vshll.u32 %v4762, 16
      %v4985 = vrot.slane %v4983, 1
      %v4986 = vor.u32 %v4981, %v4985
      %v4988 = vshll.u32 %v4810, 16
      %v4990 = vrot.slane %v4988, 1
      %v4991 = vsel %vm1490, %v4986, %v4990
      %v4993 = vshrl.u32 %v4763, 16
      %v4995 = vshll.u32 %v4763, 16
      %v4997 = vrot.slane %v4995, 1
      %v4998 = vor.u32 %v4993, %v4997
      %v5000 = vshll.u32 %v4811, 16
      %v5002 = vrot.slane %v5000, 1
      %v5003 = vsel %vm1490, %v4998, %v5002
      %5004 = vrot.lane.b32.xlu0 %v4823, 2
      %v5005 = vpop.permute.xlu0 %5004
      %5006 = vrot.lane.b32.xlu0 %v4835, 2
      %v5007 = vpop.permute.xlu0 %5006
      %5008 = vrot.lane.b32.xlu0 %v4847, 2
      %v5009 = vpop.permute.xlu0 %5008
      %5010 = vrot.lane.b32.xlu0 %v4859, 2
      %v5011 = vpop.permute.xlu0 %5010
      %5012 = vrot.lane.b32.xlu0 %v4871, 2
      %v5013 = vpop.permute.xlu0 %5012
      %5014 = vrot.lane.b32.xlu0 %v4883, 2
      %v5015 = vpop.permute.xlu0 %5014
      %5016 = vrot.lane.b32.xlu0 %v4895, 2
      %v5017 = vpop.permute.xlu0 %5016
      %5018 = vrot.lane.b32.xlu0 %v4907, 2
      %v5019 = vpop.permute.xlu0 %5018
      %5020 = vrot.lane.b32.xlu0 %v4919, 2
      %v5021 = vpop.permute.xlu0 %5020
      %5022 = vrot.lane.b32.xlu0 %v4931, 2
      %v5023 = vpop.permute.xlu0 %5022
      %5024 = vrot.lane.b32.xlu0 %v4943, 2
      %v5025 = vpop.permute.xlu0 %5024
      %5026 = vrot.lane.b32.xlu0 %v4955, 2
      %v5027 = vpop.permute.xlu0 %5026
      %5028 = vrot.lane.b32.xlu0 %v4967, 2
      %v5029 = vpop.permute.xlu0 %5028
      %5030 = vrot.lane.b32.xlu0 %v4979, 2
      %v5031 = vpop.permute.xlu0 %5030
      %5032 = vrot.lane.b32.xlu0 %v4991, 2
      %v5033 = vpop.permute.xlu0 %5032
      %5034 = vrot.lane.b32.xlu0 %v5003, 2
      %v5035 = vpop.permute.xlu0 %5034
      %v5036 = vrot.slane %v4748, 1
      %v5037 = vrot.slane %v4796, 1
      %v5038 = vsel %vm1715, %v5036, %v5037
      %v5039 = vrot.slane %v4749, 1
      %v5040 = vrot.slane %v4797, 1
      %v5041 = vsel %vm1715, %v5039, %v5040
      %v5042 = vrot.slane %v4750, 1
      %v5043 = vrot.slane %v4798, 1
      %v5044 = vsel %vm1715, %v5042, %v5043
      %v5045 = vrot.slane %v4751, 1
      %v5046 = vrot.slane %v4799, 1
      %v5047 = vsel %vm1715, %v5045, %v5046
      %v5048 = vrot.slane %v4752, 1
      %v5049 = vrot.slane %v4800, 1
      %v5050 = vsel %vm1715, %v5048, %v5049
      %v5051 = vrot.slane %v4753, 1
      %v5052 = vrot.slane %v4801, 1
      %v5053 = vsel %vm1715, %v5051, %v5052
      %v5054 = vrot.slane %v4754, 1
      %v5055 = vrot.slane %v4802, 1
      %v5056 = vsel %vm1715, %v5054, %v5055
      %v5057 = vrot.slane %v4755, 1
      %v5058 = vrot.slane %v4803, 1
      %v5059 = vsel %vm1715, %v5057, %v5058
      %v5060 = vrot.slane %v4756, 1
      %v5061 = vrot.slane %v4804, 1
      %v5062 = vsel %vm1715, %v5060, %v5061
      %v5063 = vrot.slane %v4757, 1
      %v5064 = vrot.slane %v4805, 1
      %v5065 = vsel %vm1715, %v5063, %v5064
      %v5066 = vrot.slane %v4758, 1
      %v5067 = vrot.slane %v4806, 1
      %v5068 = vsel %vm1715, %v5066, %v5067
      %v5069 = vrot.slane %v4759, 1
      %v5070 = vrot.slane %v4807, 1
      %v5071 = vsel %vm1715, %v5069, %v5070
      %v5072 = vrot.slane %v4760, 1
      %v5073 = vrot.slane %v4808, 1
      %v5074 = vsel %vm1715, %v5072, %v5073
      %v5075 = vrot.slane %v4761, 1
      %v5076 = vrot.slane %v4809, 1
      %v5077 = vsel %vm1715, %v5075, %v5076
      %v5078 = vrot.slane %v4762, 1
      %v5079 = vrot.slane %v4810, 1
      %v5080 = vsel %vm1715, %v5078, %v5079
      %v5081 = vrot.slane %v4763, 1
      %v5082 = vrot.slane %v4811, 1
      %v5083 = vsel %vm1715, %v5081, %v5082
      %5084 = vrot.lane.b32.xlu0 %v5038, 4
      %v5085 = vpop.permute.xlu0 %5084
      %5086 = vrot.lane.b32.xlu0 %v5041, 4
      %v5087 = vpop.permute.xlu0 %5086
      %5088 = vrot.lane.b32.xlu0 %v5044, 4
      %v5089 = vpop.permute.xlu0 %5088
      %5090 = vrot.lane.b32.xlu0 %v5047, 4
      %v5091 = vpop.permute.xlu0 %5090
      %5092 = vrot.lane.b32.xlu0 %v5050, 4
      %v5093 = vpop.permute.xlu0 %5092
      %5094 = vrot.lane.b32.xlu0 %v5053, 4
      %v5095 = vpop.permute.xlu0 %5094
      %5096 = vrot.lane.b32.xlu0 %v5056, 4
      %v5097 = vpop.permute.xlu0 %5096
      %5098 = vrot.lane.b32.xlu0 %v5059, 4
      %v5099 = vpop.permute.xlu0 %5098
      %5100 = vrot.lane.b32.xlu0 %v5062, 4
      %v5101 = vpop.permute.xlu0 %5100
      %5102 = vrot.lane.b32.xlu0 %v5065, 4
      %v5103 = vpop.permute.xlu0 %5102
      %5104 = vrot.lane.b32.xlu0 %v5068, 4
      %v5105 = vpop.permute.xlu0 %5104
      %5106 = vrot.lane.b32.xlu0 %v5071, 4
      %v5107 = vpop.permute.xlu0 %5106
      %5108 = vrot.lane.b32.xlu0 %v5074, 4
      %v5109 = vpop.permute.xlu0 %5108
      %5110 = vrot.lane.b32.xlu0 %v5077, 4
      %v5111 = vpop.permute.xlu0 %5110
      %5112 = vrot.lane.b32.xlu0 %v5080, 4
      %v5113 = vpop.permute.xlu0 %5112
      %5114 = vrot.lane.b32.xlu0 %v5083, 4
      %v5115 = vpop.permute.xlu0 %5114
      %v5117 = vsel %vm1796, %v4748, %v5005
      %v5119 = vsel %vm1796, %v4749, %v5007
      %v5121 = vsel %vm1796, %v4750, %v5009
      %v5123 = vsel %vm1796, %v4751, %v5011
      %v5125 = vsel %vm1796, %v4752, %v5013
      %v5127 = vsel %vm1796, %v4753, %v5015
      %v5129 = vsel %vm1796, %v4754, %v5017
      %v5131 = vsel %vm1796, %v4755, %v5019
      %v5133 = vsel %vm1796, %v4756, %v5021
      %v5135 = vsel %vm1796, %v4757, %v5023
      %v5137 = vsel %vm1796, %v4758, %v5025
      %v5139 = vsel %vm1796, %v4759, %v5027
      %v5141 = vsel %vm1796, %v4760, %v5029
      %v5143 = vsel %vm1796, %v4761, %v5031
      %v5145 = vsel %vm1796, %v4762, %v5033
      %v5147 = vsel %vm1796, %v4763, %v5035
      %v5149 = vsel %vm468, %v5117, %v5085
      %v5151 = vsel %vm468, %v5119, %v5087
      %v5153 = vsel %vm468, %v5121, %v5089
      %v5155 = vsel %vm468, %v5123, %v5091
      %v5157 = vsel %vm468, %v5125, %v5093
      %v5159 = vsel %vm468, %v5127, %v5095
      %v5161 = vsel %vm468, %v5129, %v5097
      %v5163 = vsel %vm468, %v5131, %v5099
      %v5165 = vsel %vm468, %v5133, %v5101
      %v5167 = vsel %vm468, %v5135, %v5103
      %v5169 = vsel %vm468, %v5137, %v5105
      %v5171 = vsel %vm468, %v5139, %v5107
      %v5173 = vsel %vm468, %v5141, %v5109
      %v5175 = vsel %vm468, %v5143, %v5111
      %v5177 = vsel %vm468, %v5145, %v5113
      %v5179 = vsel %vm468, %v5147, %v5115
      %v5180 = vld [vmem:[%s1196] sm:$0xf]
      %v5181 = vld [vmem:[%s1196 + $0x4] sm:$0xf]
      %v5182 = vld [vmem:[%s1196 + $0x8] sm:$0x1]
      %v5183 = vld [vmem:[%s1196 + $0xc] sm:$0xf]
      %v5184 = vld [vmem:[%s1196 + $0x10] sm:$0xf]
      %v5185 = vld [vmem:[%s1196 + $0x14] sm:$0x1]
      %v5186 = vld [vmem:[%s1196 + $0x18] sm:$0xf]
      %v5187 = vld [vmem:[%s1196 + $0x1c] sm:$0xf]
      %v5188 = vld [vmem:[%s1196 + $0x20] sm:$0x1]
      %v5189 = vld [vmem:[%s1196 + $0x24] sm:$0xf]
      %v5190 = vld [vmem:[%s1196 + $0x28] sm:$0xf]
      %v5191 = vld [vmem:[%s1196 + $0x2c] sm:$0x1]
      %v5192 = vld [vmem:[%s1196 + $0x30] sm:$0xf]
      %v5193 = vld [vmem:[%s1196 + $0x34] sm:$0xf]
      %v5194 = vld [vmem:[%s1196 + $0x38] sm:$0x1]
      %v5195 = vld [vmem:[%s1196 + $0x3c] sm:$0xf]
      %v5196 = vld [vmem:[%s1196 + $0x40] sm:$0xf]
      %v5197 = vld [vmem:[%s1196 + $0x44] sm:$0x1]
      %v5198 = vld [vmem:[%s1196 + $0x48] sm:$0xf]
      %v5199 = vld [vmem:[%s1196 + $0x4c] sm:$0xf]
      %v5200 = vld [vmem:[%s1196 + $0x50] sm:$0x1]
      %v5201 = vld [vmem:[%s1196 + $0x54] sm:$0xf]
      %v5202 = vld [vmem:[%s1196 + $0x58] sm:$0xf]
      %v5203 = vld [vmem:[%s1196 + $0x5c] sm:$0x1]
      %v5204 = vld [vmem:[%s1196 + $0x60] sm:$0xf]
      %v5205 = vld [vmem:[%s1196 + $0x64] sm:$0xf]
      %v5206 = vld [vmem:[%s1196 + $0x68] sm:$0x1]
      %v5207 = vld [vmem:[%s1196 + $0x6c] sm:$0xf]
      %v5208 = vld [vmem:[%s1196 + $0x70] sm:$0xf]
      %v5209 = vld [vmem:[%s1196 + $0x74] sm:$0x1]
      %v5210 = vld [vmem:[%s1196 + $0x78] sm:$0xf]
      %v5211 = vld [vmem:[%s1196 + $0x7c] sm:$0xf]
      %v5212 = vld [vmem:[%s1196 + $0x80] sm:$0x1]
      %v5213 = vld [vmem:[%s1196 + $0x84] sm:$0xf]
      %v5214 = vld [vmem:[%s1196 + $0x88] sm:$0xf]
      %v5215 = vld [vmem:[%s1196 + $0x8c] sm:$0x1]
      %v5216 = vld [vmem:[%s1196 + $0x90] sm:$0xf]
      %v5217 = vld [vmem:[%s1196 + $0x94] sm:$0xf]
      %v5218 = vld [vmem:[%s1196 + $0x98] sm:$0x1]
      %v5219 = vld [vmem:[%s1196 + $0x9c] sm:$0xf]
      %v5220 = vld [vmem:[%s1196 + $0xa0] sm:$0xf]
      %v5221 = vld [vmem:[%s1196 + $0xa4] sm:$0x1]
      %v5222 = vld [vmem:[%s1196 + $0xa8] sm:$0xf]
      %v5223 = vld [vmem:[%s1196 + $0xac] sm:$0xf]
      %v5224 = vld [vmem:[%s1196 + $0xb0] sm:$0x1]
      %v5225 = vld [vmem:[%s1196 + $0xb4] sm:$0xf]
      %v5226 = vld [vmem:[%s1196 + $0xb8] sm:$0xf]
      %v5227 = vld [vmem:[%s1196 + $0xbc] sm:$0x1]
      %v5260 = vunpack.c.l.b16 %v5180
      %v5261 = vunpack.c.l.b16 %v5181
      %v5262 = vunpack.c.l.b16 %v5183
      %v5263 = vunpack.c.l.b16 %v5184
      %v5264 = vunpack.c.l.b16 %v5186
      %v5265 = vunpack.c.l.b16 %v5187
      %v5266 = vunpack.c.l.b16 %v5189
      %v5267 = vunpack.c.l.b16 %v5190
      %v5268 = vunpack.c.l.b16 %v5192
      %v5269 = vunpack.c.l.b16 %v5193
      %v5270 = vunpack.c.l.b16 %v5195
      %v5271 = vunpack.c.l.b16 %v5196
      %v5272 = vunpack.c.l.b16 %v5198
      %v5273 = vunpack.c.l.b16 %v5199
      %v5274 = vunpack.c.l.b16 %v5201
      %v5275 = vunpack.c.l.b16 %v5202
      %v5276 = vunpack.c.l.b16 %v5204
      %v5277 = vunpack.c.l.b16 %v5205
      %v5278 = vunpack.c.l.b16 %v5207
      %v5279 = vunpack.c.l.b16 %v5208
      %v5280 = vunpack.c.l.b16 %v5210
      %v5281 = vunpack.c.l.b16 %v5211
      %v5282 = vunpack.c.l.b16 %v5213
      %v5283 = vunpack.c.l.b16 %v5214
      %v5284 = vunpack.c.l.b16 %v5216
      %v5285 = vunpack.c.l.b16 %v5217
      %v5286 = vunpack.c.l.b16 %v5219
      %v5287 = vunpack.c.l.b16 %v5220
      %v5288 = vunpack.c.l.b16 %v5222
      %v5289 = vunpack.c.l.b16 %v5223
      %v5290 = vunpack.c.l.b16 %v5225
      %v5291 = vunpack.c.l.b16 %v5226
      %v5292 = vpack.c.b16 %v5261, %v5260
      %v5293 = vpack.c.b16 %v5263, %v5262
      %v5294 = vpack.c.b16 %v5265, %v5264
      %v5295 = vpack.c.b16 %v5267, %v5266
      %v5296 = vpack.c.b16 %v5269, %v5268
      %v5297 = vpack.c.b16 %v5271, %v5270
      %v5298 = vpack.c.b16 %v5273, %v5272
      %v5299 = vpack.c.b16 %v5275, %v5274
      %v5300 = vpack.c.b16 %v5277, %v5276
      %v5301 = vpack.c.b16 %v5279, %v5278
      %v5302 = vpack.c.b16 %v5281, %v5280
      %v5303 = vpack.c.b16 %v5283, %v5282
      %v5304 = vpack.c.b16 %v5285, %v5284
      %v5305 = vpack.c.b16 %v5287, %v5286
      %v5306 = vpack.c.b16 %v5289, %v5288
      %v5307 = vpack.c.b16 %v5291, %v5290
      %v5324 = vunpack.c.l.b16 %v5182
      %v5325 = vunpack.c.l.b16 %v5185
      %v5326 = vunpack.c.l.b16 %v5188
      %v5327 = vunpack.c.l.b16 %v5191
      %v5328 = vunpack.c.l.b16 %v5194
      %v5329 = vunpack.c.l.b16 %v5197
      %v5330 = vunpack.c.l.b16 %v5200
      %v5331 = vunpack.c.l.b16 %v5203
      %v5332 = vunpack.c.l.b16 %v5206
      %v5333 = vunpack.c.l.b16 %v5209
      %v5334 = vunpack.c.l.b16 %v5212
      %v5335 = vunpack.c.l.b16 %v5215
      %v5336 = vunpack.c.l.b16 %v5218
      %v5337 = vunpack.c.l.b16 %v5221
      %v5338 = vunpack.c.l.b16 %v5224
      %v5339 = vunpack.c.l.b16 %v5227
      %v5340 = vpack.c.b16 %v5324, %v5324
      %v5341 = vpack.c.b16 %v5325, %v5325
      %v5342 = vpack.c.b16 %v5326, %v5326
      %v5343 = vpack.c.b16 %v5327, %v5327
      %v5344 = vpack.c.b16 %v5328, %v5328
      %v5345 = vpack.c.b16 %v5329, %v5329
      %v5346 = vpack.c.b16 %v5330, %v5330
      %v5347 = vpack.c.b16 %v5331, %v5331
      %v5348 = vpack.c.b16 %v5332, %v5332
      %v5349 = vpack.c.b16 %v5333, %v5333
      %v5350 = vpack.c.b16 %v5334, %v5334
      %v5351 = vpack.c.b16 %v5335, %v5335
      %v5352 = vpack.c.b16 %v5336, %v5336
      %v5353 = vpack.c.b16 %v5337, %v5337
      %v5354 = vpack.c.b16 %v5338, %v5338
      %v5355 = vpack.c.b16 %v5339, %v5339
      %v5357 = vshrl.u32 %v5292, 16
      %v5359 = vshll.u32 %v5292, 16
      %v5361 = vrot.slane %v5359, 1
      %v5362 = vor.u32 %v5357, %v5361
      %v5364 = vshll.u32 %v5340, 16
      %v5366 = vrot.slane %v5364, 1
      %v5367 = vsel %vm1490, %v5362, %v5366
      %v5369 = vshrl.u32 %v5293, 16
      %v5371 = vshll.u32 %v5293, 16
      %v5373 = vrot.slane %v5371, 1
      %v5374 = vor.u32 %v5369, %v5373
      %v5376 = vshll.u32 %v5341, 16
      %v5378 = vrot.slane %v5376, 1
      %v5379 = vsel %vm1490, %v5374, %v5378
      %v5381 = vshrl.u32 %v5294, 16
      %v5383 = vshll.u32 %v5294, 16
      %v5385 = vrot.slane %v5383, 1
      %v5386 = vor.u32 %v5381, %v5385
      %v5388 = vshll.u32 %v5342, 16
      %v5390 = vrot.slane %v5388, 1
      %v5391 = vsel %vm1490, %v5386, %v5390
      %v5393 = vshrl.u32 %v5295, 16
      %v5395 = vshll.u32 %v5295, 16
      %v5397 = vrot.slane %v5395, 1
      %v5398 = vor.u32 %v5393, %v5397
      %v5400 = vshll.u32 %v5343, 16
      %v5402 = vrot.slane %v5400, 1
      %v5403 = vsel %vm1490, %v5398, %v5402
      %v5405 = vshrl.u32 %v5296, 16
      %v5407 = vshll.u32 %v5296, 16
      %v5409 = vrot.slane %v5407, 1
      %v5410 = vor.u32 %v5405, %v5409
      %v5412 = vshll.u32 %v5344, 16
      %v5414 = vrot.slane %v5412, 1
      %v5415 = vsel %vm1490, %v5410, %v5414
      %v5417 = vshrl.u32 %v5297, 16
      %v5419 = vshll.u32 %v5297, 16
      %v5421 = vrot.slane %v5419, 1
      %v5422 = vor.u32 %v5417, %v5421
      %v5424 = vshll.u32 %v5345, 16
      %v5426 = vrot.slane %v5424, 1
      %v5427 = vsel %vm1490, %v5422, %v5426
      %v5429 = vshrl.u32 %v5298, 16
      %v5431 = vshll.u32 %v5298, 16
      %v5433 = vrot.slane %v5431, 1
      %v5434 = vor.u32 %v5429, %v5433
      %v5436 = vshll.u32 %v5346, 16
      %v5438 = vrot.slane %v5436, 1
      %v5439 = vsel %vm1490, %v5434, %v5438
      %v5441 = vshrl.u32 %v5299, 16
      %v5443 = vshll.u32 %v5299, 16
      %v5445 = vrot.slane %v5443, 1
      %v5446 = vor.u32 %v5441, %v5445
      %v5448 = vshll.u32 %v5347, 16
      %v5450 = vrot.slane %v5448, 1
      %v5451 = vsel %vm1490, %v5446, %v5450
      %v5453 = vshrl.u32 %v5300, 16
      %v5455 = vshll.u32 %v5300, 16
      %v5457 = vrot.slane %v5455, 1
      %v5458 = vor.u32 %v5453, %v5457
      %v5460 = vshll.u32 %v5348, 16
      %v5462 = vrot.slane %v5460, 1
      %v5463 = vsel %vm1490, %v5458, %v5462
      %v5465 = vshrl.u32 %v5301, 16
      %v5467 = vshll.u32 %v5301, 16
      %v5469 = vrot.slane %v5467, 1
      %v5470 = vor.u32 %v5465, %v5469
      %v5472 = vshll.u32 %v5349, 16
      %v5474 = vrot.slane %v5472, 1
      %v5475 = vsel %vm1490, %v5470, %v5474
      %v5477 = vshrl.u32 %v5302, 16
      %v5479 = vshll.u32 %v5302, 16
      %v5481 = vrot.slane %v5479, 1
      %v5482 = vor.u32 %v5477, %v5481
      %v5484 = vshll.u32 %v5350, 16
      %v5486 = vrot.slane %v5484, 1
      %v5487 = vsel %vm1490, %v5482, %v5486
      %v5489 = vshrl.u32 %v5303, 16
      %v5491 = vshll.u32 %v5303, 16
      %v5493 = vrot.slane %v5491, 1
      %v5494 = vor.u32 %v5489, %v5493
      %v5496 = vshll.u32 %v5351, 16
      %v5498 = vrot.slane %v5496, 1
      %v5499 = vsel %vm1490, %v5494, %v5498
      %v5501 = vshrl.u32 %v5304, 16
      %v5503 = vshll.u32 %v5304, 16
      %v5505 = vrot.slane %v5503, 1
      %v5506 = vor.u32 %v5501, %v5505
      %v5508 = vshll.u32 %v5352, 16
      %v5510 = vrot.slane %v5508, 1
      %v5511 = vsel %vm1490, %v5506, %v5510
      %v5513 = vshrl.u32 %v5305, 16
      %v5515 = vshll.u32 %v5305, 16
      %v5517 = vrot.slane %v5515, 1
      %v5518 = vor.u32 %v5513, %v5517
      %v5520 = vshll.u32 %v5353, 16
      %v5522 = vrot.slane %v5520, 1
      %v5523 = vsel %vm1490, %v5518, %v5522
      %v5525 = vshrl.u32 %v5306, 16
      %v5527 = vshll.u32 %v5306, 16
      %v5529 = vrot.slane %v5527, 1
      %v5530 = vor.u32 %v5525, %v5529
      %v5532 = vshll.u32 %v5354, 16
      %v5534 = vrot.slane %v5532, 1
      %v5535 = vsel %vm1490, %v5530, %v5534
      %v5537 = vshrl.u32 %v5307, 16
      %v5539 = vshll.u32 %v5307, 16
      %v5541 = vrot.slane %v5539, 1
      %v5542 = vor.u32 %v5537, %v5541
      %v5544 = vshll.u32 %v5355, 16
      %v5546 = vrot.slane %v5544, 1
      %v5547 = vsel %vm1490, %v5542, %v5546
      %5548 = vrot.lane.b32.xlu0 %v5367, 2
      %v5549 = vpop.permute.xlu0 %5548
      %5550 = vrot.lane.b32.xlu0 %v5379, 2
      %v5551 = vpop.permute.xlu0 %5550
      %5552 = vrot.lane.b32.xlu0 %v5391, 2
      %v5553 = vpop.permute.xlu0 %5552
      %5554 = vrot.lane.b32.xlu0 %v5403, 2
      %v5555 = vpop.permute.xlu0 %5554
      %5556 = vrot.lane.b32.xlu0 %v5415, 2
      %v5557 = vpop.permute.xlu0 %5556
      %5558 = vrot.lane.b32.xlu0 %v5427, 2
      %v5559 = vpop.permute.xlu0 %5558
      %5560 = vrot.lane.b32.xlu0 %v5439, 2
      %v5561 = vpop.permute.xlu0 %5560
      %5562 = vrot.lane.b32.xlu0 %v5451, 2
      %v5563 = vpop.permute.xlu0 %5562
      %5564 = vrot.lane.b32.xlu0 %v5463, 2
      %v5565 = vpop.permute.xlu0 %5564
      %5566 = vrot.lane.b32.xlu0 %v5475, 2
      %v5567 = vpop.permute.xlu0 %5566
      %5568 = vrot.lane.b32.xlu0 %v5487, 2
      %v5569 = vpop.permute.xlu0 %5568
      %5570 = vrot.lane.b32.xlu0 %v5499, 2
      %v5571 = vpop.permute.xlu0 %5570
      %5572 = vrot.lane.b32.xlu0 %v5511, 2
      %v5573 = vpop.permute.xlu0 %5572
      %5574 = vrot.lane.b32.xlu0 %v5523, 2
      %v5575 = vpop.permute.xlu0 %5574
      %5576 = vrot.lane.b32.xlu0 %v5535, 2
      %v5577 = vpop.permute.xlu0 %5576
      %5578 = vrot.lane.b32.xlu0 %v5547, 2
      %v5579 = vpop.permute.xlu0 %5578
      %v5580 = vrot.slane %v5292, 1
      %v5581 = vrot.slane %v5340, 1
      %v5582 = vsel %vm1715, %v5580, %v5581
      %v5583 = vrot.slane %v5293, 1
      %v5584 = vrot.slane %v5341, 1
      %v5585 = vsel %vm1715, %v5583, %v5584
      %v5586 = vrot.slane %v5294, 1
      %v5587 = vrot.slane %v5342, 1
      %v5588 = vsel %vm1715, %v5586, %v5587
      %v5589 = vrot.slane %v5295, 1
      %v5590 = vrot.slane %v5343, 1
      %v5591 = vsel %vm1715, %v5589, %v5590
      %v5592 = vrot.slane %v5296, 1
      %v5593 = vrot.slane %v5344, 1
      %v5594 = vsel %vm1715, %v5592, %v5593
      %v5595 = vrot.slane %v5297, 1
      %v5596 = vrot.slane %v5345, 1
      %v5597 = vsel %vm1715, %v5595, %v5596
      %v5598 = vrot.slane %v5298, 1
      %v5599 = vrot.slane %v5346, 1
      %v5600 = vsel %vm1715, %v5598, %v5599
      %v5601 = vrot.slane %v5299, 1
      %v5602 = vrot.slane %v5347, 1
      %v5603 = vsel %vm1715, %v5601, %v5602
      %v5604 = vrot.slane %v5300, 1
      %v5605 = vrot.slane %v5348, 1
      %v5606 = vsel %vm1715, %v5604, %v5605
      %v5607 = vrot.slane %v5301, 1
      %v5608 = vrot.slane %v5349, 1
      %v5609 = vsel %vm1715, %v5607, %v5608
      %v5610 = vrot.slane %v5302, 1
      %v5611 = vrot.slane %v5350, 1
      %v5612 = vsel %vm1715, %v5610, %v5611
      %v5613 = vrot.slane %v5303, 1
      %v5614 = vrot.slane %v5351, 1
      %v5615 = vsel %vm1715, %v5613, %v5614
      %v5616 = vrot.slane %v5304, 1
      %v5617 = vrot.slane %v5352, 1
      %v5618 = vsel %vm1715, %v5616, %v5617
      %v5619 = vrot.slane %v5305, 1
      %v5620 = vrot.slane %v5353, 1
      %v5621 = vsel %vm1715, %v5619, %v5620
      %v5622 = vrot.slane %v5306, 1
      %v5623 = vrot.slane %v5354, 1
      %v5624 = vsel %vm1715, %v5622, %v5623
      %v5625 = vrot.slane %v5307, 1
      %v5626 = vrot.slane %v5355, 1
      %v5627 = vsel %vm1715, %v5625, %v5626
      %5628 = vrot.lane.b32.xlu0 %v5582, 4
      %v5629 = vpop.permute.xlu0 %5628
      %5630 = vrot.lane.b32.xlu0 %v5585, 4
      %v5631 = vpop.permute.xlu0 %5630
      %5632 = vrot.lane.b32.xlu0 %v5588, 4
      %v5633 = vpop.permute.xlu0 %5632
      %5634 = vrot.lane.b32.xlu0 %v5591, 4
      %v5635 = vpop.permute.xlu0 %5634
      %5636 = vrot.lane.b32.xlu0 %v5594, 4
      %v5637 = vpop.permute.xlu0 %5636
      %5638 = vrot.lane.b32.xlu0 %v5597, 4
      %v5639 = vpop.permute.xlu0 %5638
      %5640 = vrot.lane.b32.xlu0 %v5600, 4
      %v5641 = vpop.permute.xlu0 %5640
      %5642 = vrot.lane.b32.xlu0 %v5603, 4
      %v5643 = vpop.permute.xlu0 %5642
      %5644 = vrot.lane.b32.xlu0 %v5606, 4
      %v5645 = vpop.permute.xlu0 %5644
      %5646 = vrot.lane.b32.xlu0 %v5609, 4
      %v5647 = vpop.permute.xlu0 %5646
      %5648 = vrot.lane.b32.xlu0 %v5612, 4
      %v5649 = vpop.permute.xlu0 %5648
      %5650 = vrot.lane.b32.xlu0 %v5615, 4
      %v5651 = vpop.permute.xlu0 %5650
      %5652 = vrot.lane.b32.xlu0 %v5618, 4
      %v5653 = vpop.permute.xlu0 %5652
      %5654 = vrot.lane.b32.xlu0 %v5621, 4
      %v5655 = vpop.permute.xlu0 %5654
      %5656 = vrot.lane.b32.xlu0 %v5624, 4
      %v5657 = vpop.permute.xlu0 %5656
      %5658 = vrot.lane.b32.xlu0 %v5627, 4
      %v5659 = vpop.permute.xlu0 %5658
      %v5661 = vsel %vm1796, %v5292, %v5549
      %v5663 = vsel %vm1796, %v5293, %v5551
      %v5665 = vsel %vm1796, %v5294, %v5553
      %v5667 = vsel %vm1796, %v5295, %v5555
      %v5669 = vsel %vm1796, %v5296, %v5557
      %v5671 = vsel %vm1796, %v5297, %v5559
      %v5673 = vsel %vm1796, %v5298, %v5561
      %v5675 = vsel %vm1796, %v5299, %v5563
      %v5677 = vsel %vm1796, %v5300, %v5565
      %v5679 = vsel %vm1796, %v5301, %v5567
      %v5681 = vsel %vm1796, %v5302, %v5569
      %v5683 = vsel %vm1796, %v5303, %v5571
      %v5685 = vsel %vm1796, %v5304, %v5573
      %v5687 = vsel %vm1796, %v5305, %v5575
      %v5689 = vsel %vm1796, %v5306, %v5577
      %v5691 = vsel %vm1796, %v5307, %v5579
      %v5693 = vsel %vm468, %v5661, %v5629
      %v5695 = vsel %vm468, %v5663, %v5631
      %v5697 = vsel %vm468, %v5665, %v5633
      %v5699 = vsel %vm468, %v5667, %v5635
      %v5701 = vsel %vm468, %v5669, %v5637
      %v5703 = vsel %vm468, %v5671, %v5639
      %v5705 = vsel %vm468, %v5673, %v5641
      %v5707 = vsel %vm468, %v5675, %v5643
      %v5709 = vsel %vm468, %v5677, %v5645
      %v5711 = vsel %vm468, %v5679, %v5647
      %v5713 = vsel %vm468, %v5681, %v5649
      %v5715 = vsel %vm468, %v5683, %v5651
      %v5717 = vsel %vm468, %v5685, %v5653
      %v5719 = vsel %vm468, %v5687, %v5655
      %v5721 = vsel %vm468, %v5689, %v5657
      %v5723 = vsel %vm468, %v5691, %v5659
      %v5724 = vsel %vm2405, %v5693, 0
      %v5726 = vsel %vm2405, %v5695, 0
      %v5728 = vsel %vm2405, %v5697, 0
      %v5730 = vsel %vm2405, %v5699, 0
      %v5732 = vsel %vm2405, %v5701, 0
      %v5734 = vsel %vm2405, %v5703, 0
      %v5736 = vsel %vm2405, %v5705, 0
      %v5738 = vsel %vm2405, %v5707, 0
      %v5740 = vsel %vm2405, %v5709, 0
      %v5742 = vsel %vm2405, %v5711, 0
      %v5744 = vsel %vm2405, %v5713, 0
      %v5746 = vsel %vm2405, %v5715, 0
      %v5748 = vsel %vm2405, %v5717, 0
      %v5750 = vsel %vm2405, %v5719, 0
      %v5752 = vsel %vm2405, %v5721, 0
      %v5754 = vsel %vm2405, %v5723, 0
      %v5757 = vsel %vm2438, %v4634, 0
      %5759 = vmatprep.subr.bf16.mxu0 0
      %5760 = vmatpush1.bf16.msra.mxu0 %v5757
      %5761 = vmatprep.subr.bf16.mxu0 0
      %5762 = vmatpush1.bf16.msra.mxu0 0
      %5763 = vmatprep.subr.bf16.mxu0 0
      %5764 = vmatpush1.bf16.msra.mxu0 0
      %5765 = vmatprep.subr.bf16.mxu0 0
      %5766 = vmatpush1.bf16.msra.mxu0 0
      %5767 = vmatprep.subr.bf16.mxu0 0
      %5768 = vmatpush1.bf16.msra.mxu0 0
      %5769 = vmatprep.subr.bf16.mxu0 0
      %5770 = vmatpush1.bf16.msra.mxu0 0
      %5771 = vmatprep.subr.bf16.mxu0 0
      %5772 = vmatpush1.bf16.msra.mxu0 0
      %5773 = vmatprep.subr.bf16.mxu0 0
      %5774 = vmatpush1.bf16.msra.mxu0 0
      %5775 = vmatprep.subr.bf16.mxu0 0
      %5776 = vmatpush1.bf16.msra.mxu0 0
      %5777 = vmatprep.subr.bf16.mxu0 0
      %5778 = vmatpush1.bf16.msra.mxu0 0
      %5779 = vmatprep.subr.bf16.mxu0 0
      %5780 = vmatpush1.bf16.msra.mxu0 0
      %5781 = vmatprep.subr.bf16.mxu0 0
      %5782 = vmatpush1.bf16.msra.mxu0 0
      %5783 = vmatprep.subr.bf16.mxu0 0
      %5784 = vmatpush1.bf16.msra.mxu0 0
      %5785 = vmatprep.subr.bf16.mxu0 0
      %5786 = vmatpush1.bf16.msra.mxu0 0
      %5787 = vmatprep.subr.bf16.mxu0 0
      %5788 = vmatpush1.bf16.msra.mxu0 0
      %5789 = vmatprep.subr.bf16.mxu0 0
      %5790 = vmatpush1.bf16.msra.mxu0 0
      %5791 = vmatprep.mubr.bf16.mxu0 0
      %5792 = vmatmul.mubr.bf16.gmra.mrb[0].mxu0 %v5724
      %v5793 = vpop.f32.mrb[0].mxu0
      %v5794 = vadd.f32 0.0, %v5793
      %v5795 = vpop.f32.mrb[0].mxu0
      %v5796 = vpop.f32.mrb[0].mxu0
      %v5797 = vadd.f32 0.0, %v5796
      %v5798 = vpop.f32.mrb[0].mxu0
      %5799 = vmatprep.mubr.bf16.mxu0 0
      %5800 = vmatmul.mubr.bf16.gmra.mrb[0].mxu0 %v5726
      %v5801 = vpop.f32.mrb[0].mxu0
      %v5802 = vadd.f32 0.0, %v5801
      %v5803 = vpop.f32.mrb[0].mxu0
      %v5804 = vpop.f32.mrb[0].mxu0
      %v5805 = vadd.f32 0.0, %v5804
      %v5806 = vpop.f32.mrb[0].mxu0
      %5807 = vmatprep.mubr.bf16.mxu0 0
      %5808 = vmatmul.mubr.bf16.gmra.mrb[0].mxu0 %v5728
      %v5809 = vpop.f32.mrb[0].mxu0
      %v5810 = vadd.f32 0.0, %v5809
      %v5811 = vpop.f32.mrb[0].mxu0
      %v5812 = vpop.f32.mrb[0].mxu0
      %v5813 = vadd.f32 0.0, %v5812
      %v5814 = vpop.f32.mrb[0].mxu0
      %5815 = vmatprep.mubr.bf16.mxu0 0
      %5816 = vmatmul.mubr.bf16.gmra.mrb[0].mxu0 %v5730
      %v5817 = vpop.f32.mrb[0].mxu0
      %v5818 = vadd.f32 0.0, %v5817
      %v5819 = vpop.f32.mrb[0].mxu0
      %v5820 = vpop.f32.mrb[0].mxu0
      %v5821 = vadd.f32 0.0, %v5820
      %v5822 = vpop.f32.mrb[0].mxu0
      %5823 = vmatprep.mubr.bf16.mxu0 0
      %5824 = vmatmul.mubr.bf16.gmra.mrb[0].mxu0 %v5732
      %v5825 = vpop.f32.mrb[0].mxu0
      %v5826 = vadd.f32 0.0, %v5825
      %v5827 = vpop.f32.mrb[0].mxu0
      %v5828 = vpop.f32.mrb[0].mxu0
      %v5829 = vadd.f32 0.0, %v5828
      %v5830 = vpop.f32.mrb[0].mxu0
      %5831 = vmatprep.mubr.bf16.mxu0 0
      %5832 = vmatmul.mubr.bf16.gmra.mrb[0].mxu0 %v5734
      %v5833 = vpop.f32.mrb[0].mxu0
      %v5834 = vadd.f32 0.0, %v5833
      %v5835 = vpop.f32.mrb[0].mxu0
      %v5836 = vpop.f32.mrb[0].mxu0
      %v5837 = vadd.f32 0.0, %v5836
      %v5838 = vpop.f32.mrb[0].mxu0
      %5839 = vmatprep.mubr.bf16.mxu0 0
      %5840 = vmatmul.mubr.bf16.gmra.mrb[0].mxu0 %v5736
      %v5841 = vpop.f32.mrb[0].mxu0
      %v5842 = vadd.f32 0.0, %v5841
      %v5843 = vpop.f32.mrb[0].mxu0
      %v5844 = vpop.f32.mrb[0].mxu0
      %v5845 = vadd.f32 0.0, %v5844
      %v5846 = vpop.f32.mrb[0].mxu0
      %5847 = vmatprep.mubr.bf16.mxu0 0
      %5848 = vmatmul.mubr.bf16.gmra.mrb[0].mxu0 %v5738
      %v5849 = vpop.f32.mrb[0].mxu0
      %v5850 = vadd.f32 0.0, %v5849
      %v5851 = vpop.f32.mrb[0].mxu0
      %v5852 = vpop.f32.mrb[0].mxu0
      %v5853 = vadd.f32 0.0, %v5852
      %v5854 = vpop.f32.mrb[0].mxu0
      %5855 = vmatprep.mubr.bf16.mxu0 0
      %5856 = vmatmul.mubr.bf16.gmra.mrb[0].mxu0 %v5740
      %v5857 = vpop.f32.mrb[0].mxu0
      %v5858 = vadd.f32 0.0, %v5857
      %v5859 = vpop.f32.mrb[0].mxu0
      %v5860 = vpop.f32.mrb[0].mxu0
      %v5861 = vadd.f32 0.0, %v5860
      %v5862 = vpop.f32.mrb[0].mxu0
      %5863 = vmatprep.mubr.bf16.mxu0 0
      %5864 = vmatmul.mubr.bf16.gmra.mrb[0].mxu0 %v5742
      %v5865 = vpop.f32.mrb[0].mxu0
      %v5866 = vadd.f32 0.0, %v5865
      %v5867 = vpop.f32.mrb[0].mxu0
      %v5868 = vpop.f32.mrb[0].mxu0
      %v5869 = vadd.f32 0.0, %v5868
      %v5870 = vpop.f32.mrb[0].mxu0
      %5871 = vmatprep.mubr.bf16.mxu0 0
      %5872 = vmatmul.mubr.bf16.gmra.mrb[0].mxu0 %v5744
      %v5873 = vpop.f32.mrb[0].mxu0
      %v5874 = vadd.f32 0.0, %v5873
      %v5875 = vpop.f32.mrb[0].mxu0
      %v5876 = vpop.f32.mrb[0].mxu0
      %v5877 = vadd.f32 0.0, %v5876
      %v5878 = vpop.f32.mrb[0].mxu0
      %5879 = vmatprep.mubr.bf16.mxu0 0
      %5880 = vmatmul.mubr.bf16.gmra.mrb[0].mxu0 %v5746
      %v5881 = vpop.f32.mrb[0].mxu0
      %v5882 = vadd.f32 0.0, %v5881
      %v5883 = vpop.f32.mrb[0].mxu0
      %v5884 = vpop.f32.mrb[0].mxu0
      %v5885 = vadd.f32 0.0, %v5884
      %v5886 = vpop.f32.mrb[0].mxu0
      %5887 = vmatprep.mubr.bf16.mxu0 0
      %5888 = vmatmul.mubr.bf16.gmra.mrb[0].mxu0 %v5748
      %v5889 = vpop.f32.mrb[0].mxu0
      %v5890 = vadd.f32 0.0, %v5889
      %v5891 = vpop.f32.mrb[0].mxu0
      %v5892 = vpop.f32.mrb[0].mxu0
      %v5893 = vadd.f32 0.0, %v5892
      %v5894 = vpop.f32.mrb[0].mxu0
      %5895 = vmatprep.mubr.bf16.mxu0 0
      %5896 = vmatmul.mubr.bf16.gmra.mrb[0].mxu0 %v5750
      %v5897 = vpop.f32.mrb[0].mxu0
      %v5898 = vadd.f32 0.0, %v5897
      %v5899 = vpop.f32.mrb[0].mxu0
      %v5900 = vpop.f32.mrb[0].mxu0
      %v5901 = vadd.f32 0.0, %v5900
      %v5902 = vpop.f32.mrb[0].mxu0
      %5903 = vmatprep.mubr.bf16.mxu0 0
      %5904 = vmatmul.mubr.bf16.gmra.mrb[0].mxu0 %v5752
      %v5905 = vpop.f32.mrb[0].mxu0
      %v5906 = vadd.f32 0.0, %v5905
      %v5907 = vpop.f32.mrb[0].mxu0
      %v5908 = vpop.f32.mrb[0].mxu0
      %v5909 = vadd.f32 0.0, %v5908
      %v5910 = vpop.f32.mrb[0].mxu0
      %5911 = vmatprep.mubr.bf16.mxu0 0
      %5912 = vmatmul.mubr.bf16.gmra.mrb[0].mxu0 %v5754
      %v5913 = vpop.f32.mrb[0].mxu0
      %v5914 = vadd.f32 0.0, %v5913
      %v5915 = vpop.f32.mrb[0].mxu0
      %v5916 = vpop.f32.mrb[0].mxu0
      %v5917 = vadd.f32 0.0, %v5916
      %v5918 = vpop.f32.mrb[0].mxu0
      %5919 = vdwg.mxu0
      %v5920 = vsel %vm2405, %v5149, 0
      %v5922 = vsel %vm2405, %v5151, 0
      %v5924 = vsel %vm2405, %v5153, 0
      %v5926 = vsel %vm2405, %v5155, 0
      %v5928 = vsel %vm2405, %v5157, 0
      %v5930 = vsel %vm2405, %v5159, 0
      %v5932 = vsel %vm2405, %v5161, 0
      %v5934 = vsel %vm2405, %v5163, 0
      %v5936 = vsel %vm2405, %v5165, 0
      %v5938 = vsel %vm2405, %v5167, 0
      %v5940 = vsel %vm2405, %v5169, 0
      %v5942 = vsel %vm2405, %v5171, 0
      %v5944 = vsel %vm2405, %v5173, 0
      %v5946 = vsel %vm2405, %v5175, 0
      %v5948 = vsel %vm2405, %v5177, 0
      %v5950 = vsel %vm2405, %v5179, 0
      %v5953 = vsel %vm2438, %v4633, 0
      %5955 = vmatprep.subr.bf16.mxu0 0
      %5956 = vmatpush1.bf16.msra.mxu0 %v5953
      %5957 = vmatprep.subr.bf16.mxu0 0
      %5958 = vmatpush1.bf16.msra.mxu0 0
      %5959 = vmatprep.subr.bf16.mxu0 0
      %5960 = vmatpush1.bf16.msra.mxu0 0
      %5961 = vmatprep.subr.bf16.mxu0 0
      %5962 = vmatpush1.bf16.msra.mxu0 0
      %5963 = vmatprep.subr.bf16.mxu0 0
      %5964 = vmatpush1.bf16.msra.mxu0 0
      %5965 = vmatprep.subr.bf16.mxu0 0
      %5966 = vmatpush1.bf16.msra.mxu0 0
      %5967 = vmatprep.subr.bf16.mxu0 0
      %5968 = vmatpush1.bf16.msra.mxu0 0
      %5969 = vmatprep.subr.bf16.mxu0 0
      %5970 = vmatpush1.bf16.msra.mxu0 0
      %5971 = vmatprep.subr.bf16.mxu0 0
      %5972 = vmatpush1.bf16.msra.mxu0 0
      %5973 = vmatprep.subr.bf16.mxu0 0
      %5974 = vmatpush1.bf16.msra.mxu0 0
      %5975 = vmatprep.subr.bf16.mxu0 0
      %5976 = vmatpush1.bf16.msra.mxu0 0
      %5977 = vmatprep.subr.bf16.mxu0 0
      %5978 = vmatpush1.bf16.msra.mxu0 0
      %5979 = vmatprep.subr.bf16.mxu0 0
      %5980 = vmatpush1.bf16.msra.mxu0 0
      %5981 = vmatprep.subr.bf16.mxu0 0
      %5982 = vmatpush1.bf16.msra.mxu0 0
      %5983 = vmatprep.subr.bf16.mxu0 0
      %5984 = vmatpush1.bf16.msra.mxu0 0
      %5985 = vmatprep.subr.bf16.mxu0 0
      %5986 = vmatpush1.bf16.msra.mxu0 0
      %5987 = vmatprep.mubr.bf16.mxu0 0
      %5988 = vmatmul.mubr.bf16.gmra.mrb[0].mxu0 %v5920
      %v5989 = vpop.f32.mrb[0].mxu0
      %v5990 = vadd.f32 %v5794, %v5989
      %v5991 = vpop.f32.mrb[0].mxu0
      %v5992 = vpop.f32.mrb[0].mxu0
      %v5993 = vadd.f32 %v5797, %v5992
      %v5994 = vpop.f32.mrb[0].mxu0
      %5995 = vmatprep.mubr.bf16.mxu0 0
      %5996 = vmatmul.mubr.bf16.gmra.mrb[0].mxu0 %v5922
      %v5997 = vpop.f32.mrb[0].mxu0
      %v5998 = vadd.f32 %v5802, %v5997
      %v5999 = vpop.f32.mrb[0].mxu0
      %v6000 = vpop.f32.mrb[0].mxu0
      %v6001 = vadd.f32 %v5805, %v6000
      %v6002 = vpop.f32.mrb[0].mxu0
      %6003 = vmatprep.mubr.bf16.mxu0 0
      %6004 = vmatmul.mubr.bf16.gmra.mrb[0].mxu0 %v5924
      %v6005 = vpop.f32.mrb[0].mxu0
      %v6006 = vadd.f32 %v5810, %v6005
      %v6007 = vpop.f32.mrb[0].mxu0
      %v6008 = vpop.f32.mrb[0].mxu0
      %v6009 = vadd.f32 %v5813, %v6008
      %v6010 = vpop.f32.mrb[0].mxu0
      %6011 = vmatprep.mubr.bf16.mxu0 0
      %6012 = vmatmul.mubr.bf16.gmra.mrb[0].mxu0 %v5926
      %v6013 = vpop.f32.mrb[0].mxu0
      %v6014 = vadd.f32 %v5818, %v6013
      %v6015 = vpop.f32.mrb[0].mxu0
      %v6016 = vpop.f32.mrb[0].mxu0
      %v6017 = vadd.f32 %v5821, %v6016
      %v6018 = vpop.f32.mrb[0].mxu0
      %6019 = vmatprep.mubr.bf16.mxu0 0
      %6020 = vmatmul.mubr.bf16.gmra.mrb[0].mxu0 %v5928
      %v6021 = vpop.f32.mrb[0].mxu0
      %v6022 = vadd.f32 %v5826, %v6021
      %v6023 = vpop.f32.mrb[0].mxu0
      %v6024 = vpop.f32.mrb[0].mxu0
      %v6025 = vadd.f32 %v5829, %v6024
      %v6026 = vpop.f32.mrb[0].mxu0
      %6027 = vmatprep.mubr.bf16.mxu0 0
      %6028 = vmatmul.mubr.bf16.gmra.mrb[0].mxu0 %v5930
      %v6029 = vpop.f32.mrb[0].mxu0
      %v6030 = vadd.f32 %v5834, %v6029
      %v6031 = vpop.f32.mrb[0].mxu0
      %v6032 = vpop.f32.mrb[0].mxu0
      %v6033 = vadd.f32 %v5837, %v6032
      %v6034 = vpop.f32.mrb[0].mxu0
      %6035 = vmatprep.mubr.bf16.mxu0 0
      %6036 = vmatmul.mubr.bf16.gmra.mrb[0].mxu0 %v5932
      %v6037 = vpop.f32.mrb[0].mxu0
      %v6038 = vadd.f32 %v5842, %v6037
      %v6039 = vpop.f32.mrb[0].mxu0
      %v6040 = vpop.f32.mrb[0].mxu0
      %v6041 = vadd.f32 %v5845, %v6040
      %v6042 = vpop.f32.mrb[0].mxu0
      %6043 = vmatprep.mubr.bf16.mxu0 0
      %6044 = vmatmul.mubr.bf16.gmra.mrb[0].mxu0 %v5934
      %v6045 = vpop.f32.mrb[0].mxu0
      %v6046 = vadd.f32 %v5850, %v6045
      %v6047 = vpop.f32.mrb[0].mxu0
      %v6048 = vpop.f32.mrb[0].mxu0
      %v6049 = vadd.f32 %v5853, %v6048
      %v6050 = vpop.f32.mrb[0].mxu0
      %6051 = vmatprep.mubr.bf16.mxu0 0
      %6052 = vmatmul.mubr.bf16.gmra.mrb[0].mxu0 %v5936
      %v6053 = vpop.f32.mrb[0].mxu0
      %v6054 = vadd.f32 %v5858, %v6053
      %v6055 = vpop.f32.mrb[0].mxu0
      %v6056 = vpop.f32.mrb[0].mxu0
      %v6057 = vadd.f32 %v5861, %v6056
      %v6058 = vpop.f32.mrb[0].mxu0
      %6059 = vmatprep.mubr.bf16.mxu0 0
      %6060 = vmatmul.mubr.bf16.gmra.mrb[0].mxu0 %v5938
      %v6061 = vpop.f32.mrb[0].mxu0
      %v6062 = vadd.f32 %v5866, %v6061
      %v6063 = vpop.f32.mrb[0].mxu0
      %v6064 = vpop.f32.mrb[0].mxu0
      %v6065 = vadd.f32 %v5869, %v6064
      %v6066 = vpop.f32.mrb[0].mxu0
      %6067 = vmatprep.mubr.bf16.mxu0 0
      %6068 = vmatmul.mubr.bf16.gmra.mrb[0].mxu0 %v5940
      %v6069 = vpop.f32.mrb[0].mxu0
      %v6070 = vadd.f32 %v5874, %v6069
      %v6071 = vpop.f32.mrb[0].mxu0
      %v6072 = vpop.f32.mrb[0].mxu0
      %v6073 = vadd.f32 %v5877, %v6072
      %v6074 = vpop.f32.mrb[0].mxu0
      %6075 = vmatprep.mubr.bf16.mxu0 0
      %6076 = vmatmul.mubr.bf16.gmra.mrb[0].mxu0 %v5942
      %v6077 = vpop.f32.mrb[0].mxu0
      %v6078 = vadd.f32 %v5882, %v6077
      %v6079 = vpop.f32.mrb[0].mxu0
      %v6080 = vpop.f32.mrb[0].mxu0
      %v6081 = vadd.f32 %v5885, %v6080
      %v6082 = vpop.f32.mrb[0].mxu0
      %6083 = vmatprep.mubr.bf16.mxu0 0
      %6084 = vmatmul.mubr.bf16.gmra.mrb[0].mxu0 %v5944
      %v6085 = vpop.f32.mrb[0].mxu0
      %v6086 = vadd.f32 %v5890, %v6085
      %v6087 = vpop.f32.mrb[0].mxu0
      %v6088 = vpop.f32.mrb[0].mxu0
      %v6089 = vadd.f32 %v5893, %v6088
      %v6090 = vpop.f32.mrb[0].mxu0
      %6091 = vmatprep.mubr.bf16.mxu0 0
      %6092 = vmatmul.mubr.bf16.gmra.mrb[0].mxu0 %v5946
      %v6093 = vpop.f32.mrb[0].mxu0
      %v6094 = vadd.f32 %v5898, %v6093
      %v6095 = vpop.f32.mrb[0].mxu0
      %v6096 = vpop.f32.mrb[0].mxu0
      %v6097 = vadd.f32 %v5901, %v6096
      %v6098 = vpop.f32.mrb[0].mxu0
      %6099 = vmatprep.mubr.bf16.mxu0 0
      %6100 = vmatmul.mubr.bf16.gmra.mrb[0].mxu0 %v5948
      %v6101 = vpop.f32.mrb[0].mxu0
      %v6102 = vadd.f32 %v5906, %v6101
      %v6103 = vpop.f32.mrb[0].mxu0
      %v6104 = vpop.f32.mrb[0].mxu0
      %v6105 = vadd.f32 %v5909, %v6104
      %v6106 = vpop.f32.mrb[0].mxu0
      %6107 = vmatprep.mubr.bf16.mxu0 0
      %6108 = vmatmul.mubr.bf16.gmra.mrb[0].mxu0 %v5950
      %v6109 = vpop.f32.mrb[0].mxu0
      %v6110 = vadd.f32 %v5914, %v6109
      %v6111 = vpop.f32.mrb[0].mxu0
      %v6112 = vpop.f32.mrb[0].mxu0
      %v6113 = vadd.f32 %v5917, %v6112
      %v6114 = vpop.f32.mrb[0].mxu0
      %6115 = vdwg.mxu0
      %v6116 = vld [vmem:[%s2799] sm:$0xf]
      %v6117 = vld [vmem:[%s2799 + $0x4] sm:$0xf]
      %v6118 = vld [vmem:[%s2799 + $0x8] sm:$0x1]
      %v6119 = vld [vmem:[%s2799 + $0xc] sm:$0xf]
      %v6120 = vld [vmem:[%s2799 + $0x10] sm:$0xf]
      %v6121 = vld [vmem:[%s2799 + $0x14] sm:$0x1]
      %v6122 = vld [vmem:[%s2799 + $0x18] sm:$0xf]
      %v6123 = vld [vmem:[%s2799 + $0x1c] sm:$0xf]
      %v6124 = vld [vmem:[%s2799 + $0x20] sm:$0x1]
      %v6125 = vld [vmem:[%s2799 + $0x24] sm:$0xf]
      %v6126 = vld [vmem:[%s2799 + $0x28] sm:$0xf]
      %v6127 = vld [vmem:[%s2799 + $0x2c] sm:$0x1]
      %v6128 = vld [vmem:[%s2799 + $0x30] sm:$0xf]
      %v6129 = vld [vmem:[%s2799 + $0x34] sm:$0xf]
      %v6130 = vld [vmem:[%s2799 + $0x38] sm:$0x1]
      %v6131 = vld [vmem:[%s2799 + $0x3c] sm:$0xf]
      %v6132 = vld [vmem:[%s2799 + $0x40] sm:$0xf]
      %v6133 = vld [vmem:[%s2799 + $0x44] sm:$0x1]
      %v6134 = vld [vmem:[%s2799 + $0x48] sm:$0xf]
      %v6135 = vld [vmem:[%s2799 + $0x4c] sm:$0xf]
      %v6136 = vld [vmem:[%s2799 + $0x50] sm:$0x1]
      %v6137 = vld [vmem:[%s2799 + $0x54] sm:$0xf]
      %v6138 = vld [vmem:[%s2799 + $0x58] sm:$0xf]
      %v6139 = vld [vmem:[%s2799 + $0x5c] sm:$0x1]
      %v6140 = vld [vmem:[%s2799 + $0x60] sm:$0xf]
      %v6141 = vld [vmem:[%s2799 + $0x64] sm:$0xf]
      %v6142 = vld [vmem:[%s2799 + $0x68] sm:$0x1]
      %v6143 = vld [vmem:[%s2799 + $0x6c] sm:$0xf]
      %v6144 = vld [vmem:[%s2799 + $0x70] sm:$0xf]
      %v6145 = vld [vmem:[%s2799 + $0x74] sm:$0x1]
      %v6146 = vld [vmem:[%s2799 + $0x78] sm:$0xf]
      %v6147 = vld [vmem:[%s2799 + $0x7c] sm:$0xf]
      %v6148 = vld [vmem:[%s2799 + $0x80] sm:$0x1]
      %v6149 = vld [vmem:[%s2799 + $0x84] sm:$0xf]
      %v6150 = vld [vmem:[%s2799 + $0x88] sm:$0xf]
      %v6151 = vld [vmem:[%s2799 + $0x8c] sm:$0x1]
      %v6152 = vld [vmem:[%s2799 + $0x90] sm:$0xf]
      %v6153 = vld [vmem:[%s2799 + $0x94] sm:$0xf]
      %v6154 = vld [vmem:[%s2799 + $0x98] sm:$0x1]
      %v6155 = vld [vmem:[%s2799 + $0x9c] sm:$0xf]
      %v6156 = vld [vmem:[%s2799 + $0xa0] sm:$0xf]
      %v6157 = vld [vmem:[%s2799 + $0xa4] sm:$0x1]
      %v6158 = vld [vmem:[%s2799 + $0xa8] sm:$0xf]
      %v6159 = vld [vmem:[%s2799 + $0xac] sm:$0xf]
      %v6160 = vld [vmem:[%s2799 + $0xb0] sm:$0x1]
      %v6161 = vld [vmem:[%s2799 + $0xb4] sm:$0xf]
      %v6162 = vld [vmem:[%s2799 + $0xb8] sm:$0xf]
      %v6163 = vld [vmem:[%s2799 + $0xbc] sm:$0x1]
      %v6196 = vunpack.c.l.b16 %v6116
      %v6197 = vunpack.c.l.b16 %v6117
      %v6198 = vunpack.c.l.b16 %v6119
      %v6199 = vunpack.c.l.b16 %v6120
      %v6200 = vunpack.c.l.b16 %v6122
      %v6201 = vunpack.c.l.b16 %v6123
      %v6202 = vunpack.c.l.b16 %v6125
      %v6203 = vunpack.c.l.b16 %v6126
      %v6204 = vunpack.c.l.b16 %v6128
      %v6205 = vunpack.c.l.b16 %v6129
      %v6206 = vunpack.c.l.b16 %v6131
      %v6207 = vunpack.c.l.b16 %v6132
      %v6208 = vunpack.c.l.b16 %v6134
      %v6209 = vunpack.c.l.b16 %v6135
      %v6210 = vunpack.c.l.b16 %v6137
      %v6211 = vunpack.c.l.b16 %v6138
      %v6212 = vunpack.c.l.b16 %v6140
      %v6213 = vunpack.c.l.b16 %v6141
      %v6214 = vunpack.c.l.b16 %v6143
      %v6215 = vunpack.c.l.b16 %v6144
      %v6216 = vunpack.c.l.b16 %v6146
      %v6217 = vunpack.c.l.b16 %v6147
      %v6218 = vunpack.c.l.b16 %v6149
      %v6219 = vunpack.c.l.b16 %v6150
      %v6220 = vunpack.c.l.b16 %v6152
      %v6221 = vunpack.c.l.b16 %v6153
      %v6222 = vunpack.c.l.b16 %v6155
      %v6223 = vunpack.c.l.b16 %v6156
      %v6224 = vunpack.c.l.b16 %v6158
      %v6225 = vunpack.c.l.b16 %v6159
      %v6226 = vunpack.c.l.b16 %v6161
      %v6227 = vunpack.c.l.b16 %v6162
      %v6228 = vpack.c.b16 %v6197, %v6196
      %v6229 = vpack.c.b16 %v6199, %v6198
      %v6230 = vpack.c.b16 %v6201, %v6200
      %v6231 = vpack.c.b16 %v6203, %v6202
      %v6232 = vpack.c.b16 %v6205, %v6204
      %v6233 = vpack.c.b16 %v6207, %v6206
      %v6234 = vpack.c.b16 %v6209, %v6208
      %v6235 = vpack.c.b16 %v6211, %v6210
      %v6236 = vpack.c.b16 %v6213, %v6212
      %v6237 = vpack.c.b16 %v6215, %v6214
      %v6238 = vpack.c.b16 %v6217, %v6216
      %v6239 = vpack.c.b16 %v6219, %v6218
      %v6240 = vpack.c.b16 %v6221, %v6220
      %v6241 = vpack.c.b16 %v6223, %v6222
      %v6242 = vpack.c.b16 %v6225, %v6224
      %v6243 = vpack.c.b16 %v6227, %v6226
      %v6260 = vunpack.c.l.b16 %v6118
      %v6261 = vunpack.c.l.b16 %v6121
      %v6262 = vunpack.c.l.b16 %v6124
      %v6263 = vunpack.c.l.b16 %v6127
      %v6264 = vunpack.c.l.b16 %v6130
      %v6265 = vunpack.c.l.b16 %v6133
      %v6266 = vunpack.c.l.b16 %v6136
      %v6267 = vunpack.c.l.b16 %v6139
      %v6268 = vunpack.c.l.b16 %v6142
      %v6269 = vunpack.c.l.b16 %v6145
      %v6270 = vunpack.c.l.b16 %v6148
      %v6271 = vunpack.c.l.b16 %v6151
      %v6272 = vunpack.c.l.b16 %v6154
      %v6273 = vunpack.c.l.b16 %v6157
      %v6274 = vunpack.c.l.b16 %v6160
      %v6275 = vunpack.c.l.b16 %v6163
      %v6276 = vpack.c.b16 %v6260, %v6260
      %v6277 = vpack.c.b16 %v6261, %v6261
      %v6278 = vpack.c.b16 %v6262, %v6262
      %v6279 = vpack.c.b16 %v6263, %v6263
      %v6280 = vpack.c.b16 %v6264, %v6264
      %v6281 = vpack.c.b16 %v6265, %v6265
      %v6282 = vpack.c.b16 %v6266, %v6266
      %v6283 = vpack.c.b16 %v6267, %v6267
      %v6284 = vpack.c.b16 %v6268, %v6268
      %v6285 = vpack.c.b16 %v6269, %v6269
      %v6286 = vpack.c.b16 %v6270, %v6270
      %v6287 = vpack.c.b16 %v6271, %v6271
      %v6288 = vpack.c.b16 %v6272, %v6272
      %v6289 = vpack.c.b16 %v6273, %v6273
      %v6290 = vpack.c.b16 %v6274, %v6274
      %v6291 = vpack.c.b16 %v6275, %v6275
      %v6293 = vshrl.u32 %v6228, 16
      %v6295 = vshll.u32 %v6228, 16
      %v6297 = vrot.slane %v6295, 1
      %v6298 = vor.u32 %v6293, %v6297
      %v6300 = vshll.u32 %v6276, 16
      %v6302 = vrot.slane %v6300, 1
      %v6303 = vsel %vm1490, %v6298, %v6302
      %v6305 = vshrl.u32 %v6229, 16
      %v6307 = vshll.u32 %v6229, 16
      %v6309 = vrot.slane %v6307, 1
      %v6310 = vor.u32 %v6305, %v6309
      %v6312 = vshll.u32 %v6277, 16
      %v6314 = vrot.slane %v6312, 1
      %v6315 = vsel %vm1490, %v6310, %v6314
      %v6317 = vshrl.u32 %v6230, 16
      %v6319 = vshll.u32 %v6230, 16
      %v6321 = vrot.slane %v6319, 1
      %v6322 = vor.u32 %v6317, %v6321
      %v6324 = vshll.u32 %v6278, 16
      %v6326 = vrot.slane %v6324, 1
      %v6327 = vsel %vm1490, %v6322, %v6326
      %v6329 = vshrl.u32 %v6231, 16
      %v6331 = vshll.u32 %v6231, 16
      %v6333 = vrot.slane %v6331, 1
      %v6334 = vor.u32 %v6329, %v6333
      %v6336 = vshll.u32 %v6279, 16
      %v6338 = vrot.slane %v6336, 1
      %v6339 = vsel %vm1490, %v6334, %v6338
      %v6341 = vshrl.u32 %v6232, 16
      %v6343 = vshll.u32 %v6232, 16
      %v6345 = vrot.slane %v6343, 1
      %v6346 = vor.u32 %v6341, %v6345
      %v6348 = vshll.u32 %v6280, 16
      %v6350 = vrot.slane %v6348, 1
      %v6351 = vsel %vm1490, %v6346, %v6350
      %v6353 = vshrl.u32 %v6233, 16
      %v6355 = vshll.u32 %v6233, 16
      %v6357 = vrot.slane %v6355, 1
      %v6358 = vor.u32 %v6353, %v6357
      %v6360 = vshll.u32 %v6281, 16
      %v6362 = vrot.slane %v6360, 1
      %v6363 = vsel %vm1490, %v6358, %v6362
      %v6365 = vshrl.u32 %v6234, 16
      %v6367 = vshll.u32 %v6234, 16
      %v6369 = vrot.slane %v6367, 1
      %v6370 = vor.u32 %v6365, %v6369
      %v6372 = vshll.u32 %v6282, 16
      %v6374 = vrot.slane %v6372, 1
      %v6375 = vsel %vm1490, %v6370, %v6374
      %v6377 = vshrl.u32 %v6235, 16
      %v6379 = vshll.u32 %v6235, 16
      %v6381 = vrot.slane %v6379, 1
      %v6382 = vor.u32 %v6377, %v6381
      %v6384 = vshll.u32 %v6283, 16
      %v6386 = vrot.slane %v6384, 1
      %v6387 = vsel %vm1490, %v6382, %v6386
      %v6389 = vshrl.u32 %v6236, 16
      %v6391 = vshll.u32 %v6236, 16
      %v6393 = vrot.slane %v6391, 1
      %v6394 = vor.u32 %v6389, %v6393
      %v6396 = vshll.u32 %v6284, 16
      %v6398 = vrot.slane %v6396, 1
      %v6399 = vsel %vm1490, %v6394, %v6398
      %v6401 = vshrl.u32 %v6237, 16
      %v6403 = vshll.u32 %v6237, 16
      %v6405 = vrot.slane %v6403, 1
      %v6406 = vor.u32 %v6401, %v6405
      %v6408 = vshll.u32 %v6285, 16
      %v6410 = vrot.slane %v6408, 1
      %v6411 = vsel %vm1490, %v6406, %v6410
      %v6413 = vshrl.u32 %v6238, 16
      %v6415 = vshll.u32 %v6238, 16
      %v6417 = vrot.slane %v6415, 1
      %v6418 = vor.u32 %v6413, %v6417
      %v6420 = vshll.u32 %v6286, 16
      %v6422 = vrot.slane %v6420, 1
      %v6423 = vsel %vm1490, %v6418, %v6422
      %v6425 = vshrl.u32 %v6239, 16
      %v6427 = vshll.u32 %v6239, 16
      %v6429 = vrot.slane %v6427, 1
      %v6430 = vor.u32 %v6425, %v6429
      %v6432 = vshll.u32 %v6287, 16
      %v6434 = vrot.slane %v6432, 1
      %v6435 = vsel %vm1490, %v6430, %v6434
      %v6437 = vshrl.u32 %v6240, 16
      %v6439 = vshll.u32 %v6240, 16
      %v6441 = vrot.slane %v6439, 1
      %v6442 = vor.u32 %v6437, %v6441
      %v6444 = vshll.u32 %v6288, 16
      %v6446 = vrot.slane %v6444, 1
      %v6447 = vsel %vm1490, %v6442, %v6446
      %v6449 = vshrl.u32 %v6241, 16
      %v6451 = vshll.u32 %v6241, 16
      %v6453 = vrot.slane %v6451, 1
      %v6454 = vor.u32 %v6449, %v6453
      %v6456 = vshll.u32 %v6289, 16
      %v6458 = vrot.slane %v6456, 1
      %v6459 = vsel %vm1490, %v6454, %v6458
      %v6461 = vshrl.u32 %v6242, 16
      %v6463 = vshll.u32 %v6242, 16
      %v6465 = vrot.slane %v6463, 1
      %v6466 = vor.u32 %v6461, %v6465
      %v6468 = vshll.u32 %v6290, 16
      %v6470 = vrot.slane %v6468, 1
      %v6471 = vsel %vm1490, %v6466, %v6470
      %v6473 = vshrl.u32 %v6243, 16
      %v6475 = vshll.u32 %v6243, 16
      %v6477 = vrot.slane %v6475, 1
      %v6478 = vor.u32 %v6473, %v6477
      %v6480 = vshll.u32 %v6291, 16
      %v6482 = vrot.slane %v6480, 1
      %v6483 = vsel %vm1490, %v6478, %v6482
      %6484 = vrot.lane.b32.xlu0 %v6303, 2
      %v6485 = vpop.permute.xlu0 %6484
      %6486 = vrot.lane.b32.xlu0 %v6315, 2
      %v6487 = vpop.permute.xlu0 %6486
      %6488 = vrot.lane.b32.xlu0 %v6327, 2
      %v6489 = vpop.permute.xlu0 %6488
      %6490 = vrot.lane.b32.xlu0 %v6339, 2
      %v6491 = vpop.permute.xlu0 %6490
      %6492 = vrot.lane.b32.xlu0 %v6351, 2
      %v6493 = vpop.permute.xlu0 %6492
      %6494 = vrot.lane.b32.xlu0 %v6363, 2
      %v6495 = vpop.permute.xlu0 %6494
      %6496 = vrot.lane.b32.xlu0 %v6375, 2
      %v6497 = vpop.permute.xlu0 %6496
      %6498 = vrot.lane.b32.xlu0 %v6387, 2
      %v6499 = vpop.permute.xlu0 %6498
      %6500 = vrot.lane.b32.xlu0 %v6399, 2
      %v6501 = vpop.permute.xlu0 %6500
      %6502 = vrot.lane.b32.xlu0 %v6411, 2
      %v6503 = vpop.permute.xlu0 %6502
      %6504 = vrot.lane.b32.xlu0 %v6423, 2
      %v6505 = vpop.permute.xlu0 %6504
      %6506 = vrot.lane.b32.xlu0 %v6435, 2
      %v6507 = vpop.permute.xlu0 %6506
      %6508 = vrot.lane.b32.xlu0 %v6447, 2
      %v6509 = vpop.permute.xlu0 %6508
      %6510 = vrot.lane.b32.xlu0 %v6459, 2
      %v6511 = vpop.permute.xlu0 %6510
      %6512 = vrot.lane.b32.xlu0 %v6471, 2
      %v6513 = vpop.permute.xlu0 %6512
      %6514 = vrot.lane.b32.xlu0 %v6483, 2
      %v6515 = vpop.permute.xlu0 %6514
      %v6516 = vrot.slane %v6228, 1
      %v6517 = vrot.slane %v6276, 1
      %v6518 = vsel %vm1715, %v6516, %v6517
      %v6519 = vrot.slane %v6229, 1
      %v6520 = vrot.slane %v6277, 1
      %v6521 = vsel %vm1715, %v6519, %v6520
      %v6522 = vrot.slane %v6230, 1
      %v6523 = vrot.slane %v6278, 1
      %v6524 = vsel %vm1715, %v6522, %v6523
      %v6525 = vrot.slane %v6231, 1
      %v6526 = vrot.slane %v6279, 1
      %v6527 = vsel %vm1715, %v6525, %v6526
      %v6528 = vrot.slane %v6232, 1
      %v6529 = vrot.slane %v6280, 1
      %v6530 = vsel %vm1715, %v6528, %v6529
      %v6531 = vrot.slane %v6233, 1
      %v6532 = vrot.slane %v6281, 1
      %v6533 = vsel %vm1715, %v6531, %v6532
      %v6534 = vrot.slane %v6234, 1
      %v6535 = vrot.slane %v6282, 1
      %v6536 = vsel %vm1715, %v6534, %v6535
      %v6537 = vrot.slane %v6235, 1
      %v6538 = vrot.slane %v6283, 1
      %v6539 = vsel %vm1715, %v6537, %v6538
      %v6540 = vrot.slane %v6236, 1
      %v6541 = vrot.slane %v6284, 1
      %v6542 = vsel %vm1715, %v6540, %v6541
      %v6543 = vrot.slane %v6237, 1
      %v6544 = vrot.slane %v6285, 1
      %v6545 = vsel %vm1715, %v6543, %v6544
      %v6546 = vrot.slane %v6238, 1
      %v6547 = vrot.slane %v6286, 1
      %v6548 = vsel %vm1715, %v6546, %v6547
      %v6549 = vrot.slane %v6239, 1
      %v6550 = vrot.slane %v6287, 1
      %v6551 = vsel %vm1715, %v6549, %v6550
      %v6552 = vrot.slane %v6240, 1
      %v6553 = vrot.slane %v6288, 1
      %v6554 = vsel %vm1715, %v6552, %v6553
      %v6555 = vrot.slane %v6241, 1
      %v6556 = vrot.slane %v6289, 1
      %v6557 = vsel %vm1715, %v6555, %v6556
      %v6558 = vrot.slane %v6242, 1
      %v6559 = vrot.slane %v6290, 1
      %v6560 = vsel %vm1715, %v6558, %v6559
      %v6561 = vrot.slane %v6243, 1
      %v6562 = vrot.slane %v6291, 1
      %v6563 = vsel %vm1715, %v6561, %v6562
      %6564 = vrot.lane.b32.xlu0 %v6518, 4
      %v6565 = vpop.permute.xlu0 %6564
      %6566 = vrot.lane.b32.xlu0 %v6521, 4
      %v6567 = vpop.permute.xlu0 %6566
      %6568 = vrot.lane.b32.xlu0 %v6524, 4
      %v6569 = vpop.permute.xlu0 %6568
      %6570 = vrot.lane.b32.xlu0 %v6527, 4
      %v6571 = vpop.permute.xlu0 %6570
      %6572 = vrot.lane.b32.xlu0 %v6530, 4
      %v6573 = vpop.permute.xlu0 %6572
      %6574 = vrot.lane.b32.xlu0 %v6533, 4
      %v6575 = vpop.permute.xlu0 %6574
      %6576 = vrot.lane.b32.xlu0 %v6536, 4
      %v6577 = vpop.permute.xlu0 %6576
      %6578 = vrot.lane.b32.xlu0 %v6539, 4
      %v6579 = vpop.permute.xlu0 %6578
      %6580 = vrot.lane.b32.xlu0 %v6542, 4
      %v6581 = vpop.permute.xlu0 %6580
      %6582 = vrot.lane.b32.xlu0 %v6545, 4
      %v6583 = vpop.permute.xlu0 %6582
      %6584 = vrot.lane.b32.xlu0 %v6548, 4
      %v6585 = vpop.permute.xlu0 %6584
      %6586 = vrot.lane.b32.xlu0 %v6551, 4
      %v6587 = vpop.permute.xlu0 %6586
      %6588 = vrot.lane.b32.xlu0 %v6554, 4
      %v6589 = vpop.permute.xlu0 %6588
      %6590 = vrot.lane.b32.xlu0 %v6557, 4
      %v6591 = vpop.permute.xlu0 %6590
      %6592 = vrot.lane.b32.xlu0 %v6560, 4
      %v6593 = vpop.permute.xlu0 %6592
      %6594 = vrot.lane.b32.xlu0 %v6563, 4
      %v6595 = vpop.permute.xlu0 %6594
      %v6597 = vsel %vm1796, %v6228, %v6485
      %v6599 = vsel %vm1796, %v6229, %v6487
      %v6601 = vsel %vm1796, %v6230, %v6489
      %v6603 = vsel %vm1796, %v6231, %v6491
      %v6605 = vsel %vm1796, %v6232, %v6493
      %v6607 = vsel %vm1796, %v6233, %v6495
      %v6609 = vsel %vm1796, %v6234, %v6497
      %v6611 = vsel %vm1796, %v6235, %v6499
      %v6613 = vsel %vm1796, %v6236, %v6501
      %v6615 = vsel %vm1796, %v6237, %v6503
      %v6617 = vsel %vm1796, %v6238, %v6505
      %v6619 = vsel %vm1796, %v6239, %v6507
      %v6621 = vsel %vm1796, %v6240, %v6509
      %v6623 = vsel %vm1796, %v6241, %v6511
      %v6625 = vsel %vm1796, %v6242, %v6513
      %v6627 = vsel %vm1796, %v6243, %v6515
      %v6629 = vsel %vm468, %v6597, %v6565
      %v6631 = vsel %vm468, %v6599, %v6567
      %v6633 = vsel %vm468, %v6601, %v6569
      %v6635 = vsel %vm468, %v6603, %v6571
      %v6637 = vsel %vm468, %v6605, %v6573
      %v6639 = vsel %vm468, %v6607, %v6575
      %v6641 = vsel %vm468, %v6609, %v6577
      %v6643 = vsel %vm468, %v6611, %v6579
      %v6645 = vsel %vm468, %v6613, %v6581
      %v6647 = vsel %vm468, %v6615, %v6583
      %v6649 = vsel %vm468, %v6617, %v6585
      %v6651 = vsel %vm468, %v6619, %v6587
      %v6653 = vsel %vm468, %v6621, %v6589
      %v6655 = vsel %vm468, %v6623, %v6591
      %v6657 = vsel %vm468, %v6625, %v6593
      %v6659 = vsel %vm468, %v6627, %v6595
      %v6660 = vsel %vm2405, %v6629, 0
      %v6662 = vsel %vm2405, %v6631, 0
      %v6664 = vsel %vm2405, %v6633, 0
      %v6666 = vsel %vm2405, %v6635, 0
      %v6668 = vsel %vm2405, %v6637, 0
      %v6670 = vsel %vm2405, %v6639, 0
      %v6672 = vsel %vm2405, %v6641, 0
      %v6674 = vsel %vm2405, %v6643, 0
      %v6676 = vsel %vm2405, %v6645, 0
      %v6678 = vsel %vm2405, %v6647, 0
      %v6680 = vsel %vm2405, %v6649, 0
      %v6682 = vsel %vm2405, %v6651, 0
      %v6684 = vsel %vm2405, %v6653, 0
      %v6686 = vsel %vm2405, %v6655, 0
      %v6688 = vsel %vm2405, %v6657, 0
      %v6690 = vsel %vm2405, %v6659, 0
      %v6693 = vsel %vm2438, %v4635, 0
      %6695 = vmatprep.subr.bf16.mxu0 0
      %6696 = vmatpush1.bf16.msra.mxu0 %v6693
      %6697 = vmatprep.subr.bf16.mxu0 0
      %6698 = vmatpush1.bf16.msra.mxu0 0
      %6699 = vmatprep.subr.bf16.mxu0 0
      %6700 = vmatpush1.bf16.msra.mxu0 0
      %6701 = vmatprep.subr.bf16.mxu0 0
      %6702 = vmatpush1.bf16.msra.mxu0 0
      %6703 = vmatprep.subr.bf16.mxu0 0
      %6704 = vmatpush1.bf16.msra.mxu0 0
      %6705 = vmatprep.subr.bf16.mxu0 0
      %6706 = vmatpush1.bf16.msra.mxu0 0
      %6707 = vmatprep.subr.bf16.mxu0 0
      %6708 = vmatpush1.bf16.msra.mxu0 0
      %6709 = vmatprep.subr.bf16.mxu0 0
      %6710 = vmatpush1.bf16.msra.mxu0 0
      %6711 = vmatprep.subr.bf16.mxu0 0
      %6712 = vmatpush1.bf16.msra.mxu0 0
      %6713 = vmatprep.subr.bf16.mxu0 0
      %6714 = vmatpush1.bf16.msra.mxu0 0
      %6715 = vmatprep.subr.bf16.mxu0 0
      %6716 = vmatpush1.bf16.msra.mxu0 0
      %6717 = vmatprep.subr.bf16.mxu0 0
      %6718 = vmatpush1.bf16.msra.mxu0 0
      %6719 = vmatprep.subr.bf16.mxu0 0
      %6720 = vmatpush1.bf16.msra.mxu0 0
      %6721 = vmatprep.subr.bf16.mxu0 0
      %6722 = vmatpush1.bf16.msra.mxu0 0
      %6723 = vmatprep.subr.bf16.mxu0 0
      %6724 = vmatpush1.bf16.msra.mxu0 0
      %6725 = vmatprep.subr.bf16.mxu0 0
      %6726 = vmatpush1.bf16.msra.mxu0 0
      %6727 = vmatprep.mubr.bf16.mxu0 0
      %6728 = vmatmul.mubr.bf16.gmra.mrb[0].mxu0 %v6660
      %v6729 = vpop.f32.mrb[0].mxu0
      %v6730 = vadd.f32 0.0, %v6729
      %v6731 = vpop.f32.mrb[0].mxu0
      %v6732 = vpop.f32.mrb[0].mxu0
      %v6733 = vadd.f32 0.0, %v6732
      %v6734 = vpop.f32.mrb[0].mxu0
      %6735 = vmatprep.mubr.bf16.mxu0 0
      %6736 = vmatmul.mubr.bf16.gmra.mrb[0].mxu0 %v6662
      %v6737 = vpop.f32.mrb[0].mxu0
      %v6738 = vadd.f32 0.0, %v6737
      %v6739 = vpop.f32.mrb[0].mxu0
      %v6740 = vpop.f32.mrb[0].mxu0
      %v6741 = vadd.f32 0.0, %v6740
      %v6742 = vpop.f32.mrb[0].mxu0
      %6743 = vmatprep.mubr.bf16.mxu0 0
      %6744 = vmatmul.mubr.bf16.gmra.mrb[0].mxu0 %v6664
      %v6745 = vpop.f32.mrb[0].mxu0
      %v6746 = vadd.f32 0.0, %v6745
      %v6747 = vpop.f32.mrb[0].mxu0
      %v6748 = vpop.f32.mrb[0].mxu0
      %v6749 = vadd.f32 0.0, %v6748
      %v6750 = vpop.f32.mrb[0].mxu0
      %6751 = vmatprep.mubr.bf16.mxu0 0
      %6752 = vmatmul.mubr.bf16.gmra.mrb[0].mxu0 %v6666
      %v6753 = vpop.f32.mrb[0].mxu0
      %v6754 = vadd.f32 0.0, %v6753
      %v6755 = vpop.f32.mrb[0].mxu0
      %v6756 = vpop.f32.mrb[0].mxu0
      %v6757 = vadd.f32 0.0, %v6756
      %v6758 = vpop.f32.mrb[0].mxu0
      %6759 = vmatprep.mubr.bf16.mxu0 0
      %6760 = vmatmul.mubr.bf16.gmra.mrb[0].mxu0 %v6668
      %v6761 = vpop.f32.mrb[0].mxu0
      %v6762 = vadd.f32 0.0, %v6761
      %v6763 = vpop.f32.mrb[0].mxu0
      %v6764 = vpop.f32.mrb[0].mxu0
      %v6765 = vadd.f32 0.0, %v6764
      %v6766 = vpop.f32.mrb[0].mxu0
      %6767 = vmatprep.mubr.bf16.mxu0 0
      %6768 = vmatmul.mubr.bf16.gmra.mrb[0].mxu0 %v6670
      %v6769 = vpop.f32.mrb[0].mxu0
      %v6770 = vadd.f32 0.0, %v6769
      %v6771 = vpop.f32.mrb[0].mxu0
      %v6772 = vpop.f32.mrb[0].mxu0
      %v6773 = vadd.f32 0.0, %v6772
      %v6774 = vpop.f32.mrb[0].mxu0
      %6775 = vmatprep.mubr.bf16.mxu0 0
      %6776 = vmatmul.mubr.bf16.gmra.mrb[0].mxu0 %v6672
      %v6777 = vpop.f32.mrb[0].mxu0
      %v6778 = vadd.f32 0.0, %v6777
      %v6779 = vpop.f32.mrb[0].mxu0
      %v6780 = vpop.f32.mrb[0].mxu0
      %v6781 = vadd.f32 0.0, %v6780
      %v6782 = vpop.f32.mrb[0].mxu0
      %6783 = vmatprep.mubr.bf16.mxu0 0
      %6784 = vmatmul.mubr.bf16.gmra.mrb[0].mxu0 %v6674
      %v6785 = vpop.f32.mrb[0].mxu0
      %v6786 = vadd.f32 0.0, %v6785
      %v6787 = vpop.f32.mrb[0].mxu0
      %v6788 = vpop.f32.mrb[0].mxu0
      %v6789 = vadd.f32 0.0, %v6788
      %v6790 = vpop.f32.mrb[0].mxu0
      %6791 = vmatprep.mubr.bf16.mxu0 0
      %6792 = vmatmul.mubr.bf16.gmra.mrb[0].mxu0 %v6676
      %v6793 = vpop.f32.mrb[0].mxu0
      %v6794 = vadd.f32 0.0, %v6793
      %v6795 = vpop.f32.mrb[0].mxu0
      %v6796 = vpop.f32.mrb[0].mxu0
      %v6797 = vadd.f32 0.0, %v6796
      %v6798 = vpop.f32.mrb[0].mxu0
      %6799 = vmatprep.mubr.bf16.mxu0 0
      %6800 = vmatmul.mubr.bf16.gmra.mrb[0].mxu0 %v6678
      %v6801 = vpop.f32.mrb[0].mxu0
      %v6802 = vadd.f32 0.0, %v6801
      %v6803 = vpop.f32.mrb[0].mxu0
      %v6804 = vpop.f32.mrb[0].mxu0
      %v6805 = vadd.f32 0.0, %v6804
      %v6806 = vpop.f32.mrb[0].mxu0
      %6807 = vmatprep.mubr.bf16.mxu0 0
      %6808 = vmatmul.mubr.bf16.gmra.mrb[0].mxu0 %v6680
      %v6809 = vpop.f32.mrb[0].mxu0
      %v6810 = vadd.f32 0.0, %v6809
      %v6811 = vpop.f32.mrb[0].mxu0
      %v6812 = vpop.f32.mrb[0].mxu0
      %v6813 = vadd.f32 0.0, %v6812
      %v6814 = vpop.f32.mrb[0].mxu0
      %6815 = vmatprep.mubr.bf16.mxu0 0
      %6816 = vmatmul.mubr.bf16.gmra.mrb[0].mxu0 %v6682
      %v6817 = vpop.f32.mrb[0].mxu0
      %v6818 = vadd.f32 0.0, %v6817
      %v6819 = vpop.f32.mrb[0].mxu0
      %v6820 = vpop.f32.mrb[0].mxu0
      %v6821 = vadd.f32 0.0, %v6820
      %v6822 = vpop.f32.mrb[0].mxu0
      %6823 = vmatprep.mubr.bf16.mxu0 0
      %6824 = vmatmul.mubr.bf16.gmra.mrb[0].mxu0 %v6684
      %v6825 = vpop.f32.mrb[0].mxu0
      %v6826 = vadd.f32 0.0, %v6825
      %v6827 = vpop.f32.mrb[0].mxu0
      %v6828 = vpop.f32.mrb[0].mxu0
      %v6829 = vadd.f32 0.0, %v6828
      %v6830 = vpop.f32.mrb[0].mxu0
      %6831 = vmatprep.mubr.bf16.mxu0 0
      %6832 = vmatmul.mubr.bf16.gmra.mrb[0].mxu0 %v6686
      %v6833 = vpop.f32.mrb[0].mxu0
      %v6834 = vadd.f32 0.0, %v6833
      %v6835 = vpop.f32.mrb[0].mxu0
      %v6836 = vpop.f32.mrb[0].mxu0
      %v6837 = vadd.f32 0.0, %v6836
      %v6838 = vpop.f32.mrb[0].mxu0
      %6839 = vmatprep.mubr.bf16.mxu0 0
      %6840 = vmatmul.mubr.bf16.gmra.mrb[0].mxu0 %v6688
      %v6841 = vpop.f32.mrb[0].mxu0
      %v6842 = vadd.f32 0.0, %v6841
      %v6843 = vpop.f32.mrb[0].mxu0
      %v6844 = vpop.f32.mrb[0].mxu0
      %v6845 = vadd.f32 0.0, %v6844
      %v6846 = vpop.f32.mrb[0].mxu0
      %6847 = vmatprep.mubr.bf16.mxu0 0
      %6848 = vmatmul.mubr.bf16.gmra.mrb[0].mxu0 %v6690
      %v6849 = vpop.f32.mrb[0].mxu0
      %v6850 = vadd.f32 0.0, %v6849
      %v6851 = vpop.f32.mrb[0].mxu0
      %v6852 = vpop.f32.mrb[0].mxu0
      %v6853 = vadd.f32 0.0, %v6852
      %v6854 = vpop.f32.mrb[0].mxu0
      %6855 = vdwg.mxu0
      %v6856 = vadd.f32 %v5990, %v6730
      %v6857 = vadd.f32 %v5993, %v6733
      %v6858 = vadd.f32 %v5998, %v6738
      %v6859 = vadd.f32 %v6001, %v6741
      %v6860 = vadd.f32 %v6006, %v6746
      %v6861 = vadd.f32 %v6009, %v6749
      %v6862 = vadd.f32 %v6014, %v6754
      %v6863 = vadd.f32 %v6017, %v6757
      %v6864 = vadd.f32 %v6022, %v6762
      %v6865 = vadd.f32 %v6025, %v6765
      %v6866 = vadd.f32 %v6030, %v6770
      %v6867 = vadd.f32 %v6033, %v6773
      %v6868 = vadd.f32 %v6038, %v6778
      %v6869 = vadd.f32 %v6041, %v6781
      %v6870 = vadd.f32 %v6046, %v6786
      %v6871 = vadd.f32 %v6049, %v6789
      %v6872 = vadd.f32 %v6054, %v6794
      %v6873 = vadd.f32 %v6057, %v6797
      %v6874 = vadd.f32 %v6062, %v6802
      %v6875 = vadd.f32 %v6065, %v6805
      %v6876 = vadd.f32 %v6070, %v6810
      %v6877 = vadd.f32 %v6073, %v6813
      %v6878 = vadd.f32 %v6078, %v6818
      %v6879 = vadd.f32 %v6081, %v6821
      %v6880 = vadd.f32 %v6086, %v6826
      %v6881 = vadd.f32 %v6089, %v6829
      %v6882 = vadd.f32 %v6094, %v6834
      %v6883 = vadd.f32 %v6097, %v6837
      %v6884 = vadd.f32 %v6102, %v6842
      %v6885 = vadd.f32 %v6105, %v6845
      %v6886 = vadd.f32 %v6110, %v6850
      %v6887 = vadd.f32 %v6113, %v6853
      %s6888 = scalar_lea.vmem %s4, 1
      %v6889 = vld [vmem:[%s6888] sm:$0x1]
      %v6891 = vlaneseq
      %v6892 = vshrl.u32 %v6891, 7
      %v6893 = vsub.s32 0, %v6892
      %v6894 = vrot.slane %v6889, %v6893
      %v6896 = vadd.f32 %v6856, %v6894
      %v6897 = vadd.f32 %v6857, %v6894
      %v6898 = vadd.f32 %v6858, %v6894
      %v6899 = vadd.f32 %v6859, %v6894
      %v6900 = vadd.f32 %v6860, %v6894
      %v6901 = vadd.f32 %v6861, %v6894
      %v6902 = vadd.f32 %v6862, %v6894
      %v6903 = vadd.f32 %v6863, %v6894
      %v6904 = vadd.f32 %v6864, %v6894
      %v6905 = vadd.f32 %v6865, %v6894
      %v6906 = vadd.f32 %v6866, %v6894
      %v6907 = vadd.f32 %v6867, %v6894
      %v6908 = vadd.f32 %v6868, %v6894
      %v6909 = vadd.f32 %v6869, %v6894
      %v6910 = vadd.f32 %v6870, %v6894
      %v6911 = vadd.f32 %v6871, %v6894
      %v6912 = vadd.f32 %v6872, %v6894
      %v6913 = vadd.f32 %v6873, %v6894
      %v6914 = vadd.f32 %v6874, %v6894
      %v6915 = vadd.f32 %v6875, %v6894
      %v6916 = vadd.f32 %v6876, %v6894
      %v6917 = vadd.f32 %v6877, %v6894
      %v6918 = vadd.f32 %v6878, %v6894
      %v6919 = vadd.f32 %v6879, %v6894
      %v6920 = vadd.f32 %v6880, %v6894
      %v6921 = vadd.f32 %v6881, %v6894
      %v6922 = vadd.f32 %v6882, %v6894
      %v6923 = vadd.f32 %v6883, %v6894
      %v6924 = vadd.f32 %v6884, %v6894
      %v6925 = vadd.f32 %v6885, %v6894
      %v6926 = vadd.f32 %v6886, %v6894
      %v6927 = vadd.f32 %v6887, %v6894
      %vm6928 = vcmp.gt.f32.partialorder %v6896, 0.0
      %vm6929 = vcmp.gt.f32.partialorder %v6897, 0.0
      %vm6930 = vcmp.gt.f32.partialorder %v6898, 0.0
      %vm6931 = vcmp.gt.f32.partialorder %v6899, 0.0
      %vm6932 = vcmp.gt.f32.partialorder %v6900, 0.0
      %vm6933 = vcmp.gt.f32.partialorder %v6901, 0.0
      %vm6934 = vcmp.gt.f32.partialorder %v6902, 0.0
      %vm6935 = vcmp.gt.f32.partialorder %v6903, 0.0
      %vm6936 = vcmp.gt.f32.partialorder %v6904, 0.0
      %vm6937 = vcmp.gt.f32.partialorder %v6905, 0.0
      %vm6938 = vcmp.gt.f32.partialorder %v6906, 0.0
      %vm6939 = vcmp.gt.f32.partialorder %v6907, 0.0
      %vm6940 = vcmp.gt.f32.partialorder %v6908, 0.0
      %vm6941 = vcmp.gt.f32.partialorder %v6909, 0.0
      %vm6942 = vcmp.gt.f32.partialorder %v6910, 0.0
      %vm6943 = vcmp.gt.f32.partialorder %v6911, 0.0
      %vm6944 = vcmp.gt.f32.partialorder %v6912, 0.0
      %vm6945 = vcmp.gt.f32.partialorder %v6913, 0.0
      %vm6946 = vcmp.gt.f32.partialorder %v6914, 0.0
      %vm6947 = vcmp.gt.f32.partialorder %v6915, 0.0
      %vm6948 = vcmp.gt.f32.partialorder %v6916, 0.0
      %vm6949 = vcmp.gt.f32.partialorder %v6917, 0.0
      %vm6950 = vcmp.gt.f32.partialorder %v6918, 0.0
      %vm6951 = vcmp.gt.f32.partialorder %v6919, 0.0
      %vm6952 = vcmp.gt.f32.partialorder %v6920, 0.0
      %vm6953 = vcmp.gt.f32.partialorder %v6921, 0.0
      %vm6954 = vcmp.gt.f32.partialorder %v6922, 0.0
      %vm6955 = vcmp.gt.f32.partialorder %v6923, 0.0
      %vm6956 = vcmp.gt.f32.partialorder %v6924, 0.0
      %vm6957 = vcmp.gt.f32.partialorder %v6925, 0.0
      %vm6958 = vcmp.gt.f32.partialorder %v6926, 0.0
      %vm6959 = vcmp.gt.f32.partialorder %v6927, 0.0
      %v6960 = vmul.f32 %v6896, 0.1
      %v6961 = vmul.f32 %v6897, 0.1
      %v6962 = vmul.f32 %v6898, 0.1
      %v6963 = vmul.f32 %v6899, 0.1
      %v6964 = vmul.f32 %v6900, 0.1
      %v6965 = vmul.f32 %v6901, 0.1
      %v6966 = vmul.f32 %v6902, 0.1
      %v6967 = vmul.f32 %v6903, 0.1
      %v6968 = vmul.f32 %v6904, 0.1
      %v6969 = vmul.f32 %v6905, 0.1
      %v6970 = vmul.f32 %v6906, 0.1
      %v6971 = vmul.f32 %v6907, 0.1
      %v6972 = vmul.f32 %v6908, 0.1
      %v6973 = vmul.f32 %v6909, 0.1
      %v6974 = vmul.f32 %v6910, 0.1
      %v6975 = vmul.f32 %v6911, 0.1
      %v6976 = vmul.f32 %v6912, 0.1
      %v6977 = vmul.f32 %v6913, 0.1
      %v6978 = vmul.f32 %v6914, 0.1
      %v6979 = vmul.f32 %v6915, 0.1
      %v6980 = vmul.f32 %v6916, 0.1
      %v6981 = vmul.f32 %v6917, 0.1
      %v6982 = vmul.f32 %v6918, 0.1
      %v6983 = vmul.f32 %v6919, 0.1
      %v6984 = vmul.f32 %v6920, 0.1
      %v6985 = vmul.f32 %v6921, 0.1
      %v6986 = vmul.f32 %v6922, 0.1
      %v6987 = vmul.f32 %v6923, 0.1
      %v6988 = vmul.f32 %v6924, 0.1
      %v6989 = vmul.f32 %v6925, 0.1
      %v6990 = vmul.f32 %v6926, 0.1
      %v6991 = vmul.f32 %v6927, 0.1
      %v6992 = vsel %vm6928, %v6896, %v6960
      %v6993 = vsel %vm6929, %v6897, %v6961
      %v6994 = vsel %vm6930, %v6898, %v6962
      %v6995 = vsel %vm6931, %v6899, %v6963
      %v6996 = vsel %vm6932, %v6900, %v6964
      %v6997 = vsel %vm6933, %v6901, %v6965
      %v6998 = vsel %vm6934, %v6902, %v6966
      %v6999 = vsel %vm6935, %v6903, %v6967
      %v7000 = vsel %vm6936, %v6904, %v6968
      %v7001 = vsel %vm6937, %v6905, %v6969
      %v7002 = vsel %vm6938, %v6906, %v6970
      %v7003 = vsel %vm6939, %v6907, %v6971
      %v7004 = vsel %vm6940, %v6908, %v6972
      %v7005 = vsel %vm6941, %v6909, %v6973
      %v7006 = vsel %vm6942, %v6910, %v6974
      %v7007 = vsel %vm6943, %v6911, %v6975
      %v7008 = vsel %vm6944, %v6912, %v6976
      %v7009 = vsel %vm6945, %v6913, %v6977
      %v7010 = vsel %vm6946, %v6914, %v6978
      %v7011 = vsel %vm6947, %v6915, %v6979
      %v7012 = vsel %vm6948, %v6916, %v6980
      %v7013 = vsel %vm6949, %v6917, %v6981
      %v7014 = vsel %vm6950, %v6918, %v6982
      %v7015 = vsel %vm6951, %v6919, %v6983
      %v7016 = vsel %vm6952, %v6920, %v6984
      %v7017 = vsel %vm6953, %v6921, %v6985
      %v7018 = vsel %vm6954, %v6922, %v6986
      %v7019 = vsel %vm6955, %v6923, %v6987
      %v7020 = vsel %vm6956, %v6924, %v6988
      %v7021 = vsel %vm6957, %v6925, %v6989
      %v7022 = vsel %vm6958, %v6926, %v6990
      %v7023 = vsel %vm6959, %v6927, %v6991
      %v7024 = vunpack.c.l.bf16 %v3771
      %v7025 = vunpack.c.h.bf16 %v3771
      %v7026 = vunpack.c.l.bf16 %v3772
      %v7027 = vunpack.c.h.bf16 %v3772
      %v7028 = vunpack.c.l.bf16 %v3773
      %v7029 = vunpack.c.h.bf16 %v3773
      %v7030 = vunpack.c.l.bf16 %v3774
      %v7031 = vunpack.c.h.bf16 %v3774
      %v7032 = vunpack.c.l.bf16 %v3775
      %v7033 = vunpack.c.h.bf16 %v3775
      %v7034 = vunpack.c.l.bf16 %v3776
      %v7035 = vunpack.c.h.bf16 %v3776
      %v7036 = vunpack.c.l.bf16 %v3777
      %v7037 = vunpack.c.h.bf16 %v3777
      %v7038 = vunpack.c.l.bf16 %v3778
      %v7039 = vunpack.c.h.bf16 %v3778
      %v7040 = vunpack.c.l.bf16 %v3779
      %v7041 = vunpack.c.h.bf16 %v3779
      %v7042 = vunpack.c.l.bf16 %v3780
      %v7043 = vunpack.c.h.bf16 %v3780
      %v7044 = vunpack.c.l.bf16 %v3781
      %v7045 = vunpack.c.h.bf16 %v3781
      %v7046 = vunpack.c.l.bf16 %v3782
      %v7047 = vunpack.c.h.bf16 %v3782
      %v7048 = vunpack.c.l.bf16 %v3783
      %v7049 = vunpack.c.h.bf16 %v3783
      %v7050 = vunpack.c.l.bf16 %v3784
      %v7051 = vunpack.c.h.bf16 %v3784
      %v7052 = vunpack.c.l.bf16 %v3785
      %v7053 = vunpack.c.h.bf16 %v3785
      %v7054 = vunpack.c.l.bf16 %v3786
      %v7055 = vunpack.c.h.bf16 %v3786
      %v7056 = vadd.f32 %v6992, %v7024
      %v7057 = vadd.f32 %v6993, %v7025
      %v7058 = vadd.f32 %v6994, %v7026
      %v7059 = vadd.f32 %v6995, %v7027
      %v7060 = vadd.f32 %v6996, %v7028
      %v7061 = vadd.f32 %v6997, %v7029
      %v7062 = vadd.f32 %v6998, %v7030
      %v7063 = vadd.f32 %v6999, %v7031
      %v7064 = vadd.f32 %v7000, %v7032
      %v7065 = vadd.f32 %v7001, %v7033
      %v7066 = vadd.f32 %v7002, %v7034
      %v7067 = vadd.f32 %v7003, %v7035
      %v7068 = vadd.f32 %v7004, %v7036
      %v7069 = vadd.f32 %v7005, %v7037
      %v7070 = vadd.f32 %v7006, %v7038
      %v7071 = vadd.f32 %v7007, %v7039
      %v7072 = vadd.f32 %v7008, %v7040
      %v7073 = vadd.f32 %v7009, %v7041
      %v7074 = vadd.f32 %v7010, %v7042
      %v7075 = vadd.f32 %v7011, %v7043
      %v7076 = vadd.f32 %v7012, %v7044
      %v7077 = vadd.f32 %v7013, %v7045
      %v7078 = vadd.f32 %v7014, %v7046
      %v7079 = vadd.f32 %v7015, %v7047
      %v7080 = vadd.f32 %v7016, %v7048
      %v7081 = vadd.f32 %v7017, %v7049
      %v7082 = vadd.f32 %v7018, %v7050
      %v7083 = vadd.f32 %v7019, %v7051
      %v7084 = vadd.f32 %v7020, %v7052
      %v7085 = vadd.f32 %v7021, %v7053
      %v7086 = vadd.f32 %v7022, %v7054
      %v7087 = vadd.f32 %v7023, %v7055
      %v7088 = vpack.c.bf16 %v7057, %v7056
      %v7089 = vpack.c.bf16 %v7059, %v7058
      %v7090 = vpack.c.bf16 %v7061, %v7060
      %v7091 = vpack.c.bf16 %v7063, %v7062
      %v7092 = vpack.c.bf16 %v7065, %v7064
      %v7093 = vpack.c.bf16 %v7067, %v7066
      %v7094 = vpack.c.bf16 %v7069, %v7068
      %v7095 = vpack.c.bf16 %v7071, %v7070
      %v7096 = vpack.c.bf16 %v7073, %v7072
      %v7097 = vpack.c.bf16 %v7075, %v7074
      %v7098 = vpack.c.bf16 %v7077, %v7076
      %v7099 = vpack.c.bf16 %v7079, %v7078
      %v7100 = vpack.c.bf16 %v7081, %v7080
      %v7101 = vpack.c.bf16 %v7083, %v7082
      %v7102 = vpack.c.bf16 %v7085, %v7084
      %v7103 = vpack.c.bf16 %v7087, %v7086
      %v7120 = vunpack.c.l.b16 %v7088
      %v7121 = vunpack.c.h.b16 %v7088
      %v7122 = vunpack.c.l.b16 %v7089
      %v7123 = vunpack.c.h.b16 %v7089
      %v7124 = vunpack.c.l.b16 %v7090
      %v7125 = vunpack.c.h.b16 %v7090
      %v7126 = vunpack.c.l.b16 %v7091
      %v7127 = vunpack.c.h.b16 %v7091
      %v7128 = vunpack.c.l.b16 %v7092
      %v7129 = vunpack.c.h.b16 %v7092
      %v7130 = vunpack.c.l.b16 %v7093
      %v7131 = vunpack.c.h.b16 %v7093
      %v7132 = vunpack.c.l.b16 %v7094
      %v7133 = vunpack.c.h.b16 %v7094
      %v7134 = vunpack.c.l.b16 %v7095
      %v7135 = vunpack.c.h.b16 %v7095
      %v7136 = vunpack.c.l.b16 %v7096
      %v7137 = vunpack.c.h.b16 %v7096
      %v7138 = vunpack.c.l.b16 %v7097
      %v7139 = vunpack.c.h.b16 %v7097
      %v7140 = vunpack.c.l.b16 %v7098
      %v7141 = vunpack.c.h.b16 %v7098
      %v7142 = vunpack.c.l.b16 %v7099
      %v7143 = vunpack.c.h.b16 %v7099
      %v7144 = vunpack.c.l.b16 %v7100
      %v7145 = vunpack.c.h.b16 %v7100
      %v7146 = vunpack.c.l.b16 %v7101
      %v7147 = vunpack.c.h.b16 %v7101
      %v7148 = vunpack.c.l.b16 %v7102
      %v7149 = vunpack.c.h.b16 %v7102
      %v7150 = vunpack.c.l.b16 %v7103
      %v7151 = vunpack.c.h.b16 %v7103
      %v7152 = vpack.c.b16 %v7120, %v7120
      %v7153 = vpack.c.b16 %v7121, %v7121
      %v7154 = vpack.c.b16 %v7122, %v7122
      %v7155 = vpack.c.b16 %v7123, %v7123
      %v7156 = vpack.c.b16 %v7124, %v7124
      %v7157 = vpack.c.b16 %v7125, %v7125
      %v7158 = vpack.c.b16 %v7126, %v7126
      %v7159 = vpack.c.b16 %v7127, %v7127
      %v7160 = vpack.c.b16 %v7128, %v7128
      %v7161 = vpack.c.b16 %v7129, %v7129
      %v7162 = vpack.c.b16 %v7130, %v7130
      %v7163 = vpack.c.b16 %v7131, %v7131
      %v7164 = vpack.c.b16 %v7132, %v7132
      %v7165 = vpack.c.b16 %v7133, %v7133
      %v7166 = vpack.c.b16 %v7134, %v7134
      %v7167 = vpack.c.b16 %v7135, %v7135
      %v7168 = vpack.c.b16 %v7136, %v7136
      %v7169 = vpack.c.b16 %v7137, %v7137
      %v7170 = vpack.c.b16 %v7138, %v7138
      %v7171 = vpack.c.b16 %v7139, %v7139
      %v7172 = vpack.c.b16 %v7140, %v7140
      %v7173 = vpack.c.b16 %v7141, %v7141
      %v7174 = vpack.c.b16 %v7142, %v7142
      %v7175 = vpack.c.b16 %v7143, %v7143
      %v7176 = vpack.c.b16 %v7144, %v7144
      %v7177 = vpack.c.b16 %v7145, %v7145
      %v7178 = vpack.c.b16 %v7146, %v7146
      %v7179 = vpack.c.b16 %v7147, %v7147
      %v7180 = vpack.c.b16 %v7148, %v7148
      %v7181 = vpack.c.b16 %v7149, %v7149
      %v7182 = vpack.c.b16 %v7150, %v7150
      %v7183 = vpack.c.b16 %v7151, %v7151
      %vm7216 = vcmask 27648
      %7217 = vst.msk [vmem:[%s224] sm:$0xf] %vm7216, %v7152
      %7218 = vst.msk [vmem:[%s224 + $0x4] sm:$0xf] %vm7216, %v7153
      %7219 = vst.msk [vmem:[%s224 + $0x8] sm:$0xf] %vm7216, %v7154
      %7220 = vst.msk [vmem:[%s224 + $0xc] sm:$0xf] %vm7216, %v7155
      %7221 = vst.msk [vmem:[%s224 + $0x10] sm:$0xf] %vm7216, %v7156
      %7222 = vst.msk [vmem:[%s224 + $0x14] sm:$0xf] %vm7216, %v7157
      %7223 = vst.msk [vmem:[%s224 + $0x18] sm:$0xf] %vm7216, %v7158
      %7224 = vst.msk [vmem:[%s224 + $0x1c] sm:$0xf] %vm7216, %v7159
      %7225 = vst.msk [vmem:[%s224 + $0x20] sm:$0xf] %vm7216, %v7160
      %7226 = vst.msk [vmem:[%s224 + $0x24] sm:$0xf] %vm7216, %v7161
      %7227 = vst.msk [vmem:[%s224 + $0x28] sm:$0xf] %vm7216, %v7162
      %7228 = vst.msk [vmem:[%s224 + $0x2c] sm:$0xf] %vm7216, %v7163
      %7229 = vst.msk [vmem:[%s224 + $0x30] sm:$0xf] %vm7216, %v7164
      %7230 = vst.msk [vmem:[%s224 + $0x34] sm:$0xf] %vm7216, %v7165
      %7231 = vst.msk [vmem:[%s224 + $0x38] sm:$0xf] %vm7216, %v7166
      %7232 = vst.msk [vmem:[%s224 + $0x3c] sm:$0xf] %vm7216, %v7167
      %7233 = vst.msk [vmem:[%s224 + $0x40] sm:$0xf] %vm7216, %v7168
      %7234 = vst.msk [vmem:[%s224 + $0x44] sm:$0xf] %vm7216, %v7169
      %7235 = vst.msk [vmem:[%s224 + $0x48] sm:$0xf] %vm7216, %v7170
      %7236 = vst.msk [vmem:[%s224 + $0x4c] sm:$0xf] %vm7216, %v7171
      %7237 = vst.msk [vmem:[%s224 + $0x50] sm:$0xf] %vm7216, %v7172
      %7238 = vst.msk [vmem:[%s224 + $0x54] sm:$0xf] %vm7216, %v7173
      %7239 = vst.msk [vmem:[%s224 + $0x58] sm:$0xf] %vm7216, %v7174
      %7240 = vst.msk [vmem:[%s224 + $0x5c] sm:$0xf] %vm7216, %v7175
      %7241 = vst.msk [vmem:[%s224 + $0x60] sm:$0xf] %vm7216, %v7176
      %7242 = vst.msk [vmem:[%s224 + $0x64] sm:$0xf] %vm7216, %v7177
      %7243 = vst.msk [vmem:[%s224 + $0x68] sm:$0xf] %vm7216, %v7178
      %7244 = vst.msk [vmem:[%s224 + $0x6c] sm:$0xf] %vm7216, %v7179
      %7245 = vst.msk [vmem:[%s224 + $0x70] sm:$0xf] %vm7216, %v7180
      %7246 = vst.msk [vmem:[%s224 + $0x74] sm:$0xf] %vm7216, %v7181
      %7247 = vst.msk [vmem:[%s224 + $0x78] sm:$0xf] %vm7216, %v7182
      %7248 = vst.msk [vmem:[%s224 + $0x7c] sm:$0xf] %vm7216, %v7183
      %p7249 = scmp.lt.s32.totalorder %s16, 1
      %s7250 = scalar_select %p7249, %s16, 1
      %s7251 = smul.addr %s7250, 32
      %s7252 = smul.addr %s7251, 4
      %s7253 = scalar_lea.vmem %s5, %s7252
      // Predicated region
      $region41: #{residual_block_forward.1} parent=39 // pred_check
        %p7254 = pneg %p144
      $region42: #{residual_block_forward.1} parent=39 // pred_check_branch
        %7256 = sbr.rel (%p7254) target = $region44
      $region43: #{residual_block_forward.1} parent=39 // pred_region
        _
      $region44: #{residual_block_forward.1} parent=39 // pred_fallthru
        _
    $region40: #{residual_block_forward.1} parent=5 // pred_fallthru
      _
    %p7257 = scmp.le.s32.totalorder 2, %s11
    // Predicated region
    $region45: #{residual_block_forward.1} parent=5 // pred_check
      %p7258 = pneg %p7257
    $region46: #{residual_block_forward.1} parent=5 // pred_check_branch
      %7260 = sbr.rel (%p7258) target = $region48
    $region47: #{residual_block_forward.1} parent=5 // pred_region
      %s7261 = ssub.s32 %s11, 2
      // Predicated region
      $region49: #{residual_block_forward.1} parent=47 // pred_check
        %p7262 = pneg %p150
      $region50: #{residual_block_forward.1} parent=47 // pred_check_branch
        %7264 = sbr.rel (%p7262) target = $region52
      $region51: #{residual_block_forward.1} parent=47 // pred_region
        %p7265 = scmp.lt.s32.totalorder %s17, 1
        %s7266 = scalar_select %p7265, %s17, 1
        %s7267 = smul.addr %s7266, 32
        %s7268 = smul.addr %s7267, 4
        %s7269 = scalar_lea.vmem %s5, %s7268
      $region52: #{residual_block_forward.1} parent=47 // pred_fallthru
        _
    $region48: #{residual_block_forward.1} parent=5 // pred_fallthru
      _
  $region6: #{residual_block_forward.1} parent=0 // loop_footer
    %s15 = sadd.s32 1, %s11
  $region7: #{residual_block_forward.1} parent=0 // loop_footer_branch
    %10 = sbr.rel target = $region3
  $region8: #{residual_block_forward.1} parent=0 // loop_exit
    _

</llo_original>
